<compile_context>
chip_gen: v7x
topology: tpu7x:2x2x1
jax: 0.10.0
libtpu: 0.0.40
codegen_flags: <defaults>
</compile_context>

<pallas_src>
import jax
import jax.numpy as jnp
from jax.experimental import pallas as pl
from jax.experimental.pallas import tpu as pltpu

D = 100     # feature dim fixed by the module (BatchNorm1d(100), W: 100x100x100)
DP = 128    # feature dim zero-padded to a full 128-lane width
RP = 128    # output/relation dim padded to a lane-dense 128-wide accumulator
KT = 25     # TuckER-core slices per grid step (K=100 -> 4 chunks)


def _round_up(x, m):
    return (x + m - 1) // m * m


def _tucker_score_kernel(h_ref, t_ref, sc0_ref, sh0_ref, sc2_ref, sh2_ref,
                         w_ref, rl_ref, out_ref, hb_ref, tb_ref, acc_ref):
    kc = pl.program_id(1)

    # BatchNorm1d (eval mode, running stats folded into scale/shift) applied
    # once per batch tile and cached in VMEM scratch.
    # TODO(synk): train-mode BN (batch statistics) and dropout masks are not
    # modeled; inference semantics (identity dropout, running-stat BN) only.
    @pl.when(kc == 0)
    def _init():
        hb = h_ref[...] * sc0_ref[...] + sh0_ref[...]
        tb = t_ref[...] * sc2_ref[...] + sh2_ref[...]
        hb_ref[...] = hb.astype(hb_ref.dtype)      # bf16 operand for the MXU
        tb_ref[...] = tb                           # keep f32 for the VPU reduce
        acc_ref[...] = jnp.zeros_like(acc_ref)

    hb = hb_ref[...]                               # (Bt, DP) bf16
    tb = tb_ref[...]                               # (Bt, DP) f32
    acc = acc_ref[...]                             # (Bt, RP) f32, lane-dense
    k0 = kc * KT
    for t in range(KT):                            # static unroll over the chunk
        # h^T W[k] on the MXU: bf16 x bf16 inputs, f32 accumulation.
        hw = jnp.dot(hb, w_ref[t], preferred_element_type=jnp.float32)  # (Bt,DP)
        c_t = jnp.sum(hw * tb, axis=-1, keepdims=True)                  # (Bt,1)
        # Fold the relation contraction for core slice k into the 128-wide acc.
        acc = acc + c_t * rl_ref[pl.ds(k0 + t, 1), :]                   # (Bt,RP)
    acc_ref[...] = acc

    @pl.when(kc == pl.num_programs(1) - 1)
    def _finish():
        out_ref[...] = jax.nn.sigmoid(acc).astype(out_ref.dtype)


def tucker_score(h_head, h_tail, rel_emb, W, sc0, sh0, sc2, sh2):
    B, d = h_head.shape
    R = rel_emb.shape[0]
    K = W.shape[0]
    assert d == D and W.shape == (K, D, D) and K % KT == 0

    Bt = min(128, _round_up(B, 8))     # batch tile (multiple of 8 sublanes)
    Bp = _round_up(B, Bt)
    nb = Bp // Bt
    Kc = K // KT

    f32 = jnp.float32
    # Zero-pad batch and feature dims; padded rows/cols contribute exactly 0.
    h_p = jnp.zeros((Bp, DP), f32).at[:B, :D].set(h_head.astype(f32))
    t_p = jnp.zeros((Bp, DP), f32).at[:B, :D].set(h_tail.astype(f32))
    sc0_p = jnp.zeros((1, DP), f32).at[0, :D].set(sc0.astype(f32))
    sh0_p = jnp.zeros((1, DP), f32).at[0, :D].set(sh0.astype(f32))
    sc2_p = jnp.zeros((1, DP), f32).at[0, :D].set(sc2.astype(f32))
    sh2_p = jnp.zeros((1, DP), f32).at[0, :D].set(sh2.astype(f32))
    # bf16, (K, 128, 128) zero-padded core: half the HBM traffic of f32 and
    # fully lane-dense MXU operands.
    w_p = jnp.zeros((K, DP, DP), jnp.bfloat16).at[:, :D, :D].set(
        W.astype(jnp.bfloat16))
    # rel^T padded to 128 output lanes -> lane-dense accumulator and output.
    rl_p = jnp.zeros((K, RP), f32).at[:, :R].set(rel_emb.T.astype(f32))

    grid_spec = pltpu.PrefetchScalarGridSpec(
        num_scalar_prefetch=0,
        grid=(nb, Kc),
        in_specs=[
            pl.BlockSpec((Bt, DP), lambda b, kc: (b, 0)),         # head rows
            pl.BlockSpec((Bt, DP), lambda b, kc: (b, 0)),         # tail rows
            pl.BlockSpec((1, DP), lambda b, kc: (0, 0)),          # bn0 scale
            pl.BlockSpec((1, DP), lambda b, kc: (0, 0)),          # bn0 shift
            pl.BlockSpec((1, DP), lambda b, kc: (0, 0)),          # bn2 scale
            pl.BlockSpec((1, DP), lambda b, kc: (0, 0)),          # bn2 shift
            pl.BlockSpec((KT, DP, DP), lambda b, kc: (kc, 0, 0)),  # W chunk
            pl.BlockSpec((K, RP), lambda b, kc: (0, 0)),          # rel^T resident
        ],
        out_specs=pl.BlockSpec((Bt, RP), lambda b, kc: (b, 0)),
        scratch_shapes=[
            pltpu.VMEM((Bt, DP), jnp.bfloat16),   # BN'd head (MXU operand)
            pltpu.VMEM((Bt, DP), f32),            # BN'd tail
            pltpu.VMEM((Bt, RP), f32),            # lane-dense score accumulator
        ],
    )
    out = pl.pallas_call(
        _tucker_score_kernel,
        out_shape=jax.ShapeDtypeStruct((Bp, RP), f32),
        grid_spec=grid_spec,
        compiler_params=pltpu.CompilerParams(
            dimension_semantics=("parallel", "arbitrary")),  # B tiles parallel,
                                                             # K chunks carry acc
    )(h_p, t_p, sc0_p, sh0_p, sc2_p, sh2_p, w_p, rl_p)
    return out[:B, :R]


def init_params(key, node_num, feat_dim, output_dim):
    def xavier(k, shape, fan_in, fan_out):
        bound = (6.0 / (fan_in + fan_out)) ** 0.5
        return jax.random.uniform(k, shape, jnp.float32, -bound, bound)

    k1, k2, k3 = jax.random.split(key, 3)
    return {
        "h": xavier(k1, (node_num, feat_dim), feat_dim, node_num),
        "relation_embedding": xavier(k2, (output_dim, 100), 100, output_dim),
        "W": xavier(k3, (100, 100, 100), 100 * 100, 100 * 100),
        # BatchNorm1d(100) defaults: gamma=1, beta=0, running_mean=0, running_var=1
        "bn0_gamma": jnp.ones((D,), jnp.float32),
        "bn0_beta": jnp.zeros((D,), jnp.float32),
        "bn0_mean": jnp.zeros((D,), jnp.float32),
        "bn0_var": jnp.ones((D,), jnp.float32),
        "bn2_gamma": jnp.ones((D,), jnp.float32),
        "bn2_beta": jnp.zeros((D,), jnp.float32),
        "bn2_mean": jnp.zeros((D,), jnp.float32),
        "bn2_var": jnp.ones((D,), jnp.float32),
    }


def graph_encoder_score_tucker_forward(params, head, tail):
    eps = 1e-5
    h_head = jnp.take(params["h"], head, axis=0)
    h_tail = jnp.take(params["h"], tail, axis=0)
    sc0 = params["bn0_gamma"] / jnp.sqrt(params["bn0_var"] + eps)
    sh0 = params["bn0_beta"] - params["bn0_mean"] * sc0
    sc2 = params["bn2_gamma"] / jnp.sqrt(params["bn2_var"] + eps)
    sh2 = params["bn2_beta"] - params["bn2_mean"] * sc2
    return tucker_score(h_head, h_tail, params["relation_embedding"],
                        params["W"], sc0, sh0, sc2, sh2)


if __name__ == "__main__":
    key = jax.random.PRNGKey(0)
    node_num, feat_dim, output_dim, batch = 16, D, 8, 4

    kp, kh, kt = jax.random.split(key, 3)
    params = init_params(kp, node_num, feat_dim, output_dim)
    head = jax.random.randint(kh, (batch,), 0, node_num)
    tail = jax.random.randint(kt, (batch,), 0, node_num)

    score = graph_encoder_score_tucker_forward(params, head, tail)
    score = jax.block_until_ready(score)

    # Pure-JAX f32 reference (same inference semantics) for a sanity check.
    eps = 1e-5
    hb = ((params["h"][head] - params["bn0_mean"]) /
          jnp.sqrt(params["bn0_var"] + eps) * params["bn0_gamma"] + params["bn0_beta"])
    tb = ((params["h"][tail] - params["bn2_mean"]) /
          jnp.sqrt(params["bn2_var"] + eps) * params["bn2_gamma"] + params["bn2_beta"])
    Wmat = jnp.einsum("rk,kij->rij", params["relation_embedding"], params["W"])
    ref = jax.nn.sigmoid(jnp.einsum("bi,rij,bj->br", hb, Wmat, tb))

    assert score.shape == (batch, output_dim), score.shape
    # bf16 core + bf16 MXU inputs with f32 accumulation: error ~1e-4 on the
    # sigmoid output, comfortably within this tolerance.
    assert jnp.allclose(score, ref, rtol=2e-3, atol=2e-3), (score, ref)
    print("KERNEL_OK")
</pallas_src>

<mosaic_0001>
module attributes {stable_mosaic.version = 11 : i64} {
  func.func @_tucker_score_kernel(%arg0: i32, %arg1: i32, %arg2: memref<8x128xf32, #tpu.memory_space<vmem>>, %arg3: memref<8x128xf32, #tpu.memory_space<vmem>>, %arg4: memref<1x128xf32, #tpu.memory_space<vmem>>, %arg5: memref<1x128xf32, #tpu.memory_space<vmem>>, %arg6: memref<1x128xf32, #tpu.memory_space<vmem>>, %arg7: memref<1x128xf32, #tpu.memory_space<vmem>>, %arg8: memref<25x128x128xbf16, #tpu.memory_space<vmem>>, %arg9: memref<100x128xf32, #tpu.memory_space<vmem>>, %arg10: memref<8x128xf32, #tpu.memory_space<vmem>>, %arg11: memref<8x128xbf16, #tpu.memory_space<vmem>>, %arg12: memref<8x128xf32, #tpu.memory_space<vmem>>, %arg13: memref<8x128xf32, #tpu.memory_space<vmem>>) attributes {dimension_semantics = [#tpu.dimension_semantics<parallel>, #tpu.dimension_semantics<arbitrary>], iteration_bounds = array<i64: 1, 4>, scalar_prefetch = 0 : i64, scratch_operands = 3 : i64, tpu.core_type = #tpu.core_type<tc>, window_params = [{transform_indices = @transform_0, window_bounds = array<i64: 8, 128>}, {transform_indices = @transform_1, window_bounds = array<i64: 8, 128>}, {pipeline_mode = #tpu.pipeline_mode<synchronous>, transform_indices = @transform_2, window_bounds = array<i64: 1, 128>}, {pipeline_mode = #tpu.pipeline_mode<synchronous>, transform_indices = @transform_3, window_bounds = array<i64: 1, 128>}, {pipeline_mode = #tpu.pipeline_mode<synchronous>, transform_indices = @transform_4, window_bounds = array<i64: 1, 128>}, {pipeline_mode = #tpu.pipeline_mode<synchronous>, transform_indices = @transform_5, window_bounds = array<i64: 1, 128>}, {transform_indices = @transform_6, window_bounds = array<i64: 25, 128, 128>}, {pipeline_mode = #tpu.pipeline_mode<synchronous>, transform_indices = @transform_7, window_bounds = array<i64: 100, 128>}, {transform_indices = @transform_8, window_bounds = array<i64: 8, 128>}]} {
    %c0_i32 = arith.constant 0 : i32
    %0 = arith.cmpi eq, %arg1, %c0_i32 : i32
    %1 = arith.extui %0 : i1 to i32
    %c0_i32_0 = arith.constant 0 : i32
    %2 = arith.cmpi ne, %1, %c0_i32_0 : i32
    scf.if %2 {
      %c0_136 = arith.constant 0 : index
      %c0_137 = arith.constant 0 : index
      %336 = vector.load %arg2[%c0_136, %c0_137] : memref<8x128xf32, #tpu.memory_space<vmem>>, vector<8x128xf32>
      %c0_138 = arith.constant 0 : index
      %c0_139 = arith.constant 0 : index
      %337 = vector.load %arg4[%c0_138, %c0_139] : memref<1x128xf32, #tpu.memory_space<vmem>>, vector<1x128xf32>
      %338 = vector.broadcast %337 : vector<1x128xf32> to vector<8x128xf32>
      %339 = arith.mulf %336, %338 : vector<8x128xf32>
      %c0_140 = arith.constant 0 : index
      %c0_141 = arith.constant 0 : index
      %340 = vector.load %arg5[%c0_140, %c0_141] : memref<1x128xf32, #tpu.memory_space<vmem>>, vector<1x128xf32>
      %341 = vector.broadcast %340 : vector<1x128xf32> to vector<8x128xf32>
      %342 = arith.addf %339, %341 : vector<8x128xf32>
      %c0_142 = arith.constant 0 : index
      %c0_143 = arith.constant 0 : index
      %343 = vector.load %arg3[%c0_142, %c0_143] : memref<8x128xf32, #tpu.memory_space<vmem>>, vector<8x128xf32>
      %c0_144 = arith.constant 0 : index
      %c0_145 = arith.constant 0 : index
      %344 = vector.load %arg6[%c0_144, %c0_145] : memref<1x128xf32, #tpu.memory_space<vmem>>, vector<1x128xf32>
      %345 = vector.broadcast %344 : vector<1x128xf32> to vector<8x128xf32>
      %346 = arith.mulf %343, %345 : vector<8x128xf32>
      %c0_146 = arith.constant 0 : index
      %c0_147 = arith.constant 0 : index
      %347 = vector.load %arg7[%c0_146, %c0_147] : memref<1x128xf32, #tpu.memory_space<vmem>>, vector<1x128xf32>
      %348 = vector.broadcast %347 : vector<1x128xf32> to vector<8x128xf32>
      %349 = arith.addf %346, %348 : vector<8x128xf32>
      %350 = arith.truncf %342 : vector<8x128xf32> to vector<8x128xbf16>
      %c0_148 = arith.constant 0 : index
      %c0_149 = arith.constant 0 : index
      %351 = vector.load %arg11[%c0_148, %c0_149] : memref<8x128xbf16, #tpu.memory_space<vmem>>, vector<8x128xbf16>
      tpu.vector_store %arg11[%c0_148, %c0_149], %350 {strides = array<i32>} : memref<8x128xbf16, #tpu.memory_space<vmem>>, vector<8x128xbf16>,
      %c0_150 = arith.constant 0 : index
      %c0_151 = arith.constant 0 : index
      %352 = vector.load %arg12[%c0_150, %c0_151] : memref<8x128xf32, #tpu.memory_space<vmem>>, vector<8x128xf32>
      tpu.vector_store %arg12[%c0_150, %c0_151], %349 {strides = array<i32>} : memref<8x128xf32, #tpu.memory_space<vmem>>, vector<8x128xf32>,
      %cst_152 = arith.constant 0.000000e+00 : f32
      %353 = vector.broadcast %cst_152 : f32 to vector<8x128xf32>
      %c0_153 = arith.constant 0 : index
      %c0_154 = arith.constant 0 : index
      %354 = vector.load %arg13[%c0_153, %c0_154] : memref<8x128xf32, #tpu.memory_space<vmem>>, vector<8x128xf32>
      tpu.vector_store %arg13[%c0_153, %c0_154], %353 {strides = array<i32>} : memref<8x128xf32, #tpu.memory_space<vmem>>, vector<8x128xf32>,
    } else {
    }
    %c0 = arith.constant 0 : index
    %c0_1 = arith.constant 0 : index
    %3 = vector.load %arg11[%c0, %c0_1] : memref<8x128xbf16, #tpu.memory_space<vmem>>, vector<8x128xbf16>
    %c0_2 = arith.constant 0 : index
    %c0_3 = arith.constant 0 : index
    %4 = vector.load %arg12[%c0_2, %c0_3] : memref<8x128xf32, #tpu.memory_space<vmem>>, vector<8x128xf32>
    %c0_4 = arith.constant 0 : index
    %c0_5 = arith.constant 0 : index
    %5 = vector.load %arg13[%c0_4, %c0_5] : memref<8x128xf32, #tpu.memory_space<vmem>>, vector<8x128xf32>
    %c25_i32 = arith.constant 25 : i32
    %6 = arith.muli %arg1, %c25_i32 : i32
    %c0_6 = arith.constant 0 : index
    %c0_7 = arith.constant 0 : index
    %c0_8 = arith.constant 0 : index
    %7 = vector.load %arg8[%c0_6, %c0_7, %c0_8] : memref<25x128x128xbf16, #tpu.memory_space<vmem>>, vector<1x128x128xbf16>
    %8 = vector.shape_cast %7 : vector<1x128x128xbf16> to vector<128x128xbf16>
    %cst = arith.constant dense<0.000000e+00> : vector<8x128xf32>
    %9 = tpu.matmul %3, %8, %cst {dimension_numbers = #tpu.dot_dimension_numbers<[1], [0], [0], [1], [0, 0, 1, 1], [], []>} : vector<8x128xbf16>, vector<128x128xbf16>, vector<8x128xf32> -> vector<8x128xf32>
    %10 = arith.mulf %9, %4 : vector<8x128xf32>
    %cst_9 = arith.constant dense<0.000000e+00> : vector<8xf32>
    %11 = vector.multi_reduction <add>, %10, %cst_9 [1] : vector<8x128xf32> to vector<8xf32>
    %12 = vector.shape_cast %11 : vector<8xf32> to vector<8x1xf32>
    %c0_i32_10 = arith.constant 0 : i32
    %13 = arith.addi %6, %c0_i32_10 : i32
    %14 = arith.index_cast %13 : i32 to index
    %c0_11 = arith.constant 0 : index
    %15 = vector.load %arg9[%14, %c0_11] : memref<100x128xf32, #tpu.memory_space<vmem>>, vector<1x128xf32>
    %16 = vector.broadcast %12 : vector<8x1xf32> to vector<8x128xf32>
    %17 = vector.broadcast %15 : vector<1x128xf32> to vector<8x128xf32>
    %18 = arith.mulf %16, %17 : vector<8x128xf32>
    %19 = arith.addf %5, %18 : vector<8x128xf32>
    %c1 = arith.constant 1 : index
    %c0_12 = arith.constant 0 : index
    %c0_13 = arith.constant 0 : index
    %20 = vector.load %arg8[%c1, %c0_12, %c0_13] : memref<25x128x128xbf16, #tpu.memory_space<vmem>>, vector<1x128x128xbf16>
    %21 = vector.shape_cast %20 : vector<1x128x128xbf16> to vector<128x128xbf16>
    %cst_14 = arith.constant dense<0.000000e+00> : vector<8x128xf32>
    %22 = tpu.matmul %3, %21, %cst_14 {dimension_numbers = #tpu.dot_dimension_numbers<[1], [0], [0], [1], [0, 0, 1, 1], [], []>} : vector<8x128xbf16>, vector<128x128xbf16>, vector<8x128xf32> -> vector<8x128xf32>
    %23 = arith.mulf %22, %4 : vector<8x128xf32>
    %cst_15 = arith.constant dense<0.000000e+00> : vector<8xf32>
    %24 = vector.multi_reduction <add>, %23, %cst_15 [1] : vector<8x128xf32> to vector<8xf32>
    %25 = vector.shape_cast %24 : vector<8xf32> to vector<8x1xf32>
    %c1_i32 = arith.constant 1 : i32
    %26 = arith.addi %6, %c1_i32 : i32
    %27 = arith.index_cast %26 : i32 to index
    %c0_16 = arith.constant 0 : index
    %28 = vector.load %arg9[%27, %c0_16] : memref<100x128xf32, #tpu.memory_space<vmem>>, vector<1x128xf32>
    %29 = vector.broadcast %25 : vector<8x1xf32> to vector<8x128xf32>
    %30 = vector.broadcast %28 : vector<1x128xf32> to vector<8x128xf32>
    %31 = arith.mulf %29, %30 : vector<8x128xf32>
    %32 = arith.addf %19, %31 : vector<8x128xf32>
    %c2 = arith.constant 2 : index
    %c0_17 = arith.constant 0 : index
    %c0_18 = arith.constant 0 : index
    %33 = vector.load %arg8[%c2, %c0_17, %c0_18] : memref<25x128x128xbf16, #tpu.memory_space<vmem>>, vector<1x128x128xbf16>
    %34 = vector.shape_cast %33 : vector<1x128x128xbf16> to vector<128x128xbf16>
    %cst_19 = arith.constant dense<0.000000e+00> : vector<8x128xf32>
    %35 = tpu.matmul %3, %34, %cst_19 {dimension_numbers = #tpu.dot_dimension_numbers<[1], [0], [0], [1], [0, 0, 1, 1], [], []>} : vector<8x128xbf16>, vector<128x128xbf16>, vector<8x128xf32> -> vector<8x128xf32>
    %36 = arith.mulf %35, %4 : vector<8x128xf32>
    %cst_20 = arith.constant dense<0.000000e+00> : vector<8xf32>
    %37 = vector.multi_reduction <add>, %36, %cst_20 [1] : vector<8x128xf32> to vector<8xf32>
    %38 = vector.shape_cast %37 : vector<8xf32> to vector<8x1xf32>
    %c2_i32 = arith.constant 2 : i32
    %39 = arith.addi %6, %c2_i32 : i32
    %40 = arith.index_cast %39 : i32 to index
    %c0_21 = arith.constant 0 : index
    %41 = vector.load %arg9[%40, %c0_21] : memref<100x128xf32, #tpu.memory_space<vmem>>, vector<1x128xf32>
    %42 = vector.broadcast %38 : vector<8x1xf32> to vector<8x128xf32>
    %43 = vector.broadcast %41 : vector<1x128xf32> to vector<8x128xf32>
    %44 = arith.mulf %42, %43 : vector<8x128xf32>
    %45 = arith.addf %32, %44 : vector<8x128xf32>
    %c3 = arith.constant 3 : index
    %c0_22 = arith.constant 0 : index
    %c0_23 = arith.constant 0 : index
    %46 = vector.load %arg8[%c3, %c0_22, %c0_23] : memref<25x128x128xbf16, #tpu.memory_space<vmem>>, vector<1x128x128xbf16>
    %47 = vector.shape_cast %46 : vector<1x128x128xbf16> to vector<128x128xbf16>
    %cst_24 = arith.constant dense<0.000000e+00> : vector<8x128xf32>
    %48 = tpu.matmul %3, %47, %cst_24 {dimension_numbers = #tpu.dot_dimension_numbers<[1], [0], [0], [1], [0, 0, 1, 1], [], []>} : vector<8x128xbf16>, vector<128x128xbf16>, vector<8x128xf32> -> vector<8x128xf32>
    %49 = arith.mulf %48, %4 : vector<8x128xf32>
    %cst_25 = arith.constant dense<0.000000e+00> : vector<8xf32>
    %50 = vector.multi_reduction <add>, %49, %cst_25 [1] : vector<8x128xf32> to vector<8xf32>
    %51 = vector.shape_cast %50 : vector<8xf32> to vector<8x1xf32>
    %c3_i32 = arith.constant 3 : i32
    %52 = arith.addi %6, %c3_i32 : i32
    %53 = arith.index_cast %52 : i32 to index
    %c0_26 = arith.constant 0 : index
    %54 = vector.load %arg9[%53, %c0_26] : memref<100x128xf32, #tpu.memory_space<vmem>>, vector<1x128xf32>
    %55 = vector.broadcast %51 : vector<8x1xf32> to vector<8x128xf32>
    %56 = vector.broadcast %54 : vector<1x128xf32> to vector<8x128xf32>
    %57 = arith.mulf %55, %56 : vector<8x128xf32>
    %58 = arith.addf %45, %57 : vector<8x128xf32>
    %c4 = arith.constant 4 : index
    %c0_27 = arith.constant 0 : index
    %c0_28 = arith.constant 0 : index
    %59 = vector.load %arg8[%c4, %c0_27, %c0_28] : memref<25x128x128xbf16, #tpu.memory_space<vmem>>, vector<1x128x128xbf16>
    %60 = vector.shape_cast %59 : vector<1x128x128xbf16> to vector<128x128xbf16>
    %cst_29 = arith.constant dense<0.000000e+00> : vector<8x128xf32>
    %61 = tpu.matmul %3, %60, %cst_29 {dimension_numbers = #tpu.dot_dimension_numbers<[1], [0], [0], [1], [0, 0, 1, 1], [], []>} : vector<8x128xbf16>, vector<128x128xbf16>, vector<8x128xf32> -> vector<8x128xf32>
    %62 = arith.mulf %61, %4 : vector<8x128xf32>
    %cst_30 = arith.constant dense<0.000000e+00> : vector<8xf32>
    %63 = vector.multi_reduction <add>, %62, %cst_30 [1] : vector<8x128xf32> to vector<8xf32>
    %64 = vector.shape_cast %63 : vector<8xf32> to vector<8x1xf32>
    %c4_i32 = arith.constant 4 : i32
    %65 = arith.addi %6, %c4_i32 : i32
    %66 = arith.index_cast %65 : i32 to index
    %c0_31 = arith.constant 0 : index
    %67 = vector.load %arg9[%66, %c0_31] : memref<100x128xf32, #tpu.memory_space<vmem>>, vector<1x128xf32>
    %68 = vector.broadcast %64 : vector<8x1xf32> to vector<8x128xf32>
    %69 = vector.broadcast %67 : vector<1x128xf32> to vector<8x128xf32>
    %70 = arith.mulf %68, %69 : vector<8x128xf32>
    %71 = arith.addf %58, %70 : vector<8x128xf32>
    %c5 = arith.constant 5 : index
    %c0_32 = arith.constant 0 : index
    %c0_33 = arith.constant 0 : index
    %72 = vector.load %arg8[%c5, %c0_32, %c0_33] : memref<25x128x128xbf16, #tpu.memory_space<vmem>>, vector<1x128x128xbf16>
    %73 = vector.shape_cast %72 : vector<1x128x128xbf16> to vector<128x128xbf16>
    %cst_34 = arith.constant dense<0.000000e+00> : vector<8x128xf32>
    %74 = tpu.matmul %3, %73, %cst_34 {dimension_numbers = #tpu.dot_dimension_numbers<[1], [0], [0], [1], [0, 0, 1, 1], [], []>} : vector<8x128xbf16>, vector<128x128xbf16>, vector<8x128xf32> -> vector<8x128xf32>
    %75 = arith.mulf %74, %4 : vector<8x128xf32>
    %cst_35 = arith.constant dense<0.000000e+00> : vector<8xf32>
    %76 = vector.multi_reduction <add>, %75, %cst_35 [1] : vector<8x128xf32> to vector<8xf32>
    %77 = vector.shape_cast %76 : vector<8xf32> to vector<8x1xf32>
    %c5_i32 = arith.constant 5 : i32
    %78 = arith.addi %6, %c5_i32 : i32
    %79 = arith.index_cast %78 : i32 to index
    %c0_36 = arith.constant 0 : index
    %80 = vector.load %arg9[%79, %c0_36] : memref<100x128xf32, #tpu.memory_space<vmem>>, vector<1x128xf32>
    %81 = vector.broadcast %77 : vector<8x1xf32> to vector<8x128xf32>
    %82 = vector.broadcast %80 : vector<1x128xf32> to vector<8x128xf32>
    %83 = arith.mulf %81, %82 : vector<8x128xf32>
    %84 = arith.addf %71, %83 : vector<8x128xf32>
    %c6 = arith.constant 6 : index
    %c0_37 = arith.constant 0 : index
    %c0_38 = arith.constant 0 : index
    %85 = vector.load %arg8[%c6, %c0_37, %c0_38] : memref<25x128x128xbf16, #tpu.memory_space<vmem>>, vector<1x128x128xbf16>
    %86 = vector.shape_cast %85 : vector<1x128x128xbf16> to vector<128x128xbf16>
    %cst_39 = arith.constant dense<0.000000e+00> : vector<8x128xf32>
    %87 = tpu.matmul %3, %86, %cst_39 {dimension_numbers = #tpu.dot_dimension_numbers<[1], [0], [0], [1], [0, 0, 1, 1], [], []>} : vector<8x128xbf16>, vector<128x128xbf16>, vector<8x128xf32> -> vector<8x128xf32>
    %88 = arith.mulf %87, %4 : vector<8x128xf32>
    %cst_40 = arith.constant dense<0.000000e+00> : vector<8xf32>
    %89 = vector.multi_reduction <add>, %88, %cst_40 [1] : vector<8x128xf32> to vector<8xf32>
    %90 = vector.shape_cast %89 : vector<8xf32> to vector<8x1xf32>
    %c6_i32 = arith.constant 6 : i32
    %91 = arith.addi %6, %c6_i32 : i32
    %92 = arith.index_cast %91 : i32 to index
    %c0_41 = arith.constant 0 : index
    %93 = vector.load %arg9[%92, %c0_41] : memref<100x128xf32, #tpu.memory_space<vmem>>, vector<1x128xf32>
    %94 = vector.broadcast %90 : vector<8x1xf32> to vector<8x128xf32>
    %95 = vector.broadcast %93 : vector<1x128xf32> to vector<8x128xf32>
    %96 = arith.mulf %94, %95 : vector<8x128xf32>
    %97 = arith.addf %84, %96 : vector<8x128xf32>
    %c7 = arith.constant 7 : index
    %c0_42 = arith.constant 0 : index
    %c0_43 = arith.constant 0 : index
    %98 = vector.load %arg8[%c7, %c0_42, %c0_43] : memref<25x128x128xbf16, #tpu.memory_space<vmem>>, vector<1x128x128xbf16>
    %99 = vector.shape_cast %98 : vector<1x128x128xbf16> to vector<128x128xbf16>
    %cst_44 = arith.constant dense<0.000000e+00> : vector<8x128xf32>
    %100 = tpu.matmul %3, %99, %cst_44 {dimension_numbers = #tpu.dot_dimension_numbers<[1], [0], [0], [1], [0, 0, 1, 1], [], []>} : vector<8x128xbf16>, vector<128x128xbf16>, vector<8x128xf32> -> vector<8x128xf32>
    %101 = arith.mulf %100, %4 : vector<8x128xf32>
    %cst_45 = arith.constant dense<0.000000e+00> : vector<8xf32>
    %102 = vector.multi_reduction <add>, %101, %cst_45 [1] : vector<8x128xf32> to vector<8xf32>
    %103 = vector.shape_cast %102 : vector<8xf32> to vector<8x1xf32>
    %c7_i32 = arith.constant 7 : i32
    %104 = arith.addi %6, %c7_i32 : i32
    %105 = arith.index_cast %104 : i32 to index
    %c0_46 = arith.constant 0 : index
    %106 = vector.load %arg9[%105, %c0_46] : memref<100x128xf32, #tpu.memory_space<vmem>>, vector<1x128xf32>
    %107 = vector.broadcast %103 : vector<8x1xf32> to vector<8x128xf32>
    %108 = vector.broadcast %106 : vector<1x128xf32> to vector<8x128xf32>
    %109 = arith.mulf %107, %108 : vector<8x128xf32>
    %110 = arith.addf %97, %109 : vector<8x128xf32>
    %c8 = arith.constant 8 : index
    %c0_47 = arith.constant 0 : index
    %c0_48 = arith.constant 0 : index
    %111 = vector.load %arg8[%c8, %c0_47, %c0_48] : memref<25x128x128xbf16, #tpu.memory_space<vmem>>, vector<1x128x128xbf16>
    %112 = vector.shape_cast %111 : vector<1x128x128xbf16> to vector<128x128xbf16>
    %cst_49 = arith.constant dense<0.000000e+00> : vector<8x128xf32>
    %113 = tpu.matmul %3, %112, %cst_49 {dimension_numbers = #tpu.dot_dimension_numbers<[1], [0], [0], [1], [0, 0, 1, 1], [], []>} : vector<8x128xbf16>, vector<128x128xbf16>, vector<8x128xf32> -> vector<8x128xf32>
    %114 = arith.mulf %113, %4 : vector<8x128xf32>
    %cst_50 = arith.constant dense<0.000000e+00> : vector<8xf32>
    %115 = vector.multi_reduction <add>, %114, %cst_50 [1] : vector<8x128xf32> to vector<8xf32>
    %116 = vector.shape_cast %115 : vector<8xf32> to vector<8x1xf32>
    %c8_i32 = arith.constant 8 : i32
    %117 = arith.addi %6, %c8_i32 : i32
    %118 = arith.index_cast %117 : i32 to index
    %c0_51 = arith.constant 0 : index
    %119 = vector.load %arg9[%118, %c0_51] : memref<100x128xf32, #tpu.memory_space<vmem>>, vector<1x128xf32>
    %120 = vector.broadcast %116 : vector<8x1xf32> to vector<8x128xf32>
    %121 = vector.broadcast %119 : vector<1x128xf32> to vector<8x128xf32>
    %122 = arith.mulf %120, %121 : vector<8x128xf32>
    %123 = arith.addf %110, %122 : vector<8x128xf32>
    %c9 = arith.constant 9 : index
    %c0_52 = arith.constant 0 : index
    %c0_53 = arith.constant 0 : index
    %124 = vector.load %arg8[%c9, %c0_52, %c0_53] : memref<25x128x128xbf16, #tpu.memory_space<vmem>>, vector<1x128x128xbf16>
    %125 = vector.shape_cast %124 : vector<1x128x128xbf16> to vector<128x128xbf16>
    %cst_54 = arith.constant dense<0.000000e+00> : vector<8x128xf32>
    %126 = tpu.matmul %3, %125, %cst_54 {dimension_numbers = #tpu.dot_dimension_numbers<[1], [0], [0], [1], [0, 0, 1, 1], [], []>} : vector<8x128xbf16>, vector<128x128xbf16>, vector<8x128xf32> -> vector<8x128xf32>
    %127 = arith.mulf %126, %4 : vector<8x128xf32>
    %cst_55 = arith.constant dense<0.000000e+00> : vector<8xf32>
    %128 = vector.multi_reduction <add>, %127, %cst_55 [1] : vector<8x128xf32> to vector<8xf32>
    %129 = vector.shape_cast %128 : vector<8xf32> to vector<8x1xf32>
    %c9_i32 = arith.constant 9 : i32
    %130 = arith.addi %6, %c9_i32 : i32
    %131 = arith.index_cast %130 : i32 to index
    %c0_56 = arith.constant 0 : index
    %132 = vector.load %arg9[%131, %c0_56] : memref<100x128xf32, #tpu.memory_space<vmem>>, vector<1x128xf32>
    %133 = vector.broadcast %129 : vector<8x1xf32> to vector<8x128xf32>
    %134 = vector.broadcast %132 : vector<1x128xf32> to vector<8x128xf32>
    %135 = arith.mulf %133, %134 : vector<8x128xf32>
    %136 = arith.addf %123, %135 : vector<8x128xf32>
    %c10 = arith.constant 10 : index
    %c0_57 = arith.constant 0 : index
    %c0_58 = arith.constant 0 : index
    %137 = vector.load %arg8[%c10, %c0_57, %c0_58] : memref<25x128x128xbf16, #tpu.memory_space<vmem>>, vector<1x128x128xbf16>
    %138 = vector.shape_cast %137 : vector<1x128x128xbf16> to vector<128x128xbf16>
    %cst_59 = arith.constant dense<0.000000e+00> : vector<8x128xf32>
    %139 = tpu.matmul %3, %138, %cst_59 {dimension_numbers = #tpu.dot_dimension_numbers<[1], [0], [0], [1], [0, 0, 1, 1], [], []>} : vector<8x128xbf16>, vector<128x128xbf16>, vector<8x128xf32> -> vector<8x128xf32>
    %140 = arith.mulf %139, %4 : vector<8x128xf32>
    %cst_60 = arith.constant dense<0.000000e+00> : vector<8xf32>
    %141 = vector.multi_reduction <add>, %140, %cst_60 [1] : vector<8x128xf32> to vector<8xf32>
    %142 = vector.shape_cast %141 : vector<8xf32> to vector<8x1xf32>
    %c10_i32 = arith.constant 10 : i32
    %143 = arith.addi %6, %c10_i32 : i32
    %144 = arith.index_cast %143 : i32 to index
    %c0_61 = arith.constant 0 : index
    %145 = vector.load %arg9[%144, %c0_61] : memref<100x128xf32, #tpu.memory_space<vmem>>, vector<1x128xf32>
    %146 = vector.broadcast %142 : vector<8x1xf32> to vector<8x128xf32>
    %147 = vector.broadcast %145 : vector<1x128xf32> to vector<8x128xf32>
    %148 = arith.mulf %146, %147 : vector<8x128xf32>
    %149 = arith.addf %136, %148 : vector<8x128xf32>
    %c11 = arith.constant 11 : index
    %c0_62 = arith.constant 0 : index
    %c0_63 = arith.constant 0 : index
    %150 = vector.load %arg8[%c11, %c0_62, %c0_63] : memref<25x128x128xbf16, #tpu.memory_space<vmem>>, vector<1x128x128xbf16>
    %151 = vector.shape_cast %150 : vector<1x128x128xbf16> to vector<128x128xbf16>
    %cst_64 = arith.constant dense<0.000000e+00> : vector<8x128xf32>
    %152 = tpu.matmul %3, %151, %cst_64 {dimension_numbers = #tpu.dot_dimension_numbers<[1], [0], [0], [1], [0, 0, 1, 1], [], []>} : vector<8x128xbf16>, vector<128x128xbf16>, vector<8x128xf32> -> vector<8x128xf32>
    %153 = arith.mulf %152, %4 : vector<8x128xf32>
    %cst_65 = arith.constant dense<0.000000e+00> : vector<8xf32>
    %154 = vector.multi_reduction <add>, %153, %cst_65 [1] : vector<8x128xf32> to vector<8xf32>
    %155 = vector.shape_cast %154 : vector<8xf32> to vector<8x1xf32>
    %c11_i32 = arith.constant 11 : i32
    %156 = arith.addi %6, %c11_i32 : i32
    %157 = arith.index_cast %156 : i32 to index
    %c0_66 = arith.constant 0 : index
    %158 = vector.load %arg9[%157, %c0_66] : memref<100x128xf32, #tpu.memory_space<vmem>>, vector<1x128xf32>
    %159 = vector.broadcast %155 : vector<8x1xf32> to vector<8x128xf32>
    %160 = vector.broadcast %158 : vector<1x128xf32> to vector<8x128xf32>
    %161 = arith.mulf %159, %160 : vector<8x128xf32>
    %162 = arith.addf %149, %161 : vector<8x128xf32>
    %c12 = arith.constant 12 : index
    %c0_67 = arith.constant 0 : index
    %c0_68 = arith.constant 0 : index
    %163 = vector.load %arg8[%c12, %c0_67, %c0_68] : memref<25x128x128xbf16, #tpu.memory_space<vmem>>, vector<1x128x128xbf16>
    %164 = vector.shape_cast %163 : vector<1x128x128xbf16> to vector<128x128xbf16>
    %cst_69 = arith.constant dense<0.000000e+00> : vector<8x128xf32>
    %165 = tpu.matmul %3, %164, %cst_69 {dimension_numbers = #tpu.dot_dimension_numbers<[1], [0], [0], [1], [0, 0, 1, 1], [], []>} : vector<8x128xbf16>, vector<128x128xbf16>, vector<8x128xf32> -> vector<8x128xf32>
    %166 = arith.mulf %165, %4 : vector<8x128xf32>
    %cst_70 = arith.constant dense<0.000000e+00> : vector<8xf32>
    %167 = vector.multi_reduction <add>, %166, %cst_70 [1] : vector<8x128xf32> to vector<8xf32>
    %168 = vector.shape_cast %167 : vector<8xf32> to vector<8x1xf32>
    %c12_i32 = arith.constant 12 : i32
    %169 = arith.addi %6, %c12_i32 : i32
    %170 = arith.index_cast %169 : i32 to index
    %c0_71 = arith.constant 0 : index
    %171 = vector.load %arg9[%170, %c0_71] : memref<100x128xf32, #tpu.memory_space<vmem>>, vector<1x128xf32>
    %172 = vector.broadcast %168 : vector<8x1xf32> to vector<8x128xf32>
    %173 = vector.broadcast %171 : vector<1x128xf32> to vector<8x128xf32>
    %174 = arith.mulf %172, %173 : vector<8x128xf32>
    %175 = arith.addf %162, %174 : vector<8x128xf32>
    %c13 = arith.constant 13 : index
    %c0_72 = arith.constant 0 : index
    %c0_73 = arith.constant 0 : index
    %176 = vector.load %arg8[%c13, %c0_72, %c0_73] : memref<25x128x128xbf16, #tpu.memory_space<vmem>>, vector<1x128x128xbf16>
    %177 = vector.shape_cast %176 : vector<1x128x128xbf16> to vector<128x128xbf16>
    %cst_74 = arith.constant dense<0.000000e+00> : vector<8x128xf32>
    %178 = tpu.matmul %3, %177, %cst_74 {dimension_numbers = #tpu.dot_dimension_numbers<[1], [0], [0], [1], [0, 0, 1, 1], [], []>} : vector<8x128xbf16>, vector<128x128xbf16>, vector<8x128xf32> -> vector<8x128xf32>
    %179 = arith.mulf %178, %4 : vector<8x128xf32>
    %cst_75 = arith.constant dense<0.000000e+00> : vector<8xf32>
    %180 = vector.multi_reduction <add>, %179, %cst_75 [1] : vector<8x128xf32> to vector<8xf32>
    %181 = vector.shape_cast %180 : vector<8xf32> to vector<8x1xf32>
    %c13_i32 = arith.constant 13 : i32
    %182 = arith.addi %6, %c13_i32 : i32
    %183 = arith.index_cast %182 : i32 to index
    %c0_76 = arith.constant 0 : index
    %184 = vector.load %arg9[%183, %c0_76] : memref<100x128xf32, #tpu.memory_space<vmem>>, vector<1x128xf32>
    %185 = vector.broadcast %181 : vector<8x1xf32> to vector<8x128xf32>
    %186 = vector.broadcast %184 : vector<1x128xf32> to vector<8x128xf32>
    %187 = arith.mulf %185, %186 : vector<8x128xf32>
    %188 = arith.addf %175, %187 : vector<8x128xf32>
    %c14 = arith.constant 14 : index
    %c0_77 = arith.constant 0 : index
    %c0_78 = arith.constant 0 : index
    %189 = vector.load %arg8[%c14, %c0_77, %c0_78] : memref<25x128x128xbf16, #tpu.memory_space<vmem>>, vector<1x128x128xbf16>
    %190 = vector.shape_cast %189 : vector<1x128x128xbf16> to vector<128x128xbf16>
    %cst_79 = arith.constant dense<0.000000e+00> : vector<8x128xf32>
    %191 = tpu.matmul %3, %190, %cst_79 {dimension_numbers = #tpu.dot_dimension_numbers<[1], [0], [0], [1], [0, 0, 1, 1], [], []>} : vector<8x128xbf16>, vector<128x128xbf16>, vector<8x128xf32> -> vector<8x128xf32>
    %192 = arith.mulf %191, %4 : vector<8x128xf32>
    %cst_80 = arith.constant dense<0.000000e+00> : vector<8xf32>
    %193 = vector.multi_reduction <add>, %192, %cst_80 [1] : vector<8x128xf32> to vector<8xf32>
    %194 = vector.shape_cast %193 : vector<8xf32> to vector<8x1xf32>
    %c14_i32 = arith.constant 14 : i32
    %195 = arith.addi %6, %c14_i32 : i32
    %196 = arith.index_cast %195 : i32 to index
    %c0_81 = arith.constant 0 : index
    %197 = vector.load %arg9[%196, %c0_81] : memref<100x128xf32, #tpu.memory_space<vmem>>, vector<1x128xf32>
    %198 = vector.broadcast %194 : vector<8x1xf32> to vector<8x128xf32>
    %199 = vector.broadcast %197 : vector<1x128xf32> to vector<8x128xf32>
    %200 = arith.mulf %198, %199 : vector<8x128xf32>
    %201 = arith.addf %188, %200 : vector<8x128xf32>
    %c15 = arith.constant 15 : index
    %c0_82 = arith.constant 0 : index
    %c0_83 = arith.constant 0 : index
    %202 = vector.load %arg8[%c15, %c0_82, %c0_83] : memref<25x128x128xbf16, #tpu.memory_space<vmem>>, vector<1x128x128xbf16>
    %203 = vector.shape_cast %202 : vector<1x128x128xbf16> to vector<128x128xbf16>
    %cst_84 = arith.constant dense<0.000000e+00> : vector<8x128xf32>
    %204 = tpu.matmul %3, %203, %cst_84 {dimension_numbers = #tpu.dot_dimension_numbers<[1], [0], [0], [1], [0, 0, 1, 1], [], []>} : vector<8x128xbf16>, vector<128x128xbf16>, vector<8x128xf32> -> vector<8x128xf32>
    %205 = arith.mulf %204, %4 : vector<8x128xf32>
    %cst_85 = arith.constant dense<0.000000e+00> : vector<8xf32>
    %206 = vector.multi_reduction <add>, %205, %cst_85 [1] : vector<8x128xf32> to vector<8xf32>
    %207 = vector.shape_cast %206 : vector<8xf32> to vector<8x1xf32>
    %c15_i32 = arith.constant 15 : i32
    %208 = arith.addi %6, %c15_i32 : i32
    %209 = arith.index_cast %208 : i32 to index
    %c0_86 = arith.constant 0 : index
    %210 = vector.load %arg9[%209, %c0_86] : memref<100x128xf32, #tpu.memory_space<vmem>>, vector<1x128xf32>
    %211 = vector.broadcast %207 : vector<8x1xf32> to vector<8x128xf32>
    %212 = vector.broadcast %210 : vector<1x128xf32> to vector<8x128xf32>
    %213 = arith.mulf %211, %212 : vector<8x128xf32>
    %214 = arith.addf %201, %213 : vector<8x128xf32>
    %c16 = arith.constant 16 : index
    %c0_87 = arith.constant 0 : index
    %c0_88 = arith.constant 0 : index
    %215 = vector.load %arg8[%c16, %c0_87, %c0_88] : memref<25x128x128xbf16, #tpu.memory_space<vmem>>, vector<1x128x128xbf16>
    %216 = vector.shape_cast %215 : vector<1x128x128xbf16> to vector<128x128xbf16>
    %cst_89 = arith.constant dense<0.000000e+00> : vector<8x128xf32>
    %217 = tpu.matmul %3, %216, %cst_89 {dimension_numbers = #tpu.dot_dimension_numbers<[1], [0], [0], [1], [0, 0, 1, 1], [], []>} : vector<8x128xbf16>, vector<128x128xbf16>, vector<8x128xf32> -> vector<8x128xf32>
    %218 = arith.mulf %217, %4 : vector<8x128xf32>
    %cst_90 = arith.constant dense<0.000000e+00> : vector<8xf32>
    %219 = vector.multi_reduction <add>, %218, %cst_90 [1] : vector<8x128xf32> to vector<8xf32>
    %220 = vector.shape_cast %219 : vector<8xf32> to vector<8x1xf32>
    %c16_i32 = arith.constant 16 : i32
    %221 = arith.addi %6, %c16_i32 : i32
    %222 = arith.index_cast %221 : i32 to index
    %c0_91 = arith.constant 0 : index
    %223 = vector.load %arg9[%222, %c0_91] : memref<100x128xf32, #tpu.memory_space<vmem>>, vector<1x128xf32>
    %224 = vector.broadcast %220 : vector<8x1xf32> to vector<8x128xf32>
    %225 = vector.broadcast %223 : vector<1x128xf32> to vector<8x128xf32>
    %226 = arith.mulf %224, %225 : vector<8x128xf32>
    %227 = arith.addf %214, %226 : vector<8x128xf32>
    %c17 = arith.constant 17 : index
    %c0_92 = arith.constant 0 : index
    %c0_93 = arith.constant 0 : index
    %228 = vector.load %arg8[%c17, %c0_92, %c0_93] : memref<25x128x128xbf16, #tpu.memory_space<vmem>>, vector<1x128x128xbf16>
    %229 = vector.shape_cast %228 : vector<1x128x128xbf16> to vector<128x128xbf16>
    %cst_94 = arith.constant dense<0.000000e+00> : vector<8x128xf32>
    %230 = tpu.matmul %3, %229, %cst_94 {dimension_numbers = #tpu.dot_dimension_numbers<[1], [0], [0], [1], [0, 0, 1, 1], [], []>} : vector<8x128xbf16>, vector<128x128xbf16>, vector<8x128xf32> -> vector<8x128xf32>
    %231 = arith.mulf %230, %4 : vector<8x128xf32>
    %cst_95 = arith.constant dense<0.000000e+00> : vector<8xf32>
    %232 = vector.multi_reduction <add>, %231, %cst_95 [1] : vector<8x128xf32> to vector<8xf32>
    %233 = vector.shape_cast %232 : vector<8xf32> to vector<8x1xf32>
    %c17_i32 = arith.constant 17 : i32
    %234 = arith.addi %6, %c17_i32 : i32
    %235 = arith.index_cast %234 : i32 to index
    %c0_96 = arith.constant 0 : index
    %236 = vector.load %arg9[%235, %c0_96] : memref<100x128xf32, #tpu.memory_space<vmem>>, vector<1x128xf32>
    %237 = vector.broadcast %233 : vector<8x1xf32> to vector<8x128xf32>
    %238 = vector.broadcast %236 : vector<1x128xf32> to vector<8x128xf32>
    %239 = arith.mulf %237, %238 : vector<8x128xf32>
    %240 = arith.addf %227, %239 : vector<8x128xf32>
    %c18 = arith.constant 18 : index
    %c0_97 = arith.constant 0 : index
    %c0_98 = arith.constant 0 : index
    %241 = vector.load %arg8[%c18, %c0_97, %c0_98] : memref<25x128x128xbf16, #tpu.memory_space<vmem>>, vector<1x128x128xbf16>
    %242 = vector.shape_cast %241 : vector<1x128x128xbf16> to vector<128x128xbf16>
    %cst_99 = arith.constant dense<0.000000e+00> : vector<8x128xf32>
    %243 = tpu.matmul %3, %242, %cst_99 {dimension_numbers = #tpu.dot_dimension_numbers<[1], [0], [0], [1], [0, 0, 1, 1], [], []>} : vector<8x128xbf16>, vector<128x128xbf16>, vector<8x128xf32> -> vector<8x128xf32>
    %244 = arith.mulf %243, %4 : vector<8x128xf32>
    %cst_100 = arith.constant dense<0.000000e+00> : vector<8xf32>
    %245 = vector.multi_reduction <add>, %244, %cst_100 [1] : vector<8x128xf32> to vector<8xf32>
    %246 = vector.shape_cast %245 : vector<8xf32> to vector<8x1xf32>
    %c18_i32 = arith.constant 18 : i32
    %247 = arith.addi %6, %c18_i32 : i32
    %248 = arith.index_cast %247 : i32 to index
    %c0_101 = arith.constant 0 : index
    %249 = vector.load %arg9[%248, %c0_101] : memref<100x128xf32, #tpu.memory_space<vmem>>, vector<1x128xf32>
    %250 = vector.broadcast %246 : vector<8x1xf32> to vector<8x128xf32>
    %251 = vector.broadcast %249 : vector<1x128xf32> to vector<8x128xf32>
    %252 = arith.mulf %250, %251 : vector<8x128xf32>
    %253 = arith.addf %240, %252 : vector<8x128xf32>
    %c19 = arith.constant 19 : index
    %c0_102 = arith.constant 0 : index
    %c0_103 = arith.constant 0 : index
    %254 = vector.load %arg8[%c19, %c0_102, %c0_103] : memref<25x128x128xbf16, #tpu.memory_space<vmem>>, vector<1x128x128xbf16>
    %255 = vector.shape_cast %254 : vector<1x128x128xbf16> to vector<128x128xbf16>
    %cst_104 = arith.constant dense<0.000000e+00> : vector<8x128xf32>
    %256 = tpu.matmul %3, %255, %cst_104 {dimension_numbers = #tpu.dot_dimension_numbers<[1], [0], [0], [1], [0, 0, 1, 1], [], []>} : vector<8x128xbf16>, vector<128x128xbf16>, vector<8x128xf32> -> vector<8x128xf32>
    %257 = arith.mulf %256, %4 : vector<8x128xf32>
    %cst_105 = arith.constant dense<0.000000e+00> : vector<8xf32>
    %258 = vector.multi_reduction <add>, %257, %cst_105 [1] : vector<8x128xf32> to vector<8xf32>
    %259 = vector.shape_cast %258 : vector<8xf32> to vector<8x1xf32>
    %c19_i32 = arith.constant 19 : i32
    %260 = arith.addi %6, %c19_i32 : i32
    %261 = arith.index_cast %260 : i32 to index
    %c0_106 = arith.constant 0 : index
    %262 = vector.load %arg9[%261, %c0_106] : memref<100x128xf32, #tpu.memory_space<vmem>>, vector<1x128xf32>
    %263 = vector.broadcast %259 : vector<8x1xf32> to vector<8x128xf32>
    %264 = vector.broadcast %262 : vector<1x128xf32> to vector<8x128xf32>
    %265 = arith.mulf %263, %264 : vector<8x128xf32>
    %266 = arith.addf %253, %265 : vector<8x128xf32>
    %c20 = arith.constant 20 : index
    %c0_107 = arith.constant 0 : index
    %c0_108 = arith.constant 0 : index
    %267 = vector.load %arg8[%c20, %c0_107, %c0_108] : memref<25x128x128xbf16, #tpu.memory_space<vmem>>, vector<1x128x128xbf16>
    %268 = vector.shape_cast %267 : vector<1x128x128xbf16> to vector<128x128xbf16>
    %cst_109 = arith.constant dense<0.000000e+00> : vector<8x128xf32>
    %269 = tpu.matmul %3, %268, %cst_109 {dimension_numbers = #tpu.dot_dimension_numbers<[1], [0], [0], [1], [0, 0, 1, 1], [], []>} : vector<8x128xbf16>, vector<128x128xbf16>, vector<8x128xf32> -> vector<8x128xf32>
    %270 = arith.mulf %269, %4 : vector<8x128xf32>
    %cst_110 = arith.constant dense<0.000000e+00> : vector<8xf32>
    %271 = vector.multi_reduction <add>, %270, %cst_110 [1] : vector<8x128xf32> to vector<8xf32>
    %272 = vector.shape_cast %271 : vector<8xf32> to vector<8x1xf32>
    %c20_i32 = arith.constant 20 : i32
    %273 = arith.addi %6, %c20_i32 : i32
    %274 = arith.index_cast %273 : i32 to index
    %c0_111 = arith.constant 0 : index
    %275 = vector.load %arg9[%274, %c0_111] : memref<100x128xf32, #tpu.memory_space<vmem>>, vector<1x128xf32>
    %276 = vector.broadcast %272 : vector<8x1xf32> to vector<8x128xf32>
    %277 = vector.broadcast %275 : vector<1x128xf32> to vector<8x128xf32>
    %278 = arith.mulf %276, %277 : vector<8x128xf32>
    %279 = arith.addf %266, %278 : vector<8x128xf32>
    %c21 = arith.constant 21 : index
    %c0_112 = arith.constant 0 : index
    %c0_113 = arith.constant 0 : index
    %280 = vector.load %arg8[%c21, %c0_112, %c0_113] : memref<25x128x128xbf16, #tpu.memory_space<vmem>>, vector<1x128x128xbf16>
    %281 = vector.shape_cast %280 : vector<1x128x128xbf16> to vector<128x128xbf16>
    %cst_114 = arith.constant dense<0.000000e+00> : vector<8x128xf32>
    %282 = tpu.matmul %3, %281, %cst_114 {dimension_numbers = #tpu.dot_dimension_numbers<[1], [0], [0], [1], [0, 0, 1, 1], [], []>} : vector<8x128xbf16>, vector<128x128xbf16>, vector<8x128xf32> -> vector<8x128xf32>
    %283 = arith.mulf %282, %4 : vector<8x128xf32>
    %cst_115 = arith.constant dense<0.000000e+00> : vector<8xf32>
    %284 = vector.multi_reduction <add>, %283, %cst_115 [1] : vector<8x128xf32> to vector<8xf32>
    %285 = vector.shape_cast %284 : vector<8xf32> to vector<8x1xf32>
    %c21_i32 = arith.constant 21 : i32
    %286 = arith.addi %6, %c21_i32 : i32
    %287 = arith.index_cast %286 : i32 to index
    %c0_116 = arith.constant 0 : index
    %288 = vector.load %arg9[%287, %c0_116] : memref<100x128xf32, #tpu.memory_space<vmem>>, vector<1x128xf32>
    %289 = vector.broadcast %285 : vector<8x1xf32> to vector<8x128xf32>
    %290 = vector.broadcast %288 : vector<1x128xf32> to vector<8x128xf32>
    %291 = arith.mulf %289, %290 : vector<8x128xf32>
    %292 = arith.addf %279, %291 : vector<8x128xf32>
    %c22 = arith.constant 22 : index
    %c0_117 = arith.constant 0 : index
    %c0_118 = arith.constant 0 : index
    %293 = vector.load %arg8[%c22, %c0_117, %c0_118] : memref<25x128x128xbf16, #tpu.memory_space<vmem>>, vector<1x128x128xbf16>
    %294 = vector.shape_cast %293 : vector<1x128x128xbf16> to vector<128x128xbf16>
    %cst_119 = arith.constant dense<0.000000e+00> : vector<8x128xf32>
    %295 = tpu.matmul %3, %294, %cst_119 {dimension_numbers = #tpu.dot_dimension_numbers<[1], [0], [0], [1], [0, 0, 1, 1], [], []>} : vector<8x128xbf16>, vector<128x128xbf16>, vector<8x128xf32> -> vector<8x128xf32>
    %296 = arith.mulf %295, %4 : vector<8x128xf32>
    %cst_120 = arith.constant dense<0.000000e+00> : vector<8xf32>
    %297 = vector.multi_reduction <add>, %296, %cst_120 [1] : vector<8x128xf32> to vector<8xf32>
    %298 = vector.shape_cast %297 : vector<8xf32> to vector<8x1xf32>
    %c22_i32 = arith.constant 22 : i32
    %299 = arith.addi %6, %c22_i32 : i32
    %300 = arith.index_cast %299 : i32 to index
    %c0_121 = arith.constant 0 : index
    %301 = vector.load %arg9[%300, %c0_121] : memref<100x128xf32, #tpu.memory_space<vmem>>, vector<1x128xf32>
    %302 = vector.broadcast %298 : vector<8x1xf32> to vector<8x128xf32>
    %303 = vector.broadcast %301 : vector<1x128xf32> to vector<8x128xf32>
    %304 = arith.mulf %302, %303 : vector<8x128xf32>
    %305 = arith.addf %292, %304 : vector<8x128xf32>
    %c23 = arith.constant 23 : index
    %c0_122 = arith.constant 0 : index
    %c0_123 = arith.constant 0 : index
    %306 = vector.load %arg8[%c23, %c0_122, %c0_123] : memref<25x128x128xbf16, #tpu.memory_space<vmem>>, vector<1x128x128xbf16>
    %307 = vector.shape_cast %306 : vector<1x128x128xbf16> to vector<128x128xbf16>
    %cst_124 = arith.constant dense<0.000000e+00> : vector<8x128xf32>
    %308 = tpu.matmul %3, %307, %cst_124 {dimension_numbers = #tpu.dot_dimension_numbers<[1], [0], [0], [1], [0, 0, 1, 1], [], []>} : vector<8x128xbf16>, vector<128x128xbf16>, vector<8x128xf32> -> vector<8x128xf32>
    %309 = arith.mulf %308, %4 : vector<8x128xf32>
    %cst_125 = arith.constant dense<0.000000e+00> : vector<8xf32>
    %310 = vector.multi_reduction <add>, %309, %cst_125 [1] : vector<8x128xf32> to vector<8xf32>
    %311 = vector.shape_cast %310 : vector<8xf32> to vector<8x1xf32>
    %c23_i32 = arith.constant 23 : i32
    %312 = arith.addi %6, %c23_i32 : i32
    %313 = arith.index_cast %312 : i32 to index
    %c0_126 = arith.constant 0 : index
    %314 = vector.load %arg9[%313, %c0_126] : memref<100x128xf32, #tpu.memory_space<vmem>>, vector<1x128xf32>
    %315 = vector.broadcast %311 : vector<8x1xf32> to vector<8x128xf32>
    %316 = vector.broadcast %314 : vector<1x128xf32> to vector<8x128xf32>
    %317 = arith.mulf %315, %316 : vector<8x128xf32>
    %318 = arith.addf %305, %317 : vector<8x128xf32>
    %c24 = arith.constant 24 : index
    %c0_127 = arith.constant 0 : index
    %c0_128 = arith.constant 0 : index
    %319 = vector.load %arg8[%c24, %c0_127, %c0_128] : memref<25x128x128xbf16, #tpu.memory_space<vmem>>, vector<1x128x128xbf16>
    %320 = vector.shape_cast %319 : vector<1x128x128xbf16> to vector<128x128xbf16>
    %cst_129 = arith.constant dense<0.000000e+00> : vector<8x128xf32>
    %321 = tpu.matmul %3, %320, %cst_129 {dimension_numbers = #tpu.dot_dimension_numbers<[1], [0], [0], [1], [0, 0, 1, 1], [], []>} : vector<8x128xbf16>, vector<128x128xbf16>, vector<8x128xf32> -> vector<8x128xf32>
    %322 = arith.mulf %321, %4 : vector<8x128xf32>
    %cst_130 = arith.constant dense<0.000000e+00> : vector<8xf32>
    %323 = vector.multi_reduction <add>, %322, %cst_130 [1] : vector<8x128xf32> to vector<8xf32>
    %324 = vector.shape_cast %323 : vector<8xf32> to vector<8x1xf32>
    %c24_i32 = arith.constant 24 : i32
    %325 = arith.addi %6, %c24_i32 : i32
    %326 = arith.index_cast %325 : i32 to index
    %c0_131 = arith.constant 0 : index
    %327 = vector.load %arg9[%326, %c0_131] : memref<100x128xf32, #tpu.memory_space<vmem>>, vector<1x128xf32>
    %328 = vector.broadcast %324 : vector<8x1xf32> to vector<8x128xf32>
    %329 = vector.broadcast %327 : vector<1x128xf32> to vector<8x128xf32>
    %330 = arith.mulf %328, %329 : vector<8x128xf32>
    %331 = arith.addf %318, %330 : vector<8x128xf32>
    %c0_132 = arith.constant 0 : index
    %c0_133 = arith.constant 0 : index
    %332 = vector.load %arg13[%c0_132, %c0_133] : memref<8x128xf32, #tpu.memory_space<vmem>>, vector<8x128xf32>
    tpu.vector_store %arg13[%c0_132, %c0_133], %331 {strides = array<i32>} : memref<8x128xf32, #tpu.memory_space<vmem>>, vector<8x128xf32>,
    %c3_i32_134 = arith.constant 3 : i32
    %333 = arith.cmpi eq, %arg1, %c3_i32_134 : i32
    %334 = arith.extui %333 : i1 to i32
    %c0_i32_135 = arith.constant 0 : i32
    %335 = arith.cmpi ne, %334, %c0_i32_135 : i32
    scf.if %335 {
      %336 = arith.negf %331 : vector<8x128xf32>
      %337 = math.exp %336 : vector<8x128xf32>
      %cst_136 = arith.constant 1.000000e+00 : f32
      %338 = vector.broadcast %cst_136 : f32 to vector<8x128xf32>
      %339 = arith.addf %338, %337 : vector<8x128xf32>
      %340 = arith.divf %338, %339 : vector<8x128xf32>
      %c0_137 = arith.constant 0 : index
      %c0_138 = arith.constant 0 : index
      %341 = vector.load %arg10[%c0_137, %c0_138] : memref<8x128xf32, #tpu.memory_space<vmem>>, vector<8x128xf32>
      tpu.vector_store %arg10[%c0_137, %c0_138], %340 {strides = array<i32>} : memref<8x128xf32, #tpu.memory_space<vmem>>, vector<8x128xf32>,
    } else {
    }
    return
  }
  func.func @transform_0(%arg0: i32, %arg1: i32) -> (i32, i32) {
    %c0_i32 = arith.constant 0 : i32
    %c0_i32_0 = arith.constant 0 : i32
    return %arg0, %c0_i32 : i32, i32
  }
  func.func @transform_1(%arg0: i32, %arg1: i32) -> (i32, i32) {
    %c0_i32 = arith.constant 0 : i32
    %c0_i32_0 = arith.constant 0 : i32
    return %arg0, %c0_i32 : i32, i32
  }
  func.func @transform_2(%arg0: i32, %arg1: i32) -> (i32, i32) {
    %c0_i32 = arith.constant 0 : i32
    %c0_i32_0 = arith.constant 0 : i32
    %c0_i32_1 = arith.constant 0 : i32
    return %c0_i32, %c0_i32_0 : i32, i32
  }
  func.func @transform_3(%arg0: i32, %arg1: i32) -> (i32, i32) {
    %c0_i32 = arith.constant 0 : i32
    %c0_i32_0 = arith.constant 0 : i32
    %c0_i32_1 = arith.constant 0 : i32
    return %c0_i32, %c0_i32_0 : i32, i32
  }
  func.func @transform_4(%arg0: i32, %arg1: i32) -> (i32, i32) {
    %c0_i32 = arith.constant 0 : i32
    %c0_i32_0 = arith.constant 0 : i32
    %c0_i32_1 = arith.constant 0 : i32
    return %c0_i32, %c0_i32_0 : i32, i32
  }
  func.func @transform_5(%arg0: i32, %arg1: i32) -> (i32, i32) {
    %c0_i32 = arith.constant 0 : i32
    %c0_i32_0 = arith.constant 0 : i32
    %c0_i32_1 = arith.constant 0 : i32
    return %c0_i32, %c0_i32_0 : i32, i32
  }
  func.func @transform_6(%arg0: i32, %arg1: i32) -> (i32, i32, i32) {
    %c0_i32 = arith.constant 0 : i32
    %c0_i32_0 = arith.constant 0 : i32
    %c0_i32_1 = arith.constant 0 : i32
    return %arg1, %c0_i32, %c0_i32_0 : i32, i32, i32
  }
  func.func @transform_7(%arg0: i32, %arg1: i32) -> (i32, i32) {
    %c0_i32 = arith.constant 0 : i32
    %c0_i32_0 = arith.constant 0 : i32
    %c0_i32_1 = arith.constant 0 : i32
    return %c0_i32, %c0_i32_0 : i32, i32
  }
  func.func @transform_8(%arg0: i32, %arg1: i32) -> (i32, i32) {
    %c0_i32 = arith.constant 0 : i32
    %c0_i32_0 = arith.constant 0 : i32
    return %arg0, %c0_i32 : i32, i32
  }
}

</mosaic_0001>

<llo_original>
// kernel: tpu_custom_call.1
$region0: #{tpu_custom_call.1}
  #allocation0 [shape = 'u32[]', space=smem, size = 0x4, offset = 0x4, fixed_abs, tag = 'smem constant byte address 0x4 - core index']
  #allocation1 [shape = 'u32[144,128]{1,0:T(1,128)}', space=vmem, size = 0x12000, scoped, tag = 'internal scratch']
  #allocation2 [shape = 'bf16[8,128]{1,0:T(8,128)(2,1)}', space=vmem, size = 0x800, scoped, tag = 'scratch operand']
  #allocation3 [shape = 'f32[8,128]{1,0:T(8,128)}', space=vmem, size = 0x1000, scoped, tag = 'scratch operand']
  #allocation4 [shape = 'f32[8,128]{1,0:T(8,128)}', space=vmem, size = 0x1000, scoped, tag = 'scratch operand']
  %s0 = inlined_call_operand.hbm [shape: f32[8,128], index: 0, kind: input, shape index: {}]
  %s1 = inlined_call_operand.hbm [shape: f32[8,128], index: 1, kind: input, shape index: {}]
  %s2 = inlined_call_operand.hbm [shape: f32[1,128], index: 2, kind: input, shape index: {}]
  %s3 = inlined_call_operand.hbm [shape: f32[1,128], index: 3, kind: input, shape index: {}]
  %s4 = inlined_call_operand.hbm [shape: f32[1,128], index: 4, kind: input, shape index: {}]
  %s5 = inlined_call_operand.hbm [shape: f32[1,128], index: 5, kind: input, shape index: {}]
  %s6 = inlined_call_operand.hbm [shape: bf16[100,128,128], index: 6, kind: input, shape index: {}]
  %s7 = inlined_call_operand.hbm [shape: f32[100,128], index: 7, kind: input, shape index: {}]
  %s8 = inlined_call_operand.hbm [shape: f32[8,128], index: 8, kind: output, shape index: {}]
  %s9 = sld [smem:[#allocation0]]
  $region105: #{tpu_custom_call.1} parent=0
    _
  %s11 = ssub.s32 1, %s9
  %s12 = scalar_select 0, %s11, %s9
  $region1: #{tpu_custom_call.1} parent=0
    #allocation5 [shape = 'u8[4096]{0}', space=vmem, size = 0x1000, scoped, tag = 'input window, operand 0, single buffered']
    #allocation6 [shape = 's32[2]{0}', space=sflag, size = 0x8, scoped, tag = 'scoped memory for tpu_custom_call.1']
    #allocation7 [shape = 's32[2]{0}', space=sflag, size = 0x8, scoped, tag = 'scoped memory for tpu_custom_call.1']
    #allocation8 [shape = 'u8[4096]{0}', space=vmem, size = 0x1000, scoped, tag = 'input window, operand 1, single buffered']
    #allocation9 [shape = 's32[1]{0}', space=sflag, size = 0x4, scoped, tag = 'scoped memory for tpu_custom_call.1']
    #allocation10 [shape = 'u8[512]{0}', space=vmem, size = 0x400, scoped, tag = 'input window, operand 2, single buffered']
    #allocation11 [shape = 'u8[512]{0}', space=vmem, size = 0x400, scoped, tag = 'input window, operand 3, single buffered']
    #allocation12 [shape = 's32[1]{0}', space=sflag, size = 0x4, scoped, tag = 'scoped memory for tpu_custom_call.1']
    #allocation13 [shape = 'u8[512]{0}', space=vmem, size = 0x400, scoped, tag = 'input window, operand 4, single buffered']
    #allocation14 [shape = 'u8[512]{0}', space=vmem, size = 0x400, scoped, tag = 'input window, operand 5, single buffered']
    #allocation15 [shape = 's32[1]{0}', space=sflag, size = 0x4, scoped, tag = 'scoped memory for tpu_custom_call.1']
    #allocation16 [shape = 'u8[1638400]{0}', space=vmem, size = 0x190000, scoped, tag = 'input window, operand 6']
    #allocation17 [shape = 'u8[53248]{0}', space=vmem, size = 0xd000, scoped, tag = 'input window, operand 7, single buffered']
    #allocation18 [shape = 'u8[4096]{0}', space=vmem, size = 0x1000, scoped, tag = 'output window, operand 0, single buffered']
    %13 = vsyncpa [#allocation6], 0
    %14 = vsyncpa [#allocation9], 0
    %15 = vsyncpa [#allocation12], 0
    %16 = vsyncpa [#allocation15], 0
    %17 = vsyncpa [#allocation7], 0
    loop: start=0, step=1, limit=6
    $region2: #{tpu_custom_call.1} parent=1 // loop_pre_header
      _
    $region3: #{tpu_custom_call.1} parent=1 // loop_header
      %s19 = sphi 0, %s23
      %p20 = scmp.ge.s32.totalorder %s19, 6
      %s26 = sphi 0, %s38
      %s27 = sphi 0, %s34
      %s28 = sphi 0, %s26
      %s29 = sphi 0, %s27
      %s30 = sphi 0, %s28
      %s31 = sphi 0, %s29
      %s41 = sphi 0, %s43
      %s44 = sphi 0, %s41
      %s45 = sphi 0, %s44
      %s61 = sphi 0, %s45
      %s67 = sphi 0, %s69
      %s70 = sphi 0, %s67
      %s71 = sphi 0, %s70
      %s87 = sphi 0, %s71
      %s91 = sphi 0, %s91
      %s93 = sphi 0, %s91
      %s94 = sphi 0, %s93
      %s108 = sphi 0, %s94
      %s112 = sphi 0, %s112
      %s114 = sphi 0, %s112
      %s115 = sphi 0, %s114
      %s129 = sphi 0, %s115
      %s133 = sphi 0, %s133
      %s135 = sphi 0, %s133
      %s136 = sphi 0, %s135
      %s150 = sphi 0, %s136
      %s154 = sphi 0, %s154
      %s156 = sphi 0, %s154
      %s157 = sphi 0, %s156
      %s171 = sphi 0, %s157
      %s177 = sphi 0, %s179
      %s180 = sphi 0, %s177
      %s181 = sphi 0, %s180
      %s197 = sphi 0, %s181
      %s201 = sphi 0, %s201
      %s203 = sphi 0, %s201
      %s204 = sphi 0, %s203
      %s218 = sphi 0, %s204
      %s224 = sphi 0, %s226
      %s227 = sphi 0, %s224
      %s228 = sphi 0, %s227
      %s244 = sphi 0, %s228
    $region4: #{tpu_custom_call.1} parent=1 // loop_header_branch
      %22 = sbr.rel (%p20) target = $region8
    $region5: #{tpu_custom_call.1} parent=1 // loop_body
      %s24 = ssub.s32 %s19, 1
      %s25 = ssub.s32 %s19, 2
      %s32 = sadd.s32 1, %s27
      %p33 = scmp.ge.s32.totalorder %s32, 4
      %s34 = scalar_select %p33, 0, %s32
      %s35 = sadd.s32 1, %s26
      %s36 = scalar_select %p33, %s35, %s26
      %p37 = scmp.ge.s32.totalorder %s36, 1
      %s38 = scalar_select %p37, 0, %s36
      %s39 = ssub.s32 %s26, %s38
      %p40 = scmp.eq.s32.totalorder %s39, 0
      %s42 = sadd.s32 %s41, 1
      %s43 = scalar_select %p40, %s41, %s42
      %p46 = pneg %p40
      %p47 = scmp.eq.s32.totalorder %s19, 3
      %p48 = por %p46, %p47
      %p49 = scmp.ne.s32.totalorder %s41, %s44
      %p50 = scmp.eq.s32.totalorder %s19, 0
      %p51 = por %p49, %p50
      %p52 = scmp.ne.s32.totalorder %s41, %s44
      %p53 = scmp.eq.s32.totalorder %s24, 3
      %p54 = por %p52, %p53
      %p55 = scmp.ne.s32.totalorder %s44, %s45
      %p56 = scmp.eq.s32.totalorder %s24, 0
      %p57 = por %p55, %p56
      %p58 = scmp.ne.s32.totalorder %s44, %s45
      %p59 = scmp.eq.s32.totalorder %s25, 3
      %p60 = por %p58, %p59
      %p62 = scmp.ne.s32.totalorder %s45, %s61
      %p63 = scmp.eq.s32.totalorder %s25, 0
      %p64 = por %p62, %p63
      %s65 = ssub.s32 %s26, %s38
      %p66 = scmp.eq.s32.totalorder %s65, 0
      %s68 = sadd.s32 %s67, 1
      %s69 = scalar_select %p66, %s67, %s68
      %p72 = pneg %p66
      %p73 = scmp.eq.s32.totalorder %s19, 3
      %p74 = por %p72, %p73
      %p75 = scmp.ne.s32.totalorder %s67, %s70
      %p76 = scmp.eq.s32.totalorder %s19, 0
      %p77 = por %p75, %p76
      %p78 = scmp.ne.s32.totalorder %s67, %s70
      %p79 = scmp.eq.s32.totalorder %s24, 3
      %p80 = por %p78, %p79
      %p81 = scmp.ne.s32.totalorder %s70, %s71
      %p82 = scmp.eq.s32.totalorder %s24, 0
      %p83 = por %p81, %p82
      %p84 = scmp.ne.s32.totalorder %s70, %s71
      %p85 = scmp.eq.s32.totalorder %s25, 3
      %p86 = por %p84, %p85
      %p88 = scmp.ne.s32.totalorder %s71, %s87
      %p89 = scmp.eq.s32.totalorder %s25, 0
      %p90 = por %p88, %p89
      %s92 = sadd.s32 %s91, 1
      %p95 = scmp.eq.s32.totalorder %s19, 3
      %p96 = scmp.ne.s32.totalorder %s91, %s93
      %p97 = scmp.eq.s32.totalorder %s19, 0
      %p98 = por %p96, %p97
      %p99 = scmp.ne.s32.totalorder %s91, %s93
      %p100 = scmp.eq.s32.totalorder %s24, 3
      %p101 = por %p99, %p100
      %p102 = scmp.ne.s32.totalorder %s93, %s94
      %p103 = scmp.eq.s32.totalorder %s24, 0
      %p104 = por %p102, %p103
      %p105 = scmp.ne.s32.totalorder %s93, %s94
      %p106 = scmp.eq.s32.totalorder %s25, 3
      %p107 = por %p105, %p106
      %p109 = scmp.ne.s32.totalorder %s94, %s108
      %p110 = scmp.eq.s32.totalorder %s25, 0
      %p111 = por %p109, %p110
      %s113 = sadd.s32 %s112, 1
      %p116 = scmp.eq.s32.totalorder %s19, 3
      %p117 = scmp.ne.s32.totalorder %s112, %s114
      %p118 = scmp.eq.s32.totalorder %s19, 0
      %p119 = por %p117, %p118
      %p120 = scmp.ne.s32.totalorder %s112, %s114
      %p121 = scmp.eq.s32.totalorder %s24, 3
      %p122 = por %p120, %p121
      %p123 = scmp.ne.s32.totalorder %s114, %s115
      %p124 = scmp.eq.s32.totalorder %s24, 0
      %p125 = por %p123, %p124
      %p126 = scmp.ne.s32.totalorder %s114, %s115
      %p127 = scmp.eq.s32.totalorder %s25, 3
      %p128 = por %p126, %p127
      %p130 = scmp.ne.s32.totalorder %s115, %s129
      %p131 = scmp.eq.s32.totalorder %s25, 0
      %p132 = por %p130, %p131
      %s134 = sadd.s32 %s133, 1
      %p137 = scmp.eq.s32.totalorder %s19, 3
      %p138 = scmp.ne.s32.totalorder %s133, %s135
      %p139 = scmp.eq.s32.totalorder %s19, 0
      %p140 = por %p138, %p139
      %p141 = scmp.ne.s32.totalorder %s133, %s135
      %p142 = scmp.eq.s32.totalorder %s24, 3
      %p143 = por %p141, %p142
      %p144 = scmp.ne.s32.totalorder %s135, %s136
      %p145 = scmp.eq.s32.totalorder %s24, 0
      %p146 = por %p144, %p145
      %p147 = scmp.ne.s32.totalorder %s135, %s136
      %p148 = scmp.eq.s32.totalorder %s25, 3
      %p149 = por %p147, %p148
      %p151 = scmp.ne.s32.totalorder %s136, %s150
      %p152 = scmp.eq.s32.totalorder %s25, 0
      %p153 = por %p151, %p152
      %s155 = sadd.s32 %s154, 1
      %p158 = scmp.eq.s32.totalorder %s19, 3
      %p159 = scmp.ne.s32.totalorder %s154, %s156
      %p160 = scmp.eq.s32.totalorder %s19, 0
      %p161 = por %p159, %p160
      %p162 = scmp.ne.s32.totalorder %s154, %s156
      %p163 = scmp.eq.s32.totalorder %s24, 3
      %p164 = por %p162, %p163
      %p165 = scmp.ne.s32.totalorder %s156, %s157
      %p166 = scmp.eq.s32.totalorder %s24, 0
      %p167 = por %p165, %p166
      %p168 = scmp.ne.s32.totalorder %s156, %s157
      %p169 = scmp.eq.s32.totalorder %s25, 3
      %p170 = por %p168, %p169
      %p172 = scmp.ne.s32.totalorder %s157, %s171
      %p173 = scmp.eq.s32.totalorder %s25, 0
      %p174 = por %p172, %p173
      %s175 = ssub.s32 %s27, %s34
      %p176 = scmp.eq.s32.totalorder %s175, 0
      %s178 = sadd.s32 %s177, 1
      %s179 = scalar_select %p176, %s177, %s178
      %p182 = pneg %p176
      %p183 = scmp.eq.s32.totalorder %s19, 3
      %p184 = por %p182, %p183
      %p185 = scmp.ne.s32.totalorder %s177, %s180
      %p186 = scmp.eq.s32.totalorder %s19, 0
      %p187 = por %p185, %p186
      %p188 = scmp.ne.s32.totalorder %s177, %s180
      %p189 = scmp.eq.s32.totalorder %s24, 3
      %p190 = por %p188, %p189
      %p191 = scmp.ne.s32.totalorder %s180, %s181
      %p192 = scmp.eq.s32.totalorder %s24, 0
      %p193 = por %p191, %p192
      %p194 = scmp.ne.s32.totalorder %s180, %s181
      %p195 = scmp.eq.s32.totalorder %s25, 3
      %p196 = por %p194, %p195
      %p198 = scmp.ne.s32.totalorder %s181, %s197
      %p199 = scmp.eq.s32.totalorder %s25, 0
      %p200 = por %p198, %p199
      %s202 = sadd.s32 %s201, 1
      %p205 = scmp.eq.s32.totalorder %s19, 3
      %p206 = scmp.ne.s32.totalorder %s201, %s203
      %p207 = scmp.eq.s32.totalorder %s19, 0
      %p208 = por %p206, %p207
      %p209 = scmp.ne.s32.totalorder %s201, %s203
      %p210 = scmp.eq.s32.totalorder %s24, 3
      %p211 = por %p209, %p210
      %p212 = scmp.ne.s32.totalorder %s203, %s204
      %p213 = scmp.eq.s32.totalorder %s24, 0
      %p214 = por %p212, %p213
      %p215 = scmp.ne.s32.totalorder %s203, %s204
      %p216 = scmp.eq.s32.totalorder %s25, 3
      %p217 = por %p215, %p216
      %p219 = scmp.ne.s32.totalorder %s204, %s218
      %p220 = scmp.eq.s32.totalorder %s25, 0
      %p221 = por %p219, %p220
      %s222 = ssub.s32 %s26, %s38
      %p223 = scmp.eq.s32.totalorder %s222, 0
      %s225 = sadd.s32 %s224, 1
      %s226 = scalar_select %p223, %s224, %s225
      %p229 = pneg %p223
      %p230 = scmp.eq.s32.totalorder %s19, 3
      %p231 = por %p229, %p230
      %p232 = scmp.ne.s32.totalorder %s224, %s227
      %p233 = scmp.eq.s32.totalorder %s19, 0
      %p234 = por %p232, %p233
      %p235 = scmp.ne.s32.totalorder %s224, %s227
      %p236 = scmp.eq.s32.totalorder %s24, 3
      %p237 = por %p235, %p236
      %p238 = scmp.ne.s32.totalorder %s227, %s228
      %p239 = scmp.eq.s32.totalorder %s24, 0
      %p240 = por %p238, %p239
      %p241 = scmp.ne.s32.totalorder %s227, %s228
      %p242 = scmp.eq.s32.totalorder %s25, 3
      %p243 = por %p241, %p242
      %p245 = scmp.ne.s32.totalorder %s228, %s244
      %p246 = scmp.eq.s32.totalorder %s25, 0
      %p247 = por %p245, %p246
      %p248 = scmp.le.s32.totalorder 1, %s19
      %p249 = scmp.lt.s32.totalorder %s19, 5
      %p250 = pnand %p248, %p249
      %p251 = pneg %p250
      // Predicated region
      $region9: #{tpu_custom_call.1} parent=5 // pred_check
        _
      $region10: #{tpu_custom_call.1} parent=5 // pred_check_branch
        %253 = sbr.rel (%p250) target = $region12
      $region11: #{tpu_custom_call.1} parent=5 // pred_region
        %s254 = ssub.s32 %s19, 1
        // Predicated region
        $region13: #{tpu_custom_call.1} parent=11 // pred_check
          %p255 = pneg %p57
        $region14: #{tpu_custom_call.1} parent=11 // pred_check_branch
          %257 = sbr.rel (%p255) target = $region16
        $region15: #{tpu_custom_call.1} parent=11 // pred_region
          %s259 = ssub.s32 128, 128
          %260 = vsyncadd [#allocation6], %s259
          %s261 = smul.addr %s28, 128
          %s262 = scalar_lea.hbm %s0, %s261
          %s264 = sshll.u32 [#allocation5], 4
          %s265 = int_to_ptr.vmem [resolvable:$true] %s264
          %267 = dma.hbm_to_vmem [thread:$0]  %s262, 128, %s265, [#allocation6]
        $region16: #{tpu_custom_call.1} parent=11 // pred_fallthru
          _
        // Predicated region
        $region17: #{tpu_custom_call.1} parent=11 // pred_check
          %p268 = pneg %p83
        $region18: #{tpu_custom_call.1} parent=11 // pred_check_branch
          %270 = sbr.rel (%p268) target = $region20
        $region19: #{tpu_custom_call.1} parent=11 // pred_region
          %s272 = ssub.s32 128, 128
          %273 = vsyncadd [#allocation9], %s272
          %s274 = smul.addr %s28, 128
          %s275 = scalar_lea.hbm %s1, %s274
          %s277 = sshll.u32 [#allocation8], 4
          %s278 = int_to_ptr.vmem [resolvable:$true] %s277
          %280 = dma.hbm_to_vmem [thread:$0]  %s275, 128, %s278, [#allocation9]
        $region20: #{tpu_custom_call.1} parent=11 // pred_fallthru
          _
        // Predicated region
        $region21: #{tpu_custom_call.1} parent=11 // pred_check
          %p281 = pneg %p104
        $region22: #{tpu_custom_call.1} parent=11 // pred_check_branch
          %283 = sbr.rel (%p281) target = $region24
        $region23: #{tpu_custom_call.1} parent=11 // pred_region
          %s285 = ssub.s32 16, 16
          %286 = vsyncadd [#allocation9], %s285
          %s288 = sshll.u32 [#allocation10], 4
          %s289 = int_to_ptr.vmem [resolvable:$true] %s288
          %291 = dma.hbm_to_vmem [thread:$0]  %s2, 16, %s289, [#allocation9]
        $region24: #{tpu_custom_call.1} parent=11 // pred_fallthru
          _
        // Predicated region
        $region25: #{tpu_custom_call.1} parent=11 // pred_check
          %p292 = pneg %p125
        $region26: #{tpu_custom_call.1} parent=11 // pred_check_branch
          %294 = sbr.rel (%p292) target = $region28
        $region27: #{tpu_custom_call.1} parent=11 // pred_region
          %s296 = ssub.s32 16, 16
          %297 = vsyncadd [#allocation12], %s296
          %s299 = sshll.u32 [#allocation11], 4
          %s300 = int_to_ptr.vmem [resolvable:$true] %s299
          %302 = dma.hbm_to_vmem [thread:$0]  %s3, 16, %s300, [#allocation12]
        $region28: #{tpu_custom_call.1} parent=11 // pred_fallthru
          _
        // Predicated region
        $region29: #{tpu_custom_call.1} parent=11 // pred_check
          %p303 = pneg %p146
        $region30: #{tpu_custom_call.1} parent=11 // pred_check_branch
          %305 = sbr.rel (%p303) target = $region32
        $region31: #{tpu_custom_call.1} parent=11 // pred_region
          %s307 = ssub.s32 16, 16
          %308 = vsyncadd [#allocation12], %s307
          %s310 = sshll.u32 [#allocation13], 4
          %s311 = int_to_ptr.vmem [resolvable:$true] %s310
          %313 = dma.hbm_to_vmem [thread:$0]  %s4, 16, %s311, [#allocation12]
        $region32: #{tpu_custom_call.1} parent=11 // pred_fallthru
          _
        // Predicated region
        $region33: #{tpu_custom_call.1} parent=11 // pred_check
          %p314 = pneg %p167
        $region34: #{tpu_custom_call.1} parent=11 // pred_check_branch
          %316 = sbr.rel (%p314) target = $region36
        $region35: #{tpu_custom_call.1} parent=11 // pred_region
          %s318 = ssub.s32 16, 16
          %319 = vsyncadd [#allocation15], %s318
          %s321 = sshll.u32 [#allocation14], 4
          %s322 = int_to_ptr.vmem [resolvable:$true] %s321
          %324 = dma.hbm_to_vmem [thread:$0]  %s5, 16, %s322, [#allocation15]
        $region36: #{tpu_custom_call.1} parent=11 // pred_fallthru
          _
        // Predicated region
        $region37: #{tpu_custom_call.1} parent=11 // pred_check
          %p325 = pneg %p214
        $region38: #{tpu_custom_call.1} parent=11 // pred_check_branch
          %327 = sbr.rel (%p325) target = $region40
        $region39: #{tpu_custom_call.1} parent=11 // pred_region
          %s329 = ssub.s32 1664, 1664
          %330 = vsyncadd [#allocation9], %s329
          %s331 = sshll.u32 [#allocation17], 4
          %s332 = int_to_ptr.vmem [resolvable:$true] %s331
          %337 = dma.hbm_to_vmem [thread:$0]  %s7, 1664, %s332, [#allocation9], 128, 128, 8
        $region40: #{tpu_custom_call.1} parent=11 // pred_fallthru
          _
      $region12: #{tpu_custom_call.1} parent=5 // pred_fallthru
        _
      %p338 = scmp.lt.s32.totalorder %s19, 4
      // Predicated region
      $region41: #{tpu_custom_call.1} parent=5 // pred_check
        %p339 = pneg %p338
      $region42: #{tpu_custom_call.1} parent=5 // pred_check_branch
        %341 = sbr.rel (%p339) target = $region44
      $region43: #{tpu_custom_call.1} parent=5 // pred_region
        // Predicated region
        $region45: #{tpu_custom_call.1} parent=43 // pred_check
          %p342 = pneg %p187
        $region46: #{tpu_custom_call.1} parent=43 // pred_check_branch
          %344 = sbr.rel (%p342) target = $region48
        $region47: #{tpu_custom_call.1} parent=43 // pred_region
          %s345 = sand.u32 %s19, 1
          %s346 = scalar_lea.sflag [#allocation6], %s345
          %s347 = sand.u32 %s177, 1
          %s348 = smul.addr %s347, 1600
          %s349 = scalar_lea.vmem [#allocation16], %s348
          %s350 = smul.u32 25, %s27
          %s352 = ssub.s32 25600, 25600
          %353 = vsyncadd %s346, %s352
          %s354 = smul.addr %s350, 16
          %s355 = smul.addr %s354, 64
          %s356 = scalar_lea.hbm %s6, %s355
          %s357 = sshll.u32 %s349, 4
          %s358 = int_to_ptr.vmem [resolvable:$true] %s357
          %363 = dma.hbm_to_vmem [thread:$0]  %s356, 25600, %s358, %s346, 64, 64, 4
        $region48: #{tpu_custom_call.1} parent=43 // pred_fallthru
          _
      $region44: #{tpu_custom_call.1} parent=5 // pred_fallthru
        _
      %p364 = scmp.le.s32.totalorder 1, %s19
      %p365 = scmp.lt.s32.totalorder %s19, 5
      %p366 = pnand %p364, %p365
      %p367 = pneg %p366
      // Predicated region
      $region49: #{tpu_custom_call.1} parent=5 // pred_check
        _
      $region50: #{tpu_custom_call.1} parent=5 // pred_check_branch
        %369 = sbr.rel (%p366) target = $region52
      $region51: #{tpu_custom_call.1} parent=5 // pred_region
        %s370 = ssub.s32 %s19, 1
        // Predicated region
        $region53: #{tpu_custom_call.1} parent=51 // pred_check
          %p371 = pneg %p57
        $region54: #{tpu_custom_call.1} parent=51 // pred_check_branch
          %373 = sbr.rel (%p371) target = $region56
        $region55: #{tpu_custom_call.1} parent=51 // pred_region
          %374 = dma.done [#allocation6], 128
        $region56: #{tpu_custom_call.1} parent=51 // pred_fallthru
          _
        // Predicated region
        $region57: #{tpu_custom_call.1} parent=51 // pred_check
          %p375 = pneg %p83
        $region58: #{tpu_custom_call.1} parent=51 // pred_check_branch
          %377 = sbr.rel (%p375) target = $region60
        $region59: #{tpu_custom_call.1} parent=51 // pred_region
          %378 = dma.done [#allocation9], 128
        $region60: #{tpu_custom_call.1} parent=51 // pred_fallthru
          _
        // Predicated region
        $region61: #{tpu_custom_call.1} parent=51 // pred_check
          %p379 = pneg %p104
        $region62: #{tpu_custom_call.1} parent=51 // pred_check_branch
          %381 = sbr.rel (%p379) target = $region64
        $region63: #{tpu_custom_call.1} parent=51 // pred_region
          %382 = dma.done [#allocation9], 16
        $region64: #{tpu_custom_call.1} parent=51 // pred_fallthru
          _
        // Predicated region
        $region65: #{tpu_custom_call.1} parent=51 // pred_check
          %p383 = pneg %p125
        $region66: #{tpu_custom_call.1} parent=51 // pred_check_branch
          %385 = sbr.rel (%p383) target = $region68
        $region67: #{tpu_custom_call.1} parent=51 // pred_region
          %386 = dma.done [#allocation12], 16
        $region68: #{tpu_custom_call.1} parent=51 // pred_fallthru
          _
        // Predicated region
        $region69: #{tpu_custom_call.1} parent=51 // pred_check
          %p387 = pneg %p146
        $region70: #{tpu_custom_call.1} parent=51 // pred_check_branch
          %389 = sbr.rel (%p387) target = $region72
        $region71: #{tpu_custom_call.1} parent=51 // pred_region
          %390 = dma.done [#allocation12], 16
        $region72: #{tpu_custom_call.1} parent=51 // pred_fallthru
          _
        // Predicated region
        $region73: #{tpu_custom_call.1} parent=51 // pred_check
          %p391 = pneg %p167
        $region74: #{tpu_custom_call.1} parent=51 // pred_check_branch
          %393 = sbr.rel (%p391) target = $region76
        $region75: #{tpu_custom_call.1} parent=51 // pred_region
          %394 = dma.done [#allocation15], 16
        $region76: #{tpu_custom_call.1} parent=51 // pred_fallthru
          _
        %s395 = sand.u32 %s24, 1
        %s396 = scalar_lea.sflag [#allocation6], %s395
        %s397 = sand.u32 %s180, 1
        %s398 = smul.addr %s397, 1600
        %s399 = scalar_lea.vmem [#allocation16], %s398
        // Predicated region
        $region77: #{tpu_custom_call.1} parent=51 // pred_check
          %p400 = pneg %p193
        $region78: #{tpu_custom_call.1} parent=51 // pred_check_branch
          %402 = sbr.rel (%p400) target = $region80
        $region79: #{tpu_custom_call.1} parent=51 // pred_region
          %403 = dma.done %s396, 25600
        $region80: #{tpu_custom_call.1} parent=51 // pred_fallthru
          _
        // Predicated region
        $region81: #{tpu_custom_call.1} parent=51 // pred_check
          %p404 = pneg %p214
        $region82: #{tpu_custom_call.1} parent=51 // pred_check_branch
          %406 = sbr.rel (%p404) target = $region84
        $region83: #{tpu_custom_call.1} parent=51 // pred_region
          %407 = dma.done [#allocation9], 1664
        $region84: #{tpu_custom_call.1} parent=51 // pred_fallthru
          _
        %p408 = pneg %p57
        %p409 = pneg %p54
        %p410 = pneg %p83
        %p411 = pneg %p80
        %p412 = pneg %p104
        %p413 = pneg %p101
        %p414 = pneg %p125
        %p415 = pneg %p122
        %p416 = pneg %p146
        %p417 = pneg %p143
        %p418 = pneg %p167
        %p419 = pneg %p164
        %s420 = sand.u32 %s24, 1
        %s421 = scalar_lea.sflag [#allocation6], %s420
        %s422 = sand.u32 %s180, 1
        %s423 = smul.addr %s422, 1600
        %s424 = scalar_lea.vmem [#allocation16], %s423
        %p425 = pneg %p193
        %p426 = pneg %p190
        %p427 = pneg %p214
        %p428 = pneg %p211
        %p429 = pneg %p240
        %p430 = pneg %p237
        %s431 = smul.u32 25, %s29
        %p433 = scmp.eq.s32.totalorder %s29, 0
        // Predicated region
        $region85: #{tpu_custom_call.1} parent=51 // pred_check
          %p434 = pneg %p433
        $region86: #{tpu_custom_call.1} parent=51 // pred_check_branch
          %436 = sbr.rel (%p434) target = $region88
        $region87: #{tpu_custom_call.1} parent=51 // pred_region
          %v437 = vld [vmem:[#allocation5] sm:$0xff]
          %v438 = vld [vmem:[#allocation10] sm:$0x1]
          %v440 = vlaneseq
          %v441 = vshrl.u32 %v440, 7
          %v442 = vsub.s32 0, %v441
          %v443 = vrot.slane %v438, %v442
          %v445 = vmul.f32 %v437, %v443
          %v446 = vld [vmem:[#allocation11] sm:$0x1]
          %v448 = vlaneseq
          %v449 = vshrl.u32 %v448, 7
          %v450 = vsub.s32 0, %v449
          %v451 = vrot.slane %v446, %v450
          %v453 = vadd.f32 %v445, %v451
          %v454 = vld [vmem:[#allocation8] sm:$0xff]
          %v455 = vld [vmem:[#allocation13] sm:$0x1]
          %v457 = vlaneseq
          %v458 = vshrl.u32 %v457, 7
          %v459 = vsub.s32 0, %v458
          %v460 = vrot.slane %v455, %v459
          %v462 = vmul.f32 %v454, %v460
          %v463 = vld [vmem:[#allocation14] sm:$0x1]
          %v465 = vlaneseq
          %v466 = vshrl.u32 %v465, 7
          %v467 = vsub.s32 0, %v466
          %v468 = vrot.slane %v463, %v467
          %v470 = vadd.f32 %v462, %v468
          %v471 = vpack.c.bf16 %v453, %v453
          %472 = vst [vmem:[#allocation2] sm:$0xf] %v471
          %473 = vst [vmem:[#allocation3] sm:$0xff] %v470
          %474 = vst [vmem:[#allocation4] sm:$0xff] 0.0
        $region88: #{tpu_custom_call.1} parent=51 // pred_fallthru
          _
        %v475 = vld [vmem:[#allocation2] sm:$0xf]
        %v476 = vld [vmem:[#allocation3] sm:$0xff]
        %v477 = vld [vmem:[#allocation4] sm:$0xff]
        %s478 = smul.u32 %s29, 25
        %v479 = vld [vmem:[%s399] sm:$0xf]
        %v480 = vld [vmem:[%s399 + $0x4] sm:$0xf]
        %v481 = vld [vmem:[%s399 + $0x8] sm:$0xf]
        %v482 = vld [vmem:[%s399 + $0xc] sm:$0xf]
        %v483 = vld [vmem:[%s399 + $0x10] sm:$0xf]
        %v484 = vld [vmem:[%s399 + $0x14] sm:$0xf]
        %v485 = vld [vmem:[%s399 + $0x18] sm:$0xf]
        %v486 = vld [vmem:[%s399 + $0x1c] sm:$0xf]
        %v487 = vld [vmem:[%s399 + $0x20] sm:$0xf]
        %v488 = vld [vmem:[%s399 + $0x24] sm:$0xf]
        %v489 = vld [vmem:[%s399 + $0x28] sm:$0xf]
        %v490 = vld [vmem:[%s399 + $0x2c] sm:$0xf]
        %v491 = vld [vmem:[%s399 + $0x30] sm:$0xf]
        %v492 = vld [vmem:[%s399 + $0x34] sm:$0xf]
        %v493 = vld [vmem:[%s399 + $0x38] sm:$0xf]
        %v494 = vld [vmem:[%s399 + $0x3c] sm:$0xf]
        %v511 = vunpack.c.l.b16 %v479
        %v512 = vunpack.c.l.b16 %v480
        %v513 = vunpack.c.l.b16 %v481
        %v514 = vunpack.c.l.b16 %v482
        %v515 = vunpack.c.l.b16 %v483
        %v516 = vunpack.c.l.b16 %v484
        %v517 = vunpack.c.l.b16 %v485
        %v518 = vunpack.c.l.b16 %v486
        %v519 = vunpack.c.l.b16 %v487
        %v520 = vunpack.c.l.b16 %v488
        %v521 = vunpack.c.l.b16 %v489
        %v522 = vunpack.c.l.b16 %v490
        %v523 = vunpack.c.l.b16 %v491
        %v524 = vunpack.c.l.b16 %v492
        %v525 = vunpack.c.l.b16 %v493
        %v526 = vunpack.c.l.b16 %v494
        %v527 = vpack.c.b16 %v512, %v511
        %v528 = vpack.c.b16 %v514, %v513
        %v529 = vpack.c.b16 %v516, %v515
        %v530 = vpack.c.b16 %v518, %v517
        %v531 = vpack.c.b16 %v520, %v519
        %v532 = vpack.c.b16 %v522, %v521
        %v533 = vpack.c.b16 %v524, %v523
        %v534 = vpack.c.b16 %v526, %v525
        %543 = vmatprep.subr.bf16.mxu0 0
        %544 = vmatpush1.bf16.msra.mxu0 %v527
        %545 = vmatprep.subr.bf16.mxu0 0
        %546 = vmatpush1.bf16.msra.mxu0 %v528
        %547 = vmatprep.subr.bf16.mxu0 0
        %548 = vmatpush1.bf16.msra.mxu0 %v529
        %549 = vmatprep.subr.bf16.mxu0 0
        %550 = vmatpush1.bf16.msra.mxu0 %v530
        %551 = vmatprep.subr.bf16.mxu0 0
        %552 = vmatpush1.bf16.msra.mxu0 %v531
        %553 = vmatprep.subr.bf16.mxu0 0
        %554 = vmatpush1.bf16.msra.mxu0 %v532
        %555 = vmatprep.subr.bf16.mxu0 0
        %556 = vmatpush1.bf16.msra.mxu0 %v533
        %557 = vmatprep.subr.bf16.mxu0 0
        %558 = vmatpush1.bf16.msra.mxu0 %v534
        %559 = vmatprep.subr.bf16.mxu0 0
        %560 = vmatpush1.bf16.msra.mxu0 0
        %561 = vmatprep.subr.bf16.mxu0 0
        %562 = vmatpush1.bf16.msra.mxu0 0
        %563 = vmatprep.subr.bf16.mxu0 0
        %564 = vmatpush1.bf16.msra.mxu0 0
        %565 = vmatprep.subr.bf16.mxu0 0
        %566 = vmatpush1.bf16.msra.mxu0 0
        %567 = vmatprep.subr.bf16.mxu0 0
        %568 = vmatpush1.bf16.msra.mxu0 0
        %569 = vmatprep.subr.bf16.mxu0 0
        %570 = vmatpush1.bf16.msra.mxu0 0
        %571 = vmatprep.subr.bf16.mxu0 0
        %572 = vmatpush1.bf16.msra.mxu0 0
        %573 = vmatprep.subr.bf16.mxu0 0
        %574 = vmatpush1.bf16.msra.mxu0 0
        %575 = vmatprep.mubr.bf16.mxu0 0
        %576 = vmatmul.mubr.bf16.gmra.mrb[0].mxu0 %v475
        %v577 = vpop.f32.mrb[0].mxu0
        %v578 = vadd.f32 0.0, %v577
        %v579 = vpop.f32.mrb[0].mxu0
        %v580 = vpop.f32.mrb[0].mxu0
        %v581 = vpop.f32.mrb[0].mxu0
        %582 = vdwg.mxu0
        %v583 = vmul.f32 %v578, %v476
        %584 = vadd.xlane.f32.xlu0 %v583
        %v585 = vpop.xlane.xlu0 %584
        %s586 = scalar_lea.vmem [#allocation17], %s478
        %v587 = vld [vmem:[%s586] sm:$0x1]
        %v588 = vlaneseq
        %v589 = vshrl.u32 %v588, 7
        %v590 = vsub.s32 0, %v589
        %v591 = vrot.slane %v587, %v590
        %v592 = vmul.f32 %v585, %v591
        %v593 = vadd.f32 %v477, %v592
        %s594 = scalar_lea.vmem %s399, 64 [#allocation16]
        %v595 = vld [vmem:[%s594] sm:$0xf]
        %v596 = vld [vmem:[%s594 + $0x4] sm:$0xf]
        %v597 = vld [vmem:[%s594 + $0x8] sm:$0xf]
        %v598 = vld [vmem:[%s594 + $0xc] sm:$0xf]
        %v599 = vld [vmem:[%s594 + $0x10] sm:$0xf]
        %v600 = vld [vmem:[%s594 + $0x14] sm:$0xf]
        %v601 = vld [vmem:[%s594 + $0x18] sm:$0xf]
        %v602 = vld [vmem:[%s594 + $0x1c] sm:$0xf]
        %v603 = vld [vmem:[%s594 + $0x20] sm:$0xf]
        %v604 = vld [vmem:[%s594 + $0x24] sm:$0xf]
        %v605 = vld [vmem:[%s594 + $0x28] sm:$0xf]
        %v606 = vld [vmem:[%s594 + $0x2c] sm:$0xf]
        %v607 = vld [vmem:[%s594 + $0x30] sm:$0xf]
        %v608 = vld [vmem:[%s594 + $0x34] sm:$0xf]
        %v609 = vld [vmem:[%s594 + $0x38] sm:$0xf]
        %v610 = vld [vmem:[%s594 + $0x3c] sm:$0xf]
        %v627 = vunpack.c.l.b16 %v595
        %v628 = vunpack.c.l.b16 %v596
        %v629 = vunpack.c.l.b16 %v597
        %v630 = vunpack.c.l.b16 %v598
        %v631 = vunpack.c.l.b16 %v599
        %v632 = vunpack.c.l.b16 %v600
        %v633 = vunpack.c.l.b16 %v601
        %v634 = vunpack.c.l.b16 %v602
        %v635 = vunpack.c.l.b16 %v603
        %v636 = vunpack.c.l.b16 %v604
        %v637 = vunpack.c.l.b16 %v605
        %v638 = vunpack.c.l.b16 %v606
        %v639 = vunpack.c.l.b16 %v607
        %v640 = vunpack.c.l.b16 %v608
        %v641 = vunpack.c.l.b16 %v609
        %v642 = vunpack.c.l.b16 %v610
        %v643 = vpack.c.b16 %v628, %v627
        %v644 = vpack.c.b16 %v630, %v629
        %v645 = vpack.c.b16 %v632, %v631
        %v646 = vpack.c.b16 %v634, %v633
        %v647 = vpack.c.b16 %v636, %v635
        %v648 = vpack.c.b16 %v638, %v637
        %v649 = vpack.c.b16 %v640, %v639
        %v650 = vpack.c.b16 %v642, %v641
        %659 = vmatprep.subr.bf16.mxu0 0
        %660 = vmatpush1.bf16.msra.mxu0 %v643
        %661 = vmatprep.subr.bf16.mxu0 0
        %662 = vmatpush1.bf16.msra.mxu0 %v644
        %663 = vmatprep.subr.bf16.mxu0 0
        %664 = vmatpush1.bf16.msra.mxu0 %v645
        %665 = vmatprep.subr.bf16.mxu0 0
        %666 = vmatpush1.bf16.msra.mxu0 %v646
        %667 = vmatprep.subr.bf16.mxu0 0
        %668 = vmatpush1.bf16.msra.mxu0 %v647
        %669 = vmatprep.subr.bf16.mxu0 0
        %670 = vmatpush1.bf16.msra.mxu0 %v648
        %671 = vmatprep.subr.bf16.mxu0 0
        %672 = vmatpush1.bf16.msra.mxu0 %v649
        %673 = vmatprep.subr.bf16.mxu0 0
        %674 = vmatpush1.bf16.msra.mxu0 %v650
        %675 = vmatprep.subr.bf16.mxu0 0
        %676 = vmatpush1.bf16.msra.mxu0 0
        %677 = vmatprep.subr.bf16.mxu0 0
        %678 = vmatpush1.bf16.msra.mxu0 0
        %679 = vmatprep.subr.bf16.mxu0 0
        %680 = vmatpush1.bf16.msra.mxu0 0
        %681 = vmatprep.subr.bf16.mxu0 0
        %682 = vmatpush1.bf16.msra.mxu0 0
        %683 = vmatprep.subr.bf16.mxu0 0
        %684 = vmatpush1.bf16.msra.mxu0 0
        %685 = vmatprep.subr.bf16.mxu0 0
        %686 = vmatpush1.bf16.msra.mxu0 0
        %687 = vmatprep.subr.bf16.mxu0 0
        %688 = vmatpush1.bf16.msra.mxu0 0
        %689 = vmatprep.subr.bf16.mxu0 0
        %690 = vmatpush1.bf16.msra.mxu0 0
        %691 = vmatprep.mubr.bf16.mxu0 0
        %692 = vmatmul.mubr.bf16.gmra.mrb[0].mxu0 %v475
        %v693 = vpop.f32.mrb[0].mxu0
        %v694 = vadd.f32 0.0, %v693
        %v695 = vpop.f32.mrb[0].mxu0
        %v696 = vpop.f32.mrb[0].mxu0
        %v697 = vpop.f32.mrb[0].mxu0
        %698 = vdwg.mxu0
        %v699 = vmul.f32 %v694, %v476
        %700 = vadd.xlane.f32.xlu0 %v699
        %v701 = vpop.xlane.xlu0 %700
        %s702 = sadd.s32 %s478, 1
        %s703 = scalar_lea.vmem [#allocation17], %s702
        %v704 = vld [vmem:[%s703] sm:$0x1]
        %v705 = vlaneseq
        %v706 = vshrl.u32 %v705, 7
        %v707 = vsub.s32 0, %v706
        %v708 = vrot.slane %v704, %v707
        %v709 = vmul.f32 %v701, %v708
        %v710 = vadd.f32 %v593, %v709
        %s711 = scalar_lea.vmem %s399, 128 [#allocation16]
        %v712 = vld [vmem:[%s711] sm:$0xf]
        %v713 = vld [vmem:[%s711 + $0x4] sm:$0xf]
        %v714 = vld [vmem:[%s711 + $0x8] sm:$0xf]
        %v715 = vld [vmem:[%s711 + $0xc] sm:$0xf]
        %v716 = vld [vmem:[%s711 + $0x10] sm:$0xf]
        %v717 = vld [vmem:[%s711 + $0x14] sm:$0xf]
        %v718 = vld [vmem:[%s711 + $0x18] sm:$0xf]
        %v719 = vld [vmem:[%s711 + $0x1c] sm:$0xf]
        %v720 = vld [vmem:[%s711 + $0x20] sm:$0xf]
        %v721 = vld [vmem:[%s711 + $0x24] sm:$0xf]
        %v722 = vld [vmem:[%s711 + $0x28] sm:$0xf]
        %v723 = vld [vmem:[%s711 + $0x2c] sm:$0xf]
        %v724 = vld [vmem:[%s711 + $0x30] sm:$0xf]
        %v725 = vld [vmem:[%s711 + $0x34] sm:$0xf]
        %v726 = vld [vmem:[%s711 + $0x38] sm:$0xf]
        %v727 = vld [vmem:[%s711 + $0x3c] sm:$0xf]
        %v744 = vunpack.c.l.b16 %v712
        %v745 = vunpack.c.l.b16 %v713
        %v746 = vunpack.c.l.b16 %v714
        %v747 = vunpack.c.l.b16 %v715
        %v748 = vunpack.c.l.b16 %v716
        %v749 = vunpack.c.l.b16 %v717
        %v750 = vunpack.c.l.b16 %v718
        %v751 = vunpack.c.l.b16 %v719
        %v752 = vunpack.c.l.b16 %v720
        %v753 = vunpack.c.l.b16 %v721
        %v754 = vunpack.c.l.b16 %v722
        %v755 = vunpack.c.l.b16 %v723
        %v756 = vunpack.c.l.b16 %v724
        %v757 = vunpack.c.l.b16 %v725
        %v758 = vunpack.c.l.b16 %v726
        %v759 = vunpack.c.l.b16 %v727
        %v760 = vpack.c.b16 %v745, %v744
        %v761 = vpack.c.b16 %v747, %v746
        %v762 = vpack.c.b16 %v749, %v748
        %v763 = vpack.c.b16 %v751, %v750
        %v764 = vpack.c.b16 %v753, %v752
        %v765 = vpack.c.b16 %v755, %v754
        %v766 = vpack.c.b16 %v757, %v756
        %v767 = vpack.c.b16 %v759, %v758
        %776 = vmatprep.subr.bf16.mxu0 0
        %777 = vmatpush1.bf16.msra.mxu0 %v760
        %778 = vmatprep.subr.bf16.mxu0 0
        %779 = vmatpush1.bf16.msra.mxu0 %v761
        %780 = vmatprep.subr.bf16.mxu0 0
        %781 = vmatpush1.bf16.msra.mxu0 %v762
        %782 = vmatprep.subr.bf16.mxu0 0
        %783 = vmatpush1.bf16.msra.mxu0 %v763
        %784 = vmatprep.subr.bf16.mxu0 0
        %785 = vmatpush1.bf16.msra.mxu0 %v764
        %786 = vmatprep.subr.bf16.mxu0 0
        %787 = vmatpush1.bf16.msra.mxu0 %v765
        %788 = vmatprep.subr.bf16.mxu0 0
        %789 = vmatpush1.bf16.msra.mxu0 %v766
        %790 = vmatprep.subr.bf16.mxu0 0
        %791 = vmatpush1.bf16.msra.mxu0 %v767
        %792 = vmatprep.subr.bf16.mxu0 0
        %793 = vmatpush1.bf16.msra.mxu0 0
        %794 = vmatprep.subr.bf16.mxu0 0
        %795 = vmatpush1.bf16.msra.mxu0 0
        %796 = vmatprep.subr.bf16.mxu0 0
        %797 = vmatpush1.bf16.msra.mxu0 0
        %798 = vmatprep.subr.bf16.mxu0 0
        %799 = vmatpush1.bf16.msra.mxu0 0
        %800 = vmatprep.subr.bf16.mxu0 0
        %801 = vmatpush1.bf16.msra.mxu0 0
        %802 = vmatprep.subr.bf16.mxu0 0
        %803 = vmatpush1.bf16.msra.mxu0 0
        %804 = vmatprep.subr.bf16.mxu0 0
        %805 = vmatpush1.bf16.msra.mxu0 0
        %806 = vmatprep.subr.bf16.mxu0 0
        %807 = vmatpush1.bf16.msra.mxu0 0
        %808 = vmatprep.mubr.bf16.mxu0 0
        %809 = vmatmul.mubr.bf16.gmra.mrb[0].mxu0 %v475
        %v810 = vpop.f32.mrb[0].mxu0
        %v811 = vadd.f32 0.0, %v810
        %v812 = vpop.f32.mrb[0].mxu0
        %v813 = vpop.f32.mrb[0].mxu0
        %v814 = vpop.f32.mrb[0].mxu0
        %815 = vdwg.mxu0
        %v816 = vmul.f32 %v811, %v476
        %817 = vadd.xlane.f32.xlu0 %v816
        %v818 = vpop.xlane.xlu0 %817
        %s819 = sadd.s32 %s478, 2
        %s820 = scalar_lea.vmem [#allocation17], %s819
        %v821 = vld [vmem:[%s820] sm:$0x1]
        %v822 = vlaneseq
        %v823 = vshrl.u32 %v822, 7
        %v824 = vsub.s32 0, %v823
        %v825 = vrot.slane %v821, %v824
        %v826 = vmul.f32 %v818, %v825
        %v827 = vadd.f32 %v710, %v826
        %s828 = scalar_lea.vmem %s399, 192 [#allocation16]
        %v829 = vld [vmem:[%s828] sm:$0xf]
        %v830 = vld [vmem:[%s828 + $0x4] sm:$0xf]
        %v831 = vld [vmem:[%s828 + $0x8] sm:$0xf]
        %v832 = vld [vmem:[%s828 + $0xc] sm:$0xf]
        %v833 = vld [vmem:[%s828 + $0x10] sm:$0xf]
        %v834 = vld [vmem:[%s828 + $0x14] sm:$0xf]
        %v835 = vld [vmem:[%s828 + $0x18] sm:$0xf]
        %v836 = vld [vmem:[%s828 + $0x1c] sm:$0xf]
        %v837 = vld [vmem:[%s828 + $0x20] sm:$0xf]
        %v838 = vld [vmem:[%s828 + $0x24] sm:$0xf]
        %v839 = vld [vmem:[%s828 + $0x28] sm:$0xf]
        %v840 = vld [vmem:[%s828 + $0x2c] sm:$0xf]
        %v841 = vld [vmem:[%s828 + $0x30] sm:$0xf]
        %v842 = vld [vmem:[%s828 + $0x34] sm:$0xf]
        %v843 = vld [vmem:[%s828 + $0x38] sm:$0xf]
        %v844 = vld [vmem:[%s828 + $0x3c] sm:$0xf]
        %v861 = vunpack.c.l.b16 %v829
        %v862 = vunpack.c.l.b16 %v830
        %v863 = vunpack.c.l.b16 %v831
        %v864 = vunpack.c.l.b16 %v832
        %v865 = vunpack.c.l.b16 %v833
        %v866 = vunpack.c.l.b16 %v834
        %v867 = vunpack.c.l.b16 %v835
        %v868 = vunpack.c.l.b16 %v836
        %v869 = vunpack.c.l.b16 %v837
        %v870 = vunpack.c.l.b16 %v838
        %v871 = vunpack.c.l.b16 %v839
        %v872 = vunpack.c.l.b16 %v840
        %v873 = vunpack.c.l.b16 %v841
        %v874 = vunpack.c.l.b16 %v842
        %v875 = vunpack.c.l.b16 %v843
        %v876 = vunpack.c.l.b16 %v844
        %v877 = vpack.c.b16 %v862, %v861
        %v878 = vpack.c.b16 %v864, %v863
        %v879 = vpack.c.b16 %v866, %v865
        %v880 = vpack.c.b16 %v868, %v867
        %v881 = vpack.c.b16 %v870, %v869
        %v882 = vpack.c.b16 %v872, %v871
        %v883 = vpack.c.b16 %v874, %v873
        %v884 = vpack.c.b16 %v876, %v875
        %893 = vmatprep.subr.bf16.mxu0 0
        %894 = vmatpush1.bf16.msra.mxu0 %v877
        %895 = vmatprep.subr.bf16.mxu0 0
        %896 = vmatpush1.bf16.msra.mxu0 %v878
        %897 = vmatprep.subr.bf16.mxu0 0
        %898 = vmatpush1.bf16.msra.mxu0 %v879
        %899 = vmatprep.subr.bf16.mxu0 0
        %900 = vmatpush1.bf16.msra.mxu0 %v880
        %901 = vmatprep.subr.bf16.mxu0 0
        %902 = vmatpush1.bf16.msra.mxu0 %v881
        %903 = vmatprep.subr.bf16.mxu0 0
        %904 = vmatpush1.bf16.msra.mxu0 %v882
        %905 = vmatprep.subr.bf16.mxu0 0
        %906 = vmatpush1.bf16.msra.mxu0 %v883
        %907 = vmatprep.subr.bf16.mxu0 0
        %908 = vmatpush1.bf16.msra.mxu0 %v884
        %909 = vmatprep.subr.bf16.mxu0 0
        %910 = vmatpush1.bf16.msra.mxu0 0
        %911 = vmatprep.subr.bf16.mxu0 0
        %912 = vmatpush1.bf16.msra.mxu0 0
        %913 = vmatprep.subr.bf16.mxu0 0
        %914 = vmatpush1.bf16.msra.mxu0 0
        %915 = vmatprep.subr.bf16.mxu0 0
        %916 = vmatpush1.bf16.msra.mxu0 0
        %917 = vmatprep.subr.bf16.mxu0 0
        %918 = vmatpush1.bf16.msra.mxu0 0
        %919 = vmatprep.subr.bf16.mxu0 0
        %920 = vmatpush1.bf16.msra.mxu0 0
        %921 = vmatprep.subr.bf16.mxu0 0
        %922 = vmatpush1.bf16.msra.mxu0 0
        %923 = vmatprep.subr.bf16.mxu0 0
        %924 = vmatpush1.bf16.msra.mxu0 0
        %925 = vmatprep.mubr.bf16.mxu0 0
        %926 = vmatmul.mubr.bf16.gmra.mrb[0].mxu0 %v475
        %v927 = vpop.f32.mrb[0].mxu0
        %v928 = vadd.f32 0.0, %v927
        %v929 = vpop.f32.mrb[0].mxu0
        %v930 = vpop.f32.mrb[0].mxu0
        %v931 = vpop.f32.mrb[0].mxu0
        %932 = vdwg.mxu0
        %v933 = vmul.f32 %v928, %v476
        %934 = vadd.xlane.f32.xlu0 %v933
        %v935 = vpop.xlane.xlu0 %934
        %s936 = sadd.s32 %s478, 3
        %s937 = scalar_lea.vmem [#allocation17], %s936
        %v938 = vld [vmem:[%s937] sm:$0x1]
        %v939 = vlaneseq
        %v940 = vshrl.u32 %v939, 7
        %v941 = vsub.s32 0, %v940
        %v942 = vrot.slane %v938, %v941
        %v943 = vmul.f32 %v935, %v942
        %v944 = vadd.f32 %v827, %v943
        %s945 = scalar_lea.vmem %s399, 256 [#allocation16]
        %v946 = vld [vmem:[%s945] sm:$0xf]
        %v947 = vld [vmem:[%s945 + $0x4] sm:$0xf]
        %v948 = vld [vmem:[%s945 + $0x8] sm:$0xf]
        %v949 = vld [vmem:[%s945 + $0xc] sm:$0xf]
        %v950 = vld [vmem:[%s945 + $0x10] sm:$0xf]
        %v951 = vld [vmem:[%s945 + $0x14] sm:$0xf]
        %v952 = vld [vmem:[%s945 + $0x18] sm:$0xf]
        %v953 = vld [vmem:[%s945 + $0x1c] sm:$0xf]
        %v954 = vld [vmem:[%s945 + $0x20] sm:$0xf]
        %v955 = vld [vmem:[%s945 + $0x24] sm:$0xf]
        %v956 = vld [vmem:[%s945 + $0x28] sm:$0xf]
        %v957 = vld [vmem:[%s945 + $0x2c] sm:$0xf]
        %v958 = vld [vmem:[%s945 + $0x30] sm:$0xf]
        %v959 = vld [vmem:[%s945 + $0x34] sm:$0xf]
        %v960 = vld [vmem:[%s945 + $0x38] sm:$0xf]
        %v961 = vld [vmem:[%s945 + $0x3c] sm:$0xf]
        %v978 = vunpack.c.l.b16 %v946
        %v979 = vunpack.c.l.b16 %v947
        %v980 = vunpack.c.l.b16 %v948
        %v981 = vunpack.c.l.b16 %v949
        %v982 = vunpack.c.l.b16 %v950
        %v983 = vunpack.c.l.b16 %v951
        %v984 = vunpack.c.l.b16 %v952
        %v985 = vunpack.c.l.b16 %v953
        %v986 = vunpack.c.l.b16 %v954
        %v987 = vunpack.c.l.b16 %v955
        %v988 = vunpack.c.l.b16 %v956
        %v989 = vunpack.c.l.b16 %v957
        %v990 = vunpack.c.l.b16 %v958
        %v991 = vunpack.c.l.b16 %v959
        %v992 = vunpack.c.l.b16 %v960
        %v993 = vunpack.c.l.b16 %v961
        %v994 = vpack.c.b16 %v979, %v978
        %v995 = vpack.c.b16 %v981, %v980
        %v996 = vpack.c.b16 %v983, %v982
        %v997 = vpack.c.b16 %v985, %v984
        %v998 = vpack.c.b16 %v987, %v986
        %v999 = vpack.c.b16 %v989, %v988
        %v1000 = vpack.c.b16 %v991, %v990
        %v1001 = vpack.c.b16 %v993, %v992
        %1010 = vmatprep.subr.bf16.mxu0 0
        %1011 = vmatpush1.bf16.msra.mxu0 %v994
        %1012 = vmatprep.subr.bf16.mxu0 0
        %1013 = vmatpush1.bf16.msra.mxu0 %v995
        %1014 = vmatprep.subr.bf16.mxu0 0
        %1015 = vmatpush1.bf16.msra.mxu0 %v996
        %1016 = vmatprep.subr.bf16.mxu0 0
        %1017 = vmatpush1.bf16.msra.mxu0 %v997
        %1018 = vmatprep.subr.bf16.mxu0 0
        %1019 = vmatpush1.bf16.msra.mxu0 %v998
        %1020 = vmatprep.subr.bf16.mxu0 0
        %1021 = vmatpush1.bf16.msra.mxu0 %v999
        %1022 = vmatprep.subr.bf16.mxu0 0
        %1023 = vmatpush1.bf16.msra.mxu0 %v1000
        %1024 = vmatprep.subr.bf16.mxu0 0
        %1025 = vmatpush1.bf16.msra.mxu0 %v1001
        %1026 = vmatprep.subr.bf16.mxu0 0
        %1027 = vmatpush1.bf16.msra.mxu0 0
        %1028 = vmatprep.subr.bf16.mxu0 0
        %1029 = vmatpush1.bf16.msra.mxu0 0
        %1030 = vmatprep.subr.bf16.mxu0 0
        %1031 = vmatpush1.bf16.msra.mxu0 0
        %1032 = vmatprep.subr.bf16.mxu0 0
        %1033 = vmatpush1.bf16.msra.mxu0 0
        %1034 = vmatprep.subr.bf16.mxu0 0
        %1035 = vmatpush1.bf16.msra.mxu0 0
        %1036 = vmatprep.subr.bf16.mxu0 0
        %1037 = vmatpush1.bf16.msra.mxu0 0
        %1038 = vmatprep.subr.bf16.mxu0 0
        %1039 = vmatpush1.bf16.msra.mxu0 0
        %1040 = vmatprep.subr.bf16.mxu0 0
        %1041 = vmatpush1.bf16.msra.mxu0 0
        %1042 = vmatprep.mubr.bf16.mxu0 0
        %1043 = vmatmul.mubr.bf16.gmra.mrb[0].mxu0 %v475
        %v1044 = vpop.f32.mrb[0].mxu0
        %v1045 = vadd.f32 0.0, %v1044
        %v1046 = vpop.f32.mrb[0].mxu0
        %v1047 = vpop.f32.mrb[0].mxu0
        %v1048 = vpop.f32.mrb[0].mxu0
        %1049 = vdwg.mxu0
        %v1050 = vmul.f32 %v1045, %v476
        %1051 = vadd.xlane.f32.xlu0 %v1050
        %v1052 = vpop.xlane.xlu0 %1051
        %s1053 = sadd.s32 %s478, 4
        %s1054 = scalar_lea.vmem [#allocation17], %s1053
        %v1055 = vld [vmem:[%s1054] sm:$0x1]
        %v1056 = vlaneseq
        %v1057 = vshrl.u32 %v1056, 7
        %v1058 = vsub.s32 0, %v1057
        %v1059 = vrot.slane %v1055, %v1058
        %v1060 = vmul.f32 %v1052, %v1059
        %v1061 = vadd.f32 %v944, %v1060
        %s1062 = scalar_lea.vmem %s399, 320 [#allocation16]
        %v1063 = vld [vmem:[%s1062] sm:$0xf]
        %v1064 = vld [vmem:[%s1062 + $0x4] sm:$0xf]
        %v1065 = vld [vmem:[%s1062 + $0x8] sm:$0xf]
        %v1066 = vld [vmem:[%s1062 + $0xc] sm:$0xf]
        %v1067 = vld [vmem:[%s1062 + $0x10] sm:$0xf]
        %v1068 = vld [vmem:[%s1062 + $0x14] sm:$0xf]
        %v1069 = vld [vmem:[%s1062 + $0x18] sm:$0xf]
        %v1070 = vld [vmem:[%s1062 + $0x1c] sm:$0xf]
        %v1071 = vld [vmem:[%s1062 + $0x20] sm:$0xf]
        %v1072 = vld [vmem:[%s1062 + $0x24] sm:$0xf]
        %v1073 = vld [vmem:[%s1062 + $0x28] sm:$0xf]
        %v1074 = vld [vmem:[%s1062 + $0x2c] sm:$0xf]
        %v1075 = vld [vmem:[%s1062 + $0x30] sm:$0xf]
        %v1076 = vld [vmem:[%s1062 + $0x34] sm:$0xf]
        %v1077 = vld [vmem:[%s1062 + $0x38] sm:$0xf]
        %v1078 = vld [vmem:[%s1062 + $0x3c] sm:$0xf]
        %v1095 = vunpack.c.l.b16 %v1063
        %v1096 = vunpack.c.l.b16 %v1064
        %v1097 = vunpack.c.l.b16 %v1065
        %v1098 = vunpack.c.l.b16 %v1066
        %v1099 = vunpack.c.l.b16 %v1067
        %v1100 = vunpack.c.l.b16 %v1068
        %v1101 = vunpack.c.l.b16 %v1069
        %v1102 = vunpack.c.l.b16 %v1070
        %v1103 = vunpack.c.l.b16 %v1071
        %v1104 = vunpack.c.l.b16 %v1072
        %v1105 = vunpack.c.l.b16 %v1073
        %v1106 = vunpack.c.l.b16 %v1074
        %v1107 = vunpack.c.l.b16 %v1075
        %v1108 = vunpack.c.l.b16 %v1076
        %v1109 = vunpack.c.l.b16 %v1077
        %v1110 = vunpack.c.l.b16 %v1078
        %v1111 = vpack.c.b16 %v1096, %v1095
        %v1112 = vpack.c.b16 %v1098, %v1097
        %v1113 = vpack.c.b16 %v1100, %v1099
        %v1114 = vpack.c.b16 %v1102, %v1101
        %v1115 = vpack.c.b16 %v1104, %v1103
        %v1116 = vpack.c.b16 %v1106, %v1105
        %v1117 = vpack.c.b16 %v1108, %v1107
        %v1118 = vpack.c.b16 %v1110, %v1109
        %1127 = vmatprep.subr.bf16.mxu0 0
        %1128 = vmatpush1.bf16.msra.mxu0 %v1111
        %1129 = vmatprep.subr.bf16.mxu0 0
        %1130 = vmatpush1.bf16.msra.mxu0 %v1112
        %1131 = vmatprep.subr.bf16.mxu0 0
        %1132 = vmatpush1.bf16.msra.mxu0 %v1113
        %1133 = vmatprep.subr.bf16.mxu0 0
        %1134 = vmatpush1.bf16.msra.mxu0 %v1114
        %1135 = vmatprep.subr.bf16.mxu0 0
        %1136 = vmatpush1.bf16.msra.mxu0 %v1115
        %1137 = vmatprep.subr.bf16.mxu0 0
        %1138 = vmatpush1.bf16.msra.mxu0 %v1116
        %1139 = vmatprep.subr.bf16.mxu0 0
        %1140 = vmatpush1.bf16.msra.mxu0 %v1117
        %1141 = vmatprep.subr.bf16.mxu0 0
        %1142 = vmatpush1.bf16.msra.mxu0 %v1118
        %1143 = vmatprep.subr.bf16.mxu0 0
        %1144 = vmatpush1.bf16.msra.mxu0 0
        %1145 = vmatprep.subr.bf16.mxu0 0
        %1146 = vmatpush1.bf16.msra.mxu0 0
        %1147 = vmatprep.subr.bf16.mxu0 0
        %1148 = vmatpush1.bf16.msra.mxu0 0
        %1149 = vmatprep.subr.bf16.mxu0 0
        %1150 = vmatpush1.bf16.msra.mxu0 0
        %1151 = vmatprep.subr.bf16.mxu0 0
        %1152 = vmatpush1.bf16.msra.mxu0 0
        %1153 = vmatprep.subr.bf16.mxu0 0
        %1154 = vmatpush1.bf16.msra.mxu0 0
        %1155 = vmatprep.subr.bf16.mxu0 0
        %1156 = vmatpush1.bf16.msra.mxu0 0
        %1157 = vmatprep.subr.bf16.mxu0 0
        %1158 = vmatpush1.bf16.msra.mxu0 0
        %1159 = vmatprep.mubr.bf16.mxu0 0
        %1160 = vmatmul.mubr.bf16.gmra.mrb[0].mxu0 %v475
        %v1161 = vpop.f32.mrb[0].mxu0
        %v1162 = vadd.f32 0.0, %v1161
        %v1163 = vpop.f32.mrb[0].mxu0
        %v1164 = vpop.f32.mrb[0].mxu0
        %v1165 = vpop.f32.mrb[0].mxu0
        %1166 = vdwg.mxu0
        %v1167 = vmul.f32 %v1162, %v476
        %1168 = vadd.xlane.f32.xlu0 %v1167
        %v1169 = vpop.xlane.xlu0 %1168
        %s1170 = sadd.s32 %s478, 5
        %s1171 = scalar_lea.vmem [#allocation17], %s1170
        %v1172 = vld [vmem:[%s1171] sm:$0x1]
        %v1173 = vlaneseq
        %v1174 = vshrl.u32 %v1173, 7
        %v1175 = vsub.s32 0, %v1174
        %v1176 = vrot.slane %v1172, %v1175
        %v1177 = vmul.f32 %v1169, %v1176
        %v1178 = vadd.f32 %v1061, %v1177
        %s1179 = scalar_lea.vmem %s399, 384 [#allocation16]
        %v1180 = vld [vmem:[%s1179] sm:$0xf]
        %v1181 = vld [vmem:[%s1179 + $0x4] sm:$0xf]
        %v1182 = vld [vmem:[%s1179 + $0x8] sm:$0xf]
        %v1183 = vld [vmem:[%s1179 + $0xc] sm:$0xf]
        %v1184 = vld [vmem:[%s1179 + $0x10] sm:$0xf]
        %v1185 = vld [vmem:[%s1179 + $0x14] sm:$0xf]
        %v1186 = vld [vmem:[%s1179 + $0x18] sm:$0xf]
        %v1187 = vld [vmem:[%s1179 + $0x1c] sm:$0xf]
        %v1188 = vld [vmem:[%s1179 + $0x20] sm:$0xf]
        %v1189 = vld [vmem:[%s1179 + $0x24] sm:$0xf]
        %v1190 = vld [vmem:[%s1179 + $0x28] sm:$0xf]
        %v1191 = vld [vmem:[%s1179 + $0x2c] sm:$0xf]
        %v1192 = vld [vmem:[%s1179 + $0x30] sm:$0xf]
        %v1193 = vld [vmem:[%s1179 + $0x34] sm:$0xf]
        %v1194 = vld [vmem:[%s1179 + $0x38] sm:$0xf]
        %v1195 = vld [vmem:[%s1179 + $0x3c] sm:$0xf]
        %v1212 = vunpack.c.l.b16 %v1180
        %v1213 = vunpack.c.l.b16 %v1181
        %v1214 = vunpack.c.l.b16 %v1182
        %v1215 = vunpack.c.l.b16 %v1183
        %v1216 = vunpack.c.l.b16 %v1184
        %v1217 = vunpack.c.l.b16 %v1185
        %v1218 = vunpack.c.l.b16 %v1186
        %v1219 = vunpack.c.l.b16 %v1187
        %v1220 = vunpack.c.l.b16 %v1188
        %v1221 = vunpack.c.l.b16 %v1189
        %v1222 = vunpack.c.l.b16 %v1190
        %v1223 = vunpack.c.l.b16 %v1191
        %v1224 = vunpack.c.l.b16 %v1192
        %v1225 = vunpack.c.l.b16 %v1193
        %v1226 = vunpack.c.l.b16 %v1194
        %v1227 = vunpack.c.l.b16 %v1195
        %v1228 = vpack.c.b16 %v1213, %v1212
        %v1229 = vpack.c.b16 %v1215, %v1214
        %v1230 = vpack.c.b16 %v1217, %v1216
        %v1231 = vpack.c.b16 %v1219, %v1218
        %v1232 = vpack.c.b16 %v1221, %v1220
        %v1233 = vpack.c.b16 %v1223, %v1222
        %v1234 = vpack.c.b16 %v1225, %v1224
        %v1235 = vpack.c.b16 %v1227, %v1226
        %1244 = vmatprep.subr.bf16.mxu0 0
        %1245 = vmatpush1.bf16.msra.mxu0 %v1228
        %1246 = vmatprep.subr.bf16.mxu0 0
        %1247 = vmatpush1.bf16.msra.mxu0 %v1229
        %1248 = vmatprep.subr.bf16.mxu0 0
        %1249 = vmatpush1.bf16.msra.mxu0 %v1230
        %1250 = vmatprep.subr.bf16.mxu0 0
        %1251 = vmatpush1.bf16.msra.mxu0 %v1231
        %1252 = vmatprep.subr.bf16.mxu0 0
        %1253 = vmatpush1.bf16.msra.mxu0 %v1232
        %1254 = vmatprep.subr.bf16.mxu0 0
        %1255 = vmatpush1.bf16.msra.mxu0 %v1233
        %1256 = vmatprep.subr.bf16.mxu0 0
        %1257 = vmatpush1.bf16.msra.mxu0 %v1234
        %1258 = vmatprep.subr.bf16.mxu0 0
        %1259 = vmatpush1.bf16.msra.mxu0 %v1235
        %1260 = vmatprep.subr.bf16.mxu0 0
        %1261 = vmatpush1.bf16.msra.mxu0 0
        %1262 = vmatprep.subr.bf16.mxu0 0
        %1263 = vmatpush1.bf16.msra.mxu0 0
        %1264 = vmatprep.subr.bf16.mxu0 0
        %1265 = vmatpush1.bf16.msra.mxu0 0
        %1266 = vmatprep.subr.bf16.mxu0 0
        %1267 = vmatpush1.bf16.msra.mxu0 0
        %1268 = vmatprep.subr.bf16.mxu0 0
        %1269 = vmatpush1.bf16.msra.mxu0 0
        %1270 = vmatprep.subr.bf16.mxu0 0
        %1271 = vmatpush1.bf16.msra.mxu0 0
        %1272 = vmatprep.subr.bf16.mxu0 0
        %1273 = vmatpush1.bf16.msra.mxu0 0
        %1274 = vmatprep.subr.bf16.mxu0 0
        %1275 = vmatpush1.bf16.msra.mxu0 0
        %1276 = vmatprep.mubr.bf16.mxu0 0
        %1277 = vmatmul.mubr.bf16.gmra.mrb[0].mxu0 %v475
        %v1278 = vpop.f32.mrb[0].mxu0
        %v1279 = vadd.f32 0.0, %v1278
        %v1280 = vpop.f32.mrb[0].mxu0
        %v1281 = vpop.f32.mrb[0].mxu0
        %v1282 = vpop.f32.mrb[0].mxu0
        %1283 = vdwg.mxu0
        %v1284 = vmul.f32 %v1279, %v476
        %1285 = vadd.xlane.f32.xlu0 %v1284
        %v1286 = vpop.xlane.xlu0 %1285
        %s1287 = sadd.s32 %s478, 6
        %s1288 = scalar_lea.vmem [#allocation17], %s1287
        %v1289 = vld [vmem:[%s1288] sm:$0x1]
        %v1290 = vlaneseq
        %v1291 = vshrl.u32 %v1290, 7
        %v1292 = vsub.s32 0, %v1291
        %v1293 = vrot.slane %v1289, %v1292
        %v1294 = vmul.f32 %v1286, %v1293
        %v1295 = vadd.f32 %v1178, %v1294
        %s1296 = scalar_lea.vmem %s399, 448 [#allocation16]
        %v1297 = vld [vmem:[%s1296] sm:$0xf]
        %v1298 = vld [vmem:[%s1296 + $0x4] sm:$0xf]
        %v1299 = vld [vmem:[%s1296 + $0x8] sm:$0xf]
        %v1300 = vld [vmem:[%s1296 + $0xc] sm:$0xf]
        %v1301 = vld [vmem:[%s1296 + $0x10] sm:$0xf]
        %v1302 = vld [vmem:[%s1296 + $0x14] sm:$0xf]
        %v1303 = vld [vmem:[%s1296 + $0x18] sm:$0xf]
        %v1304 = vld [vmem:[%s1296 + $0x1c] sm:$0xf]
        %v1305 = vld [vmem:[%s1296 + $0x20] sm:$0xf]
        %v1306 = vld [vmem:[%s1296 + $0x24] sm:$0xf]
        %v1307 = vld [vmem:[%s1296 + $0x28] sm:$0xf]
        %v1308 = vld [vmem:[%s1296 + $0x2c] sm:$0xf]
        %v1309 = vld [vmem:[%s1296 + $0x30] sm:$0xf]
        %v1310 = vld [vmem:[%s1296 + $0x34] sm:$0xf]
        %v1311 = vld [vmem:[%s1296 + $0x38] sm:$0xf]
        %v1312 = vld [vmem:[%s1296 + $0x3c] sm:$0xf]
        %v1329 = vunpack.c.l.b16 %v1297
        %v1330 = vunpack.c.l.b16 %v1298
        %v1331 = vunpack.c.l.b16 %v1299
        %v1332 = vunpack.c.l.b16 %v1300
        %v1333 = vunpack.c.l.b16 %v1301
        %v1334 = vunpack.c.l.b16 %v1302
        %v1335 = vunpack.c.l.b16 %v1303
        %v1336 = vunpack.c.l.b16 %v1304
        %v1337 = vunpack.c.l.b16 %v1305
        %v1338 = vunpack.c.l.b16 %v1306
        %v1339 = vunpack.c.l.b16 %v1307
        %v1340 = vunpack.c.l.b16 %v1308
        %v1341 = vunpack.c.l.b16 %v1309
        %v1342 = vunpack.c.l.b16 %v1310
        %v1343 = vunpack.c.l.b16 %v1311
        %v1344 = vunpack.c.l.b16 %v1312
        %v1345 = vpack.c.b16 %v1330, %v1329
        %v1346 = vpack.c.b16 %v1332, %v1331
        %v1347 = vpack.c.b16 %v1334, %v1333
        %v1348 = vpack.c.b16 %v1336, %v1335
        %v1349 = vpack.c.b16 %v1338, %v1337
        %v1350 = vpack.c.b16 %v1340, %v1339
        %v1351 = vpack.c.b16 %v1342, %v1341
        %v1352 = vpack.c.b16 %v1344, %v1343
        %1361 = vmatprep.subr.bf16.mxu0 0
        %1362 = vmatpush1.bf16.msra.mxu0 %v1345
        %1363 = vmatprep.subr.bf16.mxu0 0
        %1364 = vmatpush1.bf16.msra.mxu0 %v1346
        %1365 = vmatprep.subr.bf16.mxu0 0
        %1366 = vmatpush1.bf16.msra.mxu0 %v1347
        %1367 = vmatprep.subr.bf16.mxu0 0
        %1368 = vmatpush1.bf16.msra.mxu0 %v1348
        %1369 = vmatprep.subr.bf16.mxu0 0
        %1370 = vmatpush1.bf16.msra.mxu0 %v1349
        %1371 = vmatprep.subr.bf16.mxu0 0
        %1372 = vmatpush1.bf16.msra.mxu0 %v1350
        %1373 = vmatprep.subr.bf16.mxu0 0
        %1374 = vmatpush1.bf16.msra.mxu0 %v1351
        %1375 = vmatprep.subr.bf16.mxu0 0
        %1376 = vmatpush1.bf16.msra.mxu0 %v1352
        %1377 = vmatprep.subr.bf16.mxu0 0
        %1378 = vmatpush1.bf16.msra.mxu0 0
        %1379 = vmatprep.subr.bf16.mxu0 0
        %1380 = vmatpush1.bf16.msra.mxu0 0
        %1381 = vmatprep.subr.bf16.mxu0 0
        %1382 = vmatpush1.bf16.msra.mxu0 0
        %1383 = vmatprep.subr.bf16.mxu0 0
        %1384 = vmatpush1.bf16.msra.mxu0 0
        %1385 = vmatprep.subr.bf16.mxu0 0
        %1386 = vmatpush1.bf16.msra.mxu0 0
        %1387 = vmatprep.subr.bf16.mxu0 0
        %1388 = vmatpush1.bf16.msra.mxu0 0
        %1389 = vmatprep.subr.bf16.mxu0 0
        %1390 = vmatpush1.bf16.msra.mxu0 0
        %1391 = vmatprep.subr.bf16.mxu0 0
        %1392 = vmatpush1.bf16.msra.mxu0 0
        %1393 = vmatprep.mubr.bf16.mxu0 0
        %1394 = vmatmul.mubr.bf16.gmra.mrb[0].mxu0 %v475
        %v1395 = vpop.f32.mrb[0].mxu0
        %v1396 = vadd.f32 0.0, %v1395
        %v1397 = vpop.f32.mrb[0].mxu0
        %v1398 = vpop.f32.mrb[0].mxu0
        %v1399 = vpop.f32.mrb[0].mxu0
        %1400 = vdwg.mxu0
        %v1401 = vmul.f32 %v1396, %v476
        %1402 = vadd.xlane.f32.xlu0 %v1401
        %v1403 = vpop.xlane.xlu0 %1402
        %s1404 = sadd.s32 %s478, 7
        %s1405 = scalar_lea.vmem [#allocation17], %s1404
        %v1406 = vld [vmem:[%s1405] sm:$0x1]
        %v1407 = vlaneseq
        %v1408 = vshrl.u32 %v1407, 7
        %v1409 = vsub.s32 0, %v1408
        %v1410 = vrot.slane %v1406, %v1409
        %v1411 = vmul.f32 %v1403, %v1410
        %v1412 = vadd.f32 %v1295, %v1411
        %s1413 = scalar_lea.vmem %s399, 512 [#allocation16]
        %v1414 = vld [vmem:[%s1413] sm:$0xf]
        %v1415 = vld [vmem:[%s1413 + $0x4] sm:$0xf]
        %v1416 = vld [vmem:[%s1413 + $0x8] sm:$0xf]
        %v1417 = vld [vmem:[%s1413 + $0xc] sm:$0xf]
        %v1418 = vld [vmem:[%s1413 + $0x10] sm:$0xf]
        %v1419 = vld [vmem:[%s1413 + $0x14] sm:$0xf]
        %v1420 = vld [vmem:[%s1413 + $0x18] sm:$0xf]
        %v1421 = vld [vmem:[%s1413 + $0x1c] sm:$0xf]
        %v1422 = vld [vmem:[%s1413 + $0x20] sm:$0xf]
        %v1423 = vld [vmem:[%s1413 + $0x24] sm:$0xf]
        %v1424 = vld [vmem:[%s1413 + $0x28] sm:$0xf]
        %v1425 = vld [vmem:[%s1413 + $0x2c] sm:$0xf]
        %v1426 = vld [vmem:[%s1413 + $0x30] sm:$0xf]
        %v1427 = vld [vmem:[%s1413 + $0x34] sm:$0xf]
        %v1428 = vld [vmem:[%s1413 + $0x38] sm:$0xf]
        %v1429 = vld [vmem:[%s1413 + $0x3c] sm:$0xf]
        %v1446 = vunpack.c.l.b16 %v1414
        %v1447 = vunpack.c.l.b16 %v1415
        %v1448 = vunpack.c.l.b16 %v1416
        %v1449 = vunpack.c.l.b16 %v1417
        %v1450 = vunpack.c.l.b16 %v1418
        %v1451 = vunpack.c.l.b16 %v1419
        %v1452 = vunpack.c.l.b16 %v1420
        %v1453 = vunpack.c.l.b16 %v1421
        %v1454 = vunpack.c.l.b16 %v1422
        %v1455 = vunpack.c.l.b16 %v1423
        %v1456 = vunpack.c.l.b16 %v1424
        %v1457 = vunpack.c.l.b16 %v1425
        %v1458 = vunpack.c.l.b16 %v1426
        %v1459 = vunpack.c.l.b16 %v1427
        %v1460 = vunpack.c.l.b16 %v1428
        %v1461 = vunpack.c.l.b16 %v1429
        %v1462 = vpack.c.b16 %v1447, %v1446
        %v1463 = vpack.c.b16 %v1449, %v1448
        %v1464 = vpack.c.b16 %v1451, %v1450
        %v1465 = vpack.c.b16 %v1453, %v1452
        %v1466 = vpack.c.b16 %v1455, %v1454
        %v1467 = vpack.c.b16 %v1457, %v1456
        %v1468 = vpack.c.b16 %v1459, %v1458
        %v1469 = vpack.c.b16 %v1461, %v1460
        %1478 = vmatprep.subr.bf16.mxu0 0
        %1479 = vmatpush1.bf16.msra.mxu0 %v1462
        %1480 = vmatprep.subr.bf16.mxu0 0
        %1481 = vmatpush1.bf16.msra.mxu0 %v1463
        %1482 = vmatprep.subr.bf16.mxu0 0
        %1483 = vmatpush1.bf16.msra.mxu0 %v1464
        %1484 = vmatprep.subr.bf16.mxu0 0
        %1485 = vmatpush1.bf16.msra.mxu0 %v1465
        %1486 = vmatprep.subr.bf16.mxu0 0
        %1487 = vmatpush1.bf16.msra.mxu0 %v1466
        %1488 = vmatprep.subr.bf16.mxu0 0
        %1489 = vmatpush1.bf16.msra.mxu0 %v1467
        %1490 = vmatprep.subr.bf16.mxu0 0
        %1491 = vmatpush1.bf16.msra.mxu0 %v1468
        %1492 = vmatprep.subr.bf16.mxu0 0
        %1493 = vmatpush1.bf16.msra.mxu0 %v1469
        %1494 = vmatprep.subr.bf16.mxu0 0
        %1495 = vmatpush1.bf16.msra.mxu0 0
        %1496 = vmatprep.subr.bf16.mxu0 0
        %1497 = vmatpush1.bf16.msra.mxu0 0
        %1498 = vmatprep.subr.bf16.mxu0 0
        %1499 = vmatpush1.bf16.msra.mxu0 0
        %1500 = vmatprep.subr.bf16.mxu0 0
        %1501 = vmatpush1.bf16.msra.mxu0 0
        %1502 = vmatprep.subr.bf16.mxu0 0
        %1503 = vmatpush1.bf16.msra.mxu0 0
        %1504 = vmatprep.subr.bf16.mxu0 0
        %1505 = vmatpush1.bf16.msra.mxu0 0
        %1506 = vmatprep.subr.bf16.mxu0 0
        %1507 = vmatpush1.bf16.msra.mxu0 0
        %1508 = vmatprep.subr.bf16.mxu0 0
        %1509 = vmatpush1.bf16.msra.mxu0 0
        %1510 = vmatprep.mubr.bf16.mxu0 0
        %1511 = vmatmul.mubr.bf16.gmra.mrb[0].mxu0 %v475
        %v1512 = vpop.f32.mrb[0].mxu0
        %v1513 = vadd.f32 0.0, %v1512
        %v1514 = vpop.f32.mrb[0].mxu0
        %v1515 = vpop.f32.mrb[0].mxu0
        %v1516 = vpop.f32.mrb[0].mxu0
        %1517 = vdwg.mxu0
        %v1518 = vmul.f32 %v1513, %v476
        %1519 = vadd.xlane.f32.xlu0 %v1518
        %v1520 = vpop.xlane.xlu0 %1519
        %s1521 = sadd.s32 %s478, 8
        %s1522 = scalar_lea.vmem [#allocation17], %s1521
        %v1523 = vld [vmem:[%s1522] sm:$0x1]
        %v1524 = vlaneseq
        %v1525 = vshrl.u32 %v1524, 7
        %v1526 = vsub.s32 0, %v1525
        %v1527 = vrot.slane %v1523, %v1526
        %v1528 = vmul.f32 %v1520, %v1527
        %v1529 = vadd.f32 %v1412, %v1528
        %s1530 = scalar_lea.vmem %s399, 576 [#allocation16]
        %v1531 = vld [vmem:[%s1530] sm:$0xf]
        %v1532 = vld [vmem:[%s1530 + $0x4] sm:$0xf]
        %v1533 = vld [vmem:[%s1530 + $0x8] sm:$0xf]
        %v1534 = vld [vmem:[%s1530 + $0xc] sm:$0xf]
        %v1535 = vld [vmem:[%s1530 + $0x10] sm:$0xf]
        %v1536 = vld [vmem:[%s1530 + $0x14] sm:$0xf]
        %v1537 = vld [vmem:[%s1530 + $0x18] sm:$0xf]
        %v1538 = vld [vmem:[%s1530 + $0x1c] sm:$0xf]
        %v1539 = vld [vmem:[%s1530 + $0x20] sm:$0xf]
        %v1540 = vld [vmem:[%s1530 + $0x24] sm:$0xf]
        %v1541 = vld [vmem:[%s1530 + $0x28] sm:$0xf]
        %v1542 = vld [vmem:[%s1530 + $0x2c] sm:$0xf]
        %v1543 = vld [vmem:[%s1530 + $0x30] sm:$0xf]
        %v1544 = vld [vmem:[%s1530 + $0x34] sm:$0xf]
        %v1545 = vld [vmem:[%s1530 + $0x38] sm:$0xf]
        %v1546 = vld [vmem:[%s1530 + $0x3c] sm:$0xf]
        %v1563 = vunpack.c.l.b16 %v1531
        %v1564 = vunpack.c.l.b16 %v1532
        %v1565 = vunpack.c.l.b16 %v1533
        %v1566 = vunpack.c.l.b16 %v1534
        %v1567 = vunpack.c.l.b16 %v1535
        %v1568 = vunpack.c.l.b16 %v1536
        %v1569 = vunpack.c.l.b16 %v1537
        %v1570 = vunpack.c.l.b16 %v1538
        %v1571 = vunpack.c.l.b16 %v1539
        %v1572 = vunpack.c.l.b16 %v1540
        %v1573 = vunpack.c.l.b16 %v1541
        %v1574 = vunpack.c.l.b16 %v1542
        %v1575 = vunpack.c.l.b16 %v1543
        %v1576 = vunpack.c.l.b16 %v1544
        %v1577 = vunpack.c.l.b16 %v1545
        %v1578 = vunpack.c.l.b16 %v1546
        %v1579 = vpack.c.b16 %v1564, %v1563
        %v1580 = vpack.c.b16 %v1566, %v1565
        %v1581 = vpack.c.b16 %v1568, %v1567
        %v1582 = vpack.c.b16 %v1570, %v1569
        %v1583 = vpack.c.b16 %v1572, %v1571
        %v1584 = vpack.c.b16 %v1574, %v1573
        %v1585 = vpack.c.b16 %v1576, %v1575
        %v1586 = vpack.c.b16 %v1578, %v1577
        %1595 = vmatprep.subr.bf16.mxu0 0
        %1596 = vmatpush1.bf16.msra.mxu0 %v1579
        %1597 = vmatprep.subr.bf16.mxu0 0
        %1598 = vmatpush1.bf16.msra.mxu0 %v1580
        %1599 = vmatprep.subr.bf16.mxu0 0
        %1600 = vmatpush1.bf16.msra.mxu0 %v1581
        %1601 = vmatprep.subr.bf16.mxu0 0
        %1602 = vmatpush1.bf16.msra.mxu0 %v1582
        %1603 = vmatprep.subr.bf16.mxu0 0
        %1604 = vmatpush1.bf16.msra.mxu0 %v1583
        %1605 = vmatprep.subr.bf16.mxu0 0
        %1606 = vmatpush1.bf16.msra.mxu0 %v1584
        %1607 = vmatprep.subr.bf16.mxu0 0
        %1608 = vmatpush1.bf16.msra.mxu0 %v1585
        %1609 = vmatprep.subr.bf16.mxu0 0
        %1610 = vmatpush1.bf16.msra.mxu0 %v1586
        %1611 = vmatprep.subr.bf16.mxu0 0
        %1612 = vmatpush1.bf16.msra.mxu0 0
        %1613 = vmatprep.subr.bf16.mxu0 0
        %1614 = vmatpush1.bf16.msra.mxu0 0
        %1615 = vmatprep.subr.bf16.mxu0 0
        %1616 = vmatpush1.bf16.msra.mxu0 0
        %1617 = vmatprep.subr.bf16.mxu0 0
        %1618 = vmatpush1.bf16.msra.mxu0 0
        %1619 = vmatprep.subr.bf16.mxu0 0
        %1620 = vmatpush1.bf16.msra.mxu0 0
        %1621 = vmatprep.subr.bf16.mxu0 0
        %1622 = vmatpush1.bf16.msra.mxu0 0
        %1623 = vmatprep.subr.bf16.mxu0 0
        %1624 = vmatpush1.bf16.msra.mxu0 0
        %1625 = vmatprep.subr.bf16.mxu0 0
        %1626 = vmatpush1.bf16.msra.mxu0 0
        %1627 = vmatprep.mubr.bf16.mxu0 0
        %1628 = vmatmul.mubr.bf16.gmra.mrb[0].mxu0 %v475
        %v1629 = vpop.f32.mrb[0].mxu0
        %v1630 = vadd.f32 0.0, %v1629
        %v1631 = vpop.f32.mrb[0].mxu0
        %v1632 = vpop.f32.mrb[0].mxu0
        %v1633 = vpop.f32.mrb[0].mxu0
        %1634 = vdwg.mxu0
        %v1635 = vmul.f32 %v1630, %v476
        %1636 = vadd.xlane.f32.xlu0 %v1635
        %v1637 = vpop.xlane.xlu0 %1636
        %s1638 = sadd.s32 %s478, 9
        %s1639 = scalar_lea.vmem [#allocation17], %s1638
        %v1640 = vld [vmem:[%s1639] sm:$0x1]
        %v1641 = vlaneseq
        %v1642 = vshrl.u32 %v1641, 7
        %v1643 = vsub.s32 0, %v1642
        %v1644 = vrot.slane %v1640, %v1643
        %v1645 = vmul.f32 %v1637, %v1644
        %v1646 = vadd.f32 %v1529, %v1645
        %s1647 = scalar_lea.vmem %s399, 640 [#allocation16]
        %v1648 = vld [vmem:[%s1647] sm:$0xf]
        %v1649 = vld [vmem:[%s1647 + $0x4] sm:$0xf]
        %v1650 = vld [vmem:[%s1647 + $0x8] sm:$0xf]
        %v1651 = vld [vmem:[%s1647 + $0xc] sm:$0xf]
        %v1652 = vld [vmem:[%s1647 + $0x10] sm:$0xf]
        %v1653 = vld [vmem:[%s1647 + $0x14] sm:$0xf]
        %v1654 = vld [vmem:[%s1647 + $0x18] sm:$0xf]
        %v1655 = vld [vmem:[%s1647 + $0x1c] sm:$0xf]
        %v1656 = vld [vmem:[%s1647 + $0x20] sm:$0xf]
        %v1657 = vld [vmem:[%s1647 + $0x24] sm:$0xf]
        %v1658 = vld [vmem:[%s1647 + $0x28] sm:$0xf]
        %v1659 = vld [vmem:[%s1647 + $0x2c] sm:$0xf]
        %v1660 = vld [vmem:[%s1647 + $0x30] sm:$0xf]
        %v1661 = vld [vmem:[%s1647 + $0x34] sm:$0xf]
        %v1662 = vld [vmem:[%s1647 + $0x38] sm:$0xf]
        %v1663 = vld [vmem:[%s1647 + $0x3c] sm:$0xf]
        %v1680 = vunpack.c.l.b16 %v1648
        %v1681 = vunpack.c.l.b16 %v1649
        %v1682 = vunpack.c.l.b16 %v1650
        %v1683 = vunpack.c.l.b16 %v1651
        %v1684 = vunpack.c.l.b16 %v1652
        %v1685 = vunpack.c.l.b16 %v1653
        %v1686 = vunpack.c.l.b16 %v1654
        %v1687 = vunpack.c.l.b16 %v1655
        %v1688 = vunpack.c.l.b16 %v1656
        %v1689 = vunpack.c.l.b16 %v1657
        %v1690 = vunpack.c.l.b16 %v1658
        %v1691 = vunpack.c.l.b16 %v1659
        %v1692 = vunpack.c.l.b16 %v1660
        %v1693 = vunpack.c.l.b16 %v1661
        %v1694 = vunpack.c.l.b16 %v1662
        %v1695 = vunpack.c.l.b16 %v1663
        %v1696 = vpack.c.b16 %v1681, %v1680
        %v1697 = vpack.c.b16 %v1683, %v1682
        %v1698 = vpack.c.b16 %v1685, %v1684
        %v1699 = vpack.c.b16 %v1687, %v1686
        %v1700 = vpack.c.b16 %v1689, %v1688
        %v1701 = vpack.c.b16 %v1691, %v1690
        %v1702 = vpack.c.b16 %v1693, %v1692
        %v1703 = vpack.c.b16 %v1695, %v1694
        %1712 = vmatprep.subr.bf16.mxu0 0
        %1713 = vmatpush1.bf16.msra.mxu0 %v1696
        %1714 = vmatprep.subr.bf16.mxu0 0
        %1715 = vmatpush1.bf16.msra.mxu0 %v1697
        %1716 = vmatprep.subr.bf16.mxu0 0
        %1717 = vmatpush1.bf16.msra.mxu0 %v1698
        %1718 = vmatprep.subr.bf16.mxu0 0
        %1719 = vmatpush1.bf16.msra.mxu0 %v1699
        %1720 = vmatprep.subr.bf16.mxu0 0
        %1721 = vmatpush1.bf16.msra.mxu0 %v1700
        %1722 = vmatprep.subr.bf16.mxu0 0
        %1723 = vmatpush1.bf16.msra.mxu0 %v1701
        %1724 = vmatprep.subr.bf16.mxu0 0
        %1725 = vmatpush1.bf16.msra.mxu0 %v1702
        %1726 = vmatprep.subr.bf16.mxu0 0
        %1727 = vmatpush1.bf16.msra.mxu0 %v1703
        %1728 = vmatprep.subr.bf16.mxu0 0
        %1729 = vmatpush1.bf16.msra.mxu0 0
        %1730 = vmatprep.subr.bf16.mxu0 0
        %1731 = vmatpush1.bf16.msra.mxu0 0
        %1732 = vmatprep.subr.bf16.mxu0 0
        %1733 = vmatpush1.bf16.msra.mxu0 0
        %1734 = vmatprep.subr.bf16.mxu0 0
        %1735 = vmatpush1.bf16.msra.mxu0 0
        %1736 = vmatprep.subr.bf16.mxu0 0
        %1737 = vmatpush1.bf16.msra.mxu0 0
        %1738 = vmatprep.subr.bf16.mxu0 0
        %1739 = vmatpush1.bf16.msra.mxu0 0
        %1740 = vmatprep.subr.bf16.mxu0 0
        %1741 = vmatpush1.bf16.msra.mxu0 0
        %1742 = vmatprep.subr.bf16.mxu0 0
        %1743 = vmatpush1.bf16.msra.mxu0 0
        %1744 = vmatprep.mubr.bf16.mxu0 0
        %1745 = vmatmul.mubr.bf16.gmra.mrb[0].mxu0 %v475
        %v1746 = vpop.f32.mrb[0].mxu0
        %v1747 = vadd.f32 0.0, %v1746
        %v1748 = vpop.f32.mrb[0].mxu0
        %v1749 = vpop.f32.mrb[0].mxu0
        %v1750 = vpop.f32.mrb[0].mxu0
        %1751 = vdwg.mxu0
        %v1752 = vmul.f32 %v1747, %v476
        %1753 = vadd.xlane.f32.xlu0 %v1752
        %v1754 = vpop.xlane.xlu0 %1753
        %s1755 = sadd.s32 %s478, 10
        %s1756 = scalar_lea.vmem [#allocation17], %s1755
        %v1757 = vld [vmem:[%s1756] sm:$0x1]
        %v1758 = vlaneseq
        %v1759 = vshrl.u32 %v1758, 7
        %v1760 = vsub.s32 0, %v1759
        %v1761 = vrot.slane %v1757, %v1760
        %v1762 = vmul.f32 %v1754, %v1761
        %v1763 = vadd.f32 %v1646, %v1762
        %s1764 = scalar_lea.vmem %s399, 704 [#allocation16]
        %v1765 = vld [vmem:[%s1764] sm:$0xf]
        %v1766 = vld [vmem:[%s1764 + $0x4] sm:$0xf]
        %v1767 = vld [vmem:[%s1764 + $0x8] sm:$0xf]
        %v1768 = vld [vmem:[%s1764 + $0xc] sm:$0xf]
        %v1769 = vld [vmem:[%s1764 + $0x10] sm:$0xf]
        %v1770 = vld [vmem:[%s1764 + $0x14] sm:$0xf]
        %v1771 = vld [vmem:[%s1764 + $0x18] sm:$0xf]
        %v1772 = vld [vmem:[%s1764 + $0x1c] sm:$0xf]
        %v1773 = vld [vmem:[%s1764 + $0x20] sm:$0xf]
        %v1774 = vld [vmem:[%s1764 + $0x24] sm:$0xf]
        %v1775 = vld [vmem:[%s1764 + $0x28] sm:$0xf]
        %v1776 = vld [vmem:[%s1764 + $0x2c] sm:$0xf]
        %v1777 = vld [vmem:[%s1764 + $0x30] sm:$0xf]
        %v1778 = vld [vmem:[%s1764 + $0x34] sm:$0xf]
        %v1779 = vld [vmem:[%s1764 + $0x38] sm:$0xf]
        %v1780 = vld [vmem:[%s1764 + $0x3c] sm:$0xf]
        %v1797 = vunpack.c.l.b16 %v1765
        %v1798 = vunpack.c.l.b16 %v1766
        %v1799 = vunpack.c.l.b16 %v1767
        %v1800 = vunpack.c.l.b16 %v1768
        %v1801 = vunpack.c.l.b16 %v1769
        %v1802 = vunpack.c.l.b16 %v1770
        %v1803 = vunpack.c.l.b16 %v1771
        %v1804 = vunpack.c.l.b16 %v1772
        %v1805 = vunpack.c.l.b16 %v1773
        %v1806 = vunpack.c.l.b16 %v1774
        %v1807 = vunpack.c.l.b16 %v1775
        %v1808 = vunpack.c.l.b16 %v1776
        %v1809 = vunpack.c.l.b16 %v1777
        %v1810 = vunpack.c.l.b16 %v1778
        %v1811 = vunpack.c.l.b16 %v1779
        %v1812 = vunpack.c.l.b16 %v1780
        %v1813 = vpack.c.b16 %v1798, %v1797
        %v1814 = vpack.c.b16 %v1800, %v1799
        %v1815 = vpack.c.b16 %v1802, %v1801
        %v1816 = vpack.c.b16 %v1804, %v1803
        %v1817 = vpack.c.b16 %v1806, %v1805
        %v1818 = vpack.c.b16 %v1808, %v1807
        %v1819 = vpack.c.b16 %v1810, %v1809
        %v1820 = vpack.c.b16 %v1812, %v1811
        %1829 = vmatprep.subr.bf16.mxu0 0
        %1830 = vmatpush1.bf16.msra.mxu0 %v1813
        %1831 = vmatprep.subr.bf16.mxu0 0
        %1832 = vmatpush1.bf16.msra.mxu0 %v1814
        %1833 = vmatprep.subr.bf16.mxu0 0
        %1834 = vmatpush1.bf16.msra.mxu0 %v1815
        %1835 = vmatprep.subr.bf16.mxu0 0
        %1836 = vmatpush1.bf16.msra.mxu0 %v1816
        %1837 = vmatprep.subr.bf16.mxu0 0
        %1838 = vmatpush1.bf16.msra.mxu0 %v1817
        %1839 = vmatprep.subr.bf16.mxu0 0
        %1840 = vmatpush1.bf16.msra.mxu0 %v1818
        %1841 = vmatprep.subr.bf16.mxu0 0
        %1842 = vmatpush1.bf16.msra.mxu0 %v1819
        %1843 = vmatprep.subr.bf16.mxu0 0
        %1844 = vmatpush1.bf16.msra.mxu0 %v1820
        %1845 = vmatprep.subr.bf16.mxu0 0
        %1846 = vmatpush1.bf16.msra.mxu0 0
        %1847 = vmatprep.subr.bf16.mxu0 0
        %1848 = vmatpush1.bf16.msra.mxu0 0
        %1849 = vmatprep.subr.bf16.mxu0 0
        %1850 = vmatpush1.bf16.msra.mxu0 0
        %1851 = vmatprep.subr.bf16.mxu0 0
        %1852 = vmatpush1.bf16.msra.mxu0 0
        %1853 = vmatprep.subr.bf16.mxu0 0
        %1854 = vmatpush1.bf16.msra.mxu0 0
        %1855 = vmatprep.subr.bf16.mxu0 0
        %1856 = vmatpush1.bf16.msra.mxu0 0
        %1857 = vmatprep.subr.bf16.mxu0 0
        %1858 = vmatpush1.bf16.msra.mxu0 0
        %1859 = vmatprep.subr.bf16.mxu0 0
        %1860 = vmatpush1.bf16.msra.mxu0 0
        %1861 = vmatprep.mubr.bf16.mxu0 0
        %1862 = vmatmul.mubr.bf16.gmra.mrb[0].mxu0 %v475
        %v1863 = vpop.f32.mrb[0].mxu0
        %v1864 = vadd.f32 0.0, %v1863
        %v1865 = vpop.f32.mrb[0].mxu0
        %v1866 = vpop.f32.mrb[0].mxu0
        %v1867 = vpop.f32.mrb[0].mxu0
        %1868 = vdwg.mxu0
        %v1869 = vmul.f32 %v1864, %v476
        %1870 = vadd.xlane.f32.xlu0 %v1869
        %v1871 = vpop.xlane.xlu0 %1870
        %s1872 = sadd.s32 %s478, 11
        %s1873 = scalar_lea.vmem [#allocation17], %s1872
        %v1874 = vld [vmem:[%s1873] sm:$0x1]
        %v1875 = vlaneseq
        %v1876 = vshrl.u32 %v1875, 7
        %v1877 = vsub.s32 0, %v1876
        %v1878 = vrot.slane %v1874, %v1877
        %v1879 = vmul.f32 %v1871, %v1878
        %v1880 = vadd.f32 %v1763, %v1879
        %s1881 = scalar_lea.vmem %s399, 768 [#allocation16]
        %v1882 = vld [vmem:[%s1881] sm:$0xf]
        %v1883 = vld [vmem:[%s1881 + $0x4] sm:$0xf]
        %v1884 = vld [vmem:[%s1881 + $0x8] sm:$0xf]
        %v1885 = vld [vmem:[%s1881 + $0xc] sm:$0xf]
        %v1886 = vld [vmem:[%s1881 + $0x10] sm:$0xf]
        %v1887 = vld [vmem:[%s1881 + $0x14] sm:$0xf]
        %v1888 = vld [vmem:[%s1881 + $0x18] sm:$0xf]
        %v1889 = vld [vmem:[%s1881 + $0x1c] sm:$0xf]
        %v1890 = vld [vmem:[%s1881 + $0x20] sm:$0xf]
        %v1891 = vld [vmem:[%s1881 + $0x24] sm:$0xf]
        %v1892 = vld [vmem:[%s1881 + $0x28] sm:$0xf]
        %v1893 = vld [vmem:[%s1881 + $0x2c] sm:$0xf]
        %v1894 = vld [vmem:[%s1881 + $0x30] sm:$0xf]
        %v1895 = vld [vmem:[%s1881 + $0x34] sm:$0xf]
        %v1896 = vld [vmem:[%s1881 + $0x38] sm:$0xf]
        %v1897 = vld [vmem:[%s1881 + $0x3c] sm:$0xf]
        %v1914 = vunpack.c.l.b16 %v1882
        %v1915 = vunpack.c.l.b16 %v1883
        %v1916 = vunpack.c.l.b16 %v1884
        %v1917 = vunpack.c.l.b16 %v1885
        %v1918 = vunpack.c.l.b16 %v1886
        %v1919 = vunpack.c.l.b16 %v1887
        %v1920 = vunpack.c.l.b16 %v1888
        %v1921 = vunpack.c.l.b16 %v1889
        %v1922 = vunpack.c.l.b16 %v1890
        %v1923 = vunpack.c.l.b16 %v1891
        %v1924 = vunpack.c.l.b16 %v1892
        %v1925 = vunpack.c.l.b16 %v1893
        %v1926 = vunpack.c.l.b16 %v1894
        %v1927 = vunpack.c.l.b16 %v1895
        %v1928 = vunpack.c.l.b16 %v1896
        %v1929 = vunpack.c.l.b16 %v1897
        %v1930 = vpack.c.b16 %v1915, %v1914
        %v1931 = vpack.c.b16 %v1917, %v1916
        %v1932 = vpack.c.b16 %v1919, %v1918
        %v1933 = vpack.c.b16 %v1921, %v1920
        %v1934 = vpack.c.b16 %v1923, %v1922
        %v1935 = vpack.c.b16 %v1925, %v1924
        %v1936 = vpack.c.b16 %v1927, %v1926
        %v1937 = vpack.c.b16 %v1929, %v1928
        %1946 = vmatprep.subr.bf16.mxu0 0
        %1947 = vmatpush1.bf16.msra.mxu0 %v1930
        %1948 = vmatprep.subr.bf16.mxu0 0
        %1949 = vmatpush1.bf16.msra.mxu0 %v1931
        %1950 = vmatprep.subr.bf16.mxu0 0
        %1951 = vmatpush1.bf16.msra.mxu0 %v1932
        %1952 = vmatprep.subr.bf16.mxu0 0
        %1953 = vmatpush1.bf16.msra.mxu0 %v1933
        %1954 = vmatprep.subr.bf16.mxu0 0
        %1955 = vmatpush1.bf16.msra.mxu0 %v1934
        %1956 = vmatprep.subr.bf16.mxu0 0
        %1957 = vmatpush1.bf16.msra.mxu0 %v1935
        %1958 = vmatprep.subr.bf16.mxu0 0
        %1959 = vmatpush1.bf16.msra.mxu0 %v1936
        %1960 = vmatprep.subr.bf16.mxu0 0
        %1961 = vmatpush1.bf16.msra.mxu0 %v1937
        %1962 = vmatprep.subr.bf16.mxu0 0
        %1963 = vmatpush1.bf16.msra.mxu0 0
        %1964 = vmatprep.subr.bf16.mxu0 0
        %1965 = vmatpush1.bf16.msra.mxu0 0
        %1966 = vmatprep.subr.bf16.mxu0 0
        %1967 = vmatpush1.bf16.msra.mxu0 0
        %1968 = vmatprep.subr.bf16.mxu0 0
        %1969 = vmatpush1.bf16.msra.mxu0 0
        %1970 = vmatprep.subr.bf16.mxu0 0
        %1971 = vmatpush1.bf16.msra.mxu0 0
        %1972 = vmatprep.subr.bf16.mxu0 0
        %1973 = vmatpush1.bf16.msra.mxu0 0
        %1974 = vmatprep.subr.bf16.mxu0 0
        %1975 = vmatpush1.bf16.msra.mxu0 0
        %1976 = vmatprep.subr.bf16.mxu0 0
        %1977 = vmatpush1.bf16.msra.mxu0 0
        %1978 = vmatprep.mubr.bf16.mxu0 0
        %1979 = vmatmul.mubr.bf16.gmra.mrb[0].mxu0 %v475
        %v1980 = vpop.f32.mrb[0].mxu0
        %v1981 = vadd.f32 0.0, %v1980
        %v1982 = vpop.f32.mrb[0].mxu0
        %v1983 = vpop.f32.mrb[0].mxu0
        %v1984 = vpop.f32.mrb[0].mxu0
        %1985 = vdwg.mxu0
        %v1986 = vmul.f32 %v1981, %v476
        %1987 = vadd.xlane.f32.xlu0 %v1986
        %v1988 = vpop.xlane.xlu0 %1987
        %s1989 = sadd.s32 %s478, 12
        %s1990 = scalar_lea.vmem [#allocation17], %s1989
        %v1991 = vld [vmem:[%s1990] sm:$0x1]
        %v1992 = vlaneseq
        %v1993 = vshrl.u32 %v1992, 7
        %v1994 = vsub.s32 0, %v1993
        %v1995 = vrot.slane %v1991, %v1994
        %v1996 = vmul.f32 %v1988, %v1995
        %v1997 = vadd.f32 %v1880, %v1996
        %s1998 = scalar_lea.vmem %s399, 832 [#allocation16]
        %v1999 = vld [vmem:[%s1998] sm:$0xf]
        %v2000 = vld [vmem:[%s1998 + $0x4] sm:$0xf]
        %v2001 = vld [vmem:[%s1998 + $0x8] sm:$0xf]
        %v2002 = vld [vmem:[%s1998 + $0xc] sm:$0xf]
        %v2003 = vld [vmem:[%s1998 + $0x10] sm:$0xf]
        %v2004 = vld [vmem:[%s1998 + $0x14] sm:$0xf]
        %v2005 = vld [vmem:[%s1998 + $0x18] sm:$0xf]
        %v2006 = vld [vmem:[%s1998 + $0x1c] sm:$0xf]
        %v2007 = vld [vmem:[%s1998 + $0x20] sm:$0xf]
        %v2008 = vld [vmem:[%s1998 + $0x24] sm:$0xf]
        %v2009 = vld [vmem:[%s1998 + $0x28] sm:$0xf]
        %v2010 = vld [vmem:[%s1998 + $0x2c] sm:$0xf]
        %v2011 = vld [vmem:[%s1998 + $0x30] sm:$0xf]
        %v2012 = vld [vmem:[%s1998 + $0x34] sm:$0xf]
        %v2013 = vld [vmem:[%s1998 + $0x38] sm:$0xf]
        %v2014 = vld [vmem:[%s1998 + $0x3c] sm:$0xf]
        %v2031 = vunpack.c.l.b16 %v1999
        %v2032 = vunpack.c.l.b16 %v2000
        %v2033 = vunpack.c.l.b16 %v2001
        %v2034 = vunpack.c.l.b16 %v2002
        %v2035 = vunpack.c.l.b16 %v2003
        %v2036 = vunpack.c.l.b16 %v2004
        %v2037 = vunpack.c.l.b16 %v2005
        %v2038 = vunpack.c.l.b16 %v2006
        %v2039 = vunpack.c.l.b16 %v2007
        %v2040 = vunpack.c.l.b16 %v2008
        %v2041 = vunpack.c.l.b16 %v2009
        %v2042 = vunpack.c.l.b16 %v2010
        %v2043 = vunpack.c.l.b16 %v2011
        %v2044 = vunpack.c.l.b16 %v2012
        %v2045 = vunpack.c.l.b16 %v2013
        %v2046 = vunpack.c.l.b16 %v2014
        %v2047 = vpack.c.b16 %v2032, %v2031
        %v2048 = vpack.c.b16 %v2034, %v2033
        %v2049 = vpack.c.b16 %v2036, %v2035
        %v2050 = vpack.c.b16 %v2038, %v2037
        %v2051 = vpack.c.b16 %v2040, %v2039
        %v2052 = vpack.c.b16 %v2042, %v2041
        %v2053 = vpack.c.b16 %v2044, %v2043
        %v2054 = vpack.c.b16 %v2046, %v2045
        %2063 = vmatprep.subr.bf16.mxu0 0
        %2064 = vmatpush1.bf16.msra.mxu0 %v2047
        %2065 = vmatprep.subr.bf16.mxu0 0
        %2066 = vmatpush1.bf16.msra.mxu0 %v2048
        %2067 = vmatprep.subr.bf16.mxu0 0
        %2068 = vmatpush1.bf16.msra.mxu0 %v2049
        %2069 = vmatprep.subr.bf16.mxu0 0
        %2070 = vmatpush1.bf16.msra.mxu0 %v2050
        %2071 = vmatprep.subr.bf16.mxu0 0
        %2072 = vmatpush1.bf16.msra.mxu0 %v2051
        %2073 = vmatprep.subr.bf16.mxu0 0
        %2074 = vmatpush1.bf16.msra.mxu0 %v2052
        %2075 = vmatprep.subr.bf16.mxu0 0
        %2076 = vmatpush1.bf16.msra.mxu0 %v2053
        %2077 = vmatprep.subr.bf16.mxu0 0
        %2078 = vmatpush1.bf16.msra.mxu0 %v2054
        %2079 = vmatprep.subr.bf16.mxu0 0
        %2080 = vmatpush1.bf16.msra.mxu0 0
        %2081 = vmatprep.subr.bf16.mxu0 0
        %2082 = vmatpush1.bf16.msra.mxu0 0
        %2083 = vmatprep.subr.bf16.mxu0 0
        %2084 = vmatpush1.bf16.msra.mxu0 0
        %2085 = vmatprep.subr.bf16.mxu0 0
        %2086 = vmatpush1.bf16.msra.mxu0 0
        %2087 = vmatprep.subr.bf16.mxu0 0
        %2088 = vmatpush1.bf16.msra.mxu0 0
        %2089 = vmatprep.subr.bf16.mxu0 0
        %2090 = vmatpush1.bf16.msra.mxu0 0
        %2091 = vmatprep.subr.bf16.mxu0 0
        %2092 = vmatpush1.bf16.msra.mxu0 0
        %2093 = vmatprep.subr.bf16.mxu0 0
        %2094 = vmatpush1.bf16.msra.mxu0 0
        %2095 = vmatprep.mubr.bf16.mxu0 0
        %2096 = vmatmul.mubr.bf16.gmra.mrb[0].mxu0 %v475
        %v2097 = vpop.f32.mrb[0].mxu0
        %v2098 = vadd.f32 0.0, %v2097
        %v2099 = vpop.f32.mrb[0].mxu0
        %v2100 = vpop.f32.mrb[0].mxu0
        %v2101 = vpop.f32.mrb[0].mxu0
        %2102 = vdwg.mxu0
        %v2103 = vmul.f32 %v2098, %v476
        %2104 = vadd.xlane.f32.xlu0 %v2103
        %v2105 = vpop.xlane.xlu0 %2104
        %s2106 = sadd.s32 %s478, 13
        %s2107 = scalar_lea.vmem [#allocation17], %s2106
        %v2108 = vld [vmem:[%s2107] sm:$0x1]
        %v2109 = vlaneseq
        %v2110 = vshrl.u32 %v2109, 7
        %v2111 = vsub.s32 0, %v2110
        %v2112 = vrot.slane %v2108, %v2111
        %v2113 = vmul.f32 %v2105, %v2112
        %v2114 = vadd.f32 %v1997, %v2113
        %s2115 = scalar_lea.vmem %s399, 896 [#allocation16]
        %v2116 = vld [vmem:[%s2115] sm:$0xf]
        %v2117 = vld [vmem:[%s2115 + $0x4] sm:$0xf]
        %v2118 = vld [vmem:[%s2115 + $0x8] sm:$0xf]
        %v2119 = vld [vmem:[%s2115 + $0xc] sm:$0xf]
        %v2120 = vld [vmem:[%s2115 + $0x10] sm:$0xf]
        %v2121 = vld [vmem:[%s2115 + $0x14] sm:$0xf]
        %v2122 = vld [vmem:[%s2115 + $0x18] sm:$0xf]
        %v2123 = vld [vmem:[%s2115 + $0x1c] sm:$0xf]
        %v2124 = vld [vmem:[%s2115 + $0x20] sm:$0xf]
        %v2125 = vld [vmem:[%s2115 + $0x24] sm:$0xf]
        %v2126 = vld [vmem:[%s2115 + $0x28] sm:$0xf]
        %v2127 = vld [vmem:[%s2115 + $0x2c] sm:$0xf]
        %v2128 = vld [vmem:[%s2115 + $0x30] sm:$0xf]
        %v2129 = vld [vmem:[%s2115 + $0x34] sm:$0xf]
        %v2130 = vld [vmem:[%s2115 + $0x38] sm:$0xf]
        %v2131 = vld [vmem:[%s2115 + $0x3c] sm:$0xf]
        %v2148 = vunpack.c.l.b16 %v2116
        %v2149 = vunpack.c.l.b16 %v2117
        %v2150 = vunpack.c.l.b16 %v2118
        %v2151 = vunpack.c.l.b16 %v2119
        %v2152 = vunpack.c.l.b16 %v2120
        %v2153 = vunpack.c.l.b16 %v2121
        %v2154 = vunpack.c.l.b16 %v2122
        %v2155 = vunpack.c.l.b16 %v2123
        %v2156 = vunpack.c.l.b16 %v2124
        %v2157 = vunpack.c.l.b16 %v2125
        %v2158 = vunpack.c.l.b16 %v2126
        %v2159 = vunpack.c.l.b16 %v2127
        %v2160 = vunpack.c.l.b16 %v2128
        %v2161 = vunpack.c.l.b16 %v2129
        %v2162 = vunpack.c.l.b16 %v2130
        %v2163 = vunpack.c.l.b16 %v2131
        %v2164 = vpack.c.b16 %v2149, %v2148
        %v2165 = vpack.c.b16 %v2151, %v2150
        %v2166 = vpack.c.b16 %v2153, %v2152
        %v2167 = vpack.c.b16 %v2155, %v2154
        %v2168 = vpack.c.b16 %v2157, %v2156
        %v2169 = vpack.c.b16 %v2159, %v2158
        %v2170 = vpack.c.b16 %v2161, %v2160
        %v2171 = vpack.c.b16 %v2163, %v2162
        %2180 = vmatprep.subr.bf16.mxu0 0
        %2181 = vmatpush1.bf16.msra.mxu0 %v2164
        %2182 = vmatprep.subr.bf16.mxu0 0
        %2183 = vmatpush1.bf16.msra.mxu0 %v2165
        %2184 = vmatprep.subr.bf16.mxu0 0
        %2185 = vmatpush1.bf16.msra.mxu0 %v2166
        %2186 = vmatprep.subr.bf16.mxu0 0
        %2187 = vmatpush1.bf16.msra.mxu0 %v2167
        %2188 = vmatprep.subr.bf16.mxu0 0
        %2189 = vmatpush1.bf16.msra.mxu0 %v2168
        %2190 = vmatprep.subr.bf16.mxu0 0
        %2191 = vmatpush1.bf16.msra.mxu0 %v2169
        %2192 = vmatprep.subr.bf16.mxu0 0
        %2193 = vmatpush1.bf16.msra.mxu0 %v2170
        %2194 = vmatprep.subr.bf16.mxu0 0
        %2195 = vmatpush1.bf16.msra.mxu0 %v2171
        %2196 = vmatprep.subr.bf16.mxu0 0
        %2197 = vmatpush1.bf16.msra.mxu0 0
        %2198 = vmatprep.subr.bf16.mxu0 0
        %2199 = vmatpush1.bf16.msra.mxu0 0
        %2200 = vmatprep.subr.bf16.mxu0 0
        %2201 = vmatpush1.bf16.msra.mxu0 0
        %2202 = vmatprep.subr.bf16.mxu0 0
        %2203 = vmatpush1.bf16.msra.mxu0 0
        %2204 = vmatprep.subr.bf16.mxu0 0
        %2205 = vmatpush1.bf16.msra.mxu0 0
        %2206 = vmatprep.subr.bf16.mxu0 0
        %2207 = vmatpush1.bf16.msra.mxu0 0
        %2208 = vmatprep.subr.bf16.mxu0 0
        %2209 = vmatpush1.bf16.msra.mxu0 0
        %2210 = vmatprep.subr.bf16.mxu0 0
        %2211 = vmatpush1.bf16.msra.mxu0 0
        %2212 = vmatprep.mubr.bf16.mxu0 0
        %2213 = vmatmul.mubr.bf16.gmra.mrb[0].mxu0 %v475
        %v2214 = vpop.f32.mrb[0].mxu0
        %v2215 = vadd.f32 0.0, %v2214
        %v2216 = vpop.f32.mrb[0].mxu0
        %v2217 = vpop.f32.mrb[0].mxu0
        %v2218 = vpop.f32.mrb[0].mxu0
        %2219 = vdwg.mxu0
        %v2220 = vmul.f32 %v2215, %v476
        %2221 = vadd.xlane.f32.xlu0 %v2220
        %v2222 = vpop.xlane.xlu0 %2221
        %s2223 = sadd.s32 %s478, 14
        %s2224 = scalar_lea.vmem [#allocation17], %s2223
        %v2225 = vld [vmem:[%s2224] sm:$0x1]
        %v2226 = vlaneseq
        %v2227 = vshrl.u32 %v2226, 7
        %v2228 = vsub.s32 0, %v2227
        %v2229 = vrot.slane %v2225, %v2228
        %v2230 = vmul.f32 %v2222, %v2229
        %v2231 = vadd.f32 %v2114, %v2230
        %s2232 = scalar_lea.vmem %s399, 960 [#allocation16]
        %v2233 = vld [vmem:[%s2232] sm:$0xf]
        %v2234 = vld [vmem:[%s2232 + $0x4] sm:$0xf]
        %v2235 = vld [vmem:[%s2232 + $0x8] sm:$0xf]
        %v2236 = vld [vmem:[%s2232 + $0xc] sm:$0xf]
        %v2237 = vld [vmem:[%s2232 + $0x10] sm:$0xf]
        %v2238 = vld [vmem:[%s2232 + $0x14] sm:$0xf]
        %v2239 = vld [vmem:[%s2232 + $0x18] sm:$0xf]
        %v2240 = vld [vmem:[%s2232 + $0x1c] sm:$0xf]
        %v2241 = vld [vmem:[%s2232 + $0x20] sm:$0xf]
        %v2242 = vld [vmem:[%s2232 + $0x24] sm:$0xf]
        %v2243 = vld [vmem:[%s2232 + $0x28] sm:$0xf]
        %v2244 = vld [vmem:[%s2232 + $0x2c] sm:$0xf]
        %v2245 = vld [vmem:[%s2232 + $0x30] sm:$0xf]
        %v2246 = vld [vmem:[%s2232 + $0x34] sm:$0xf]
        %v2247 = vld [vmem:[%s2232 + $0x38] sm:$0xf]
        %v2248 = vld [vmem:[%s2232 + $0x3c] sm:$0xf]
        %v2265 = vunpack.c.l.b16 %v2233
        %v2266 = vunpack.c.l.b16 %v2234
        %v2267 = vunpack.c.l.b16 %v2235
        %v2268 = vunpack.c.l.b16 %v2236
        %v2269 = vunpack.c.l.b16 %v2237
        %v2270 = vunpack.c.l.b16 %v2238
        %v2271 = vunpack.c.l.b16 %v2239
        %v2272 = vunpack.c.l.b16 %v2240
        %v2273 = vunpack.c.l.b16 %v2241
        %v2274 = vunpack.c.l.b16 %v2242
        %v2275 = vunpack.c.l.b16 %v2243
        %v2276 = vunpack.c.l.b16 %v2244
        %v2277 = vunpack.c.l.b16 %v2245
        %v2278 = vunpack.c.l.b16 %v2246
        %v2279 = vunpack.c.l.b16 %v2247
        %v2280 = vunpack.c.l.b16 %v2248
        %v2281 = vpack.c.b16 %v2266, %v2265
        %v2282 = vpack.c.b16 %v2268, %v2267
        %v2283 = vpack.c.b16 %v2270, %v2269
        %v2284 = vpack.c.b16 %v2272, %v2271
        %v2285 = vpack.c.b16 %v2274, %v2273
        %v2286 = vpack.c.b16 %v2276, %v2275
        %v2287 = vpack.c.b16 %v2278, %v2277
        %v2288 = vpack.c.b16 %v2280, %v2279
        %2297 = vmatprep.subr.bf16.mxu0 0
        %2298 = vmatpush1.bf16.msra.mxu0 %v2281
        %2299 = vmatprep.subr.bf16.mxu0 0
        %2300 = vmatpush1.bf16.msra.mxu0 %v2282
        %2301 = vmatprep.subr.bf16.mxu0 0
        %2302 = vmatpush1.bf16.msra.mxu0 %v2283
        %2303 = vmatprep.subr.bf16.mxu0 0
        %2304 = vmatpush1.bf16.msra.mxu0 %v2284
        %2305 = vmatprep.subr.bf16.mxu0 0
        %2306 = vmatpush1.bf16.msra.mxu0 %v2285
        %2307 = vmatprep.subr.bf16.mxu0 0
        %2308 = vmatpush1.bf16.msra.mxu0 %v2286
        %2309 = vmatprep.subr.bf16.mxu0 0
        %2310 = vmatpush1.bf16.msra.mxu0 %v2287
        %2311 = vmatprep.subr.bf16.mxu0 0
        %2312 = vmatpush1.bf16.msra.mxu0 %v2288
        %2313 = vmatprep.subr.bf16.mxu0 0
        %2314 = vmatpush1.bf16.msra.mxu0 0
        %2315 = vmatprep.subr.bf16.mxu0 0
        %2316 = vmatpush1.bf16.msra.mxu0 0
        %2317 = vmatprep.subr.bf16.mxu0 0
        %2318 = vmatpush1.bf16.msra.mxu0 0
        %2319 = vmatprep.subr.bf16.mxu0 0
        %2320 = vmatpush1.bf16.msra.mxu0 0
        %2321 = vmatprep.subr.bf16.mxu0 0
        %2322 = vmatpush1.bf16.msra.mxu0 0
        %2323 = vmatprep.subr.bf16.mxu0 0
        %2324 = vmatpush1.bf16.msra.mxu0 0
        %2325 = vmatprep.subr.bf16.mxu0 0
        %2326 = vmatpush1.bf16.msra.mxu0 0
        %2327 = vmatprep.subr.bf16.mxu0 0
        %2328 = vmatpush1.bf16.msra.mxu0 0
        %2329 = vmatprep.mubr.bf16.mxu0 0
        %2330 = vmatmul.mubr.bf16.gmra.mrb[0].mxu0 %v475
        %v2331 = vpop.f32.mrb[0].mxu0
        %v2332 = vadd.f32 0.0, %v2331
        %v2333 = vpop.f32.mrb[0].mxu0
        %v2334 = vpop.f32.mrb[0].mxu0
        %v2335 = vpop.f32.mrb[0].mxu0
        %2336 = vdwg.mxu0
        %v2337 = vmul.f32 %v2332, %v476
        %2338 = vadd.xlane.f32.xlu0 %v2337
        %v2339 = vpop.xlane.xlu0 %2338
        %s2340 = sadd.s32 %s478, 15
        %s2341 = scalar_lea.vmem [#allocation17], %s2340
        %v2342 = vld [vmem:[%s2341] sm:$0x1]
        %v2343 = vlaneseq
        %v2344 = vshrl.u32 %v2343, 7
        %v2345 = vsub.s32 0, %v2344
        %v2346 = vrot.slane %v2342, %v2345
        %v2347 = vmul.f32 %v2339, %v2346
        %v2348 = vadd.f32 %v2231, %v2347
        %s2349 = scalar_lea.vmem %s399, 1024 [#allocation16]
        %v2350 = vld [vmem:[%s2349] sm:$0xf]
        %v2351 = vld [vmem:[%s2349 + $0x4] sm:$0xf]
        %v2352 = vld [vmem:[%s2349 + $0x8] sm:$0xf]
        %v2353 = vld [vmem:[%s2349 + $0xc] sm:$0xf]
        %v2354 = vld [vmem:[%s2349 + $0x10] sm:$0xf]
        %v2355 = vld [vmem:[%s2349 + $0x14] sm:$0xf]
        %v2356 = vld [vmem:[%s2349 + $0x18] sm:$0xf]
        %v2357 = vld [vmem:[%s2349 + $0x1c] sm:$0xf]
        %v2358 = vld [vmem:[%s2349 + $0x20] sm:$0xf]
        %v2359 = vld [vmem:[%s2349 + $0x24] sm:$0xf]
        %v2360 = vld [vmem:[%s2349 + $0x28] sm:$0xf]
        %v2361 = vld [vmem:[%s2349 + $0x2c] sm:$0xf]
        %v2362 = vld [vmem:[%s2349 + $0x30] sm:$0xf]
        %v2363 = vld [vmem:[%s2349 + $0x34] sm:$0xf]
        %v2364 = vld [vmem:[%s2349 + $0x38] sm:$0xf]
        %v2365 = vld [vmem:[%s2349 + $0x3c] sm:$0xf]
        %v2382 = vunpack.c.l.b16 %v2350
        %v2383 = vunpack.c.l.b16 %v2351
        %v2384 = vunpack.c.l.b16 %v2352
        %v2385 = vunpack.c.l.b16 %v2353
        %v2386 = vunpack.c.l.b16 %v2354
        %v2387 = vunpack.c.l.b16 %v2355
        %v2388 = vunpack.c.l.b16 %v2356
        %v2389 = vunpack.c.l.b16 %v2357
        %v2390 = vunpack.c.l.b16 %v2358
        %v2391 = vunpack.c.l.b16 %v2359
        %v2392 = vunpack.c.l.b16 %v2360
        %v2393 = vunpack.c.l.b16 %v2361
        %v2394 = vunpack.c.l.b16 %v2362
        %v2395 = vunpack.c.l.b16 %v2363
        %v2396 = vunpack.c.l.b16 %v2364
        %v2397 = vunpack.c.l.b16 %v2365
        %v2398 = vpack.c.b16 %v2383, %v2382
        %v2399 = vpack.c.b16 %v2385, %v2384
        %v2400 = vpack.c.b16 %v2387, %v2386
        %v2401 = vpack.c.b16 %v2389, %v2388
        %v2402 = vpack.c.b16 %v2391, %v2390
        %v2403 = vpack.c.b16 %v2393, %v2392
        %v2404 = vpack.c.b16 %v2395, %v2394
        %v2405 = vpack.c.b16 %v2397, %v2396
        %2414 = vmatprep.subr.bf16.mxu0 0
        %2415 = vmatpush1.bf16.msra.mxu0 %v2398
        %2416 = vmatprep.subr.bf16.mxu0 0
        %2417 = vmatpush1.bf16.msra.mxu0 %v2399
        %2418 = vmatprep.subr.bf16.mxu0 0
        %2419 = vmatpush1.bf16.msra.mxu0 %v2400
        %2420 = vmatprep.subr.bf16.mxu0 0
        %2421 = vmatpush1.bf16.msra.mxu0 %v2401
        %2422 = vmatprep.subr.bf16.mxu0 0
        %2423 = vmatpush1.bf16.msra.mxu0 %v2402
        %2424 = vmatprep.subr.bf16.mxu0 0
        %2425 = vmatpush1.bf16.msra.mxu0 %v2403
        %2426 = vmatprep.subr.bf16.mxu0 0
        %2427 = vmatpush1.bf16.msra.mxu0 %v2404
        %2428 = vmatprep.subr.bf16.mxu0 0
        %2429 = vmatpush1.bf16.msra.mxu0 %v2405
        %2430 = vmatprep.subr.bf16.mxu0 0
        %2431 = vmatpush1.bf16.msra.mxu0 0
        %2432 = vmatprep.subr.bf16.mxu0 0
        %2433 = vmatpush1.bf16.msra.mxu0 0
        %2434 = vmatprep.subr.bf16.mxu0 0
        %2435 = vmatpush1.bf16.msra.mxu0 0
        %2436 = vmatprep.subr.bf16.mxu0 0
        %2437 = vmatpush1.bf16.msra.mxu0 0
        %2438 = vmatprep.subr.bf16.mxu0 0
        %2439 = vmatpush1.bf16.msra.mxu0 0
        %2440 = vmatprep.subr.bf16.mxu0 0
        %2441 = vmatpush1.bf16.msra.mxu0 0
        %2442 = vmatprep.subr.bf16.mxu0 0
        %2443 = vmatpush1.bf16.msra.mxu0 0
        %2444 = vmatprep.subr.bf16.mxu0 0
        %2445 = vmatpush1.bf16.msra.mxu0 0
        %2446 = vmatprep.mubr.bf16.mxu0 0
        %2447 = vmatmul.mubr.bf16.gmra.mrb[0].mxu0 %v475
        %v2448 = vpop.f32.mrb[0].mxu0
        %v2449 = vadd.f32 0.0, %v2448
        %v2450 = vpop.f32.mrb[0].mxu0
        %v2451 = vpop.f32.mrb[0].mxu0
        %v2452 = vpop.f32.mrb[0].mxu0
        %2453 = vdwg.mxu0
        %v2454 = vmul.f32 %v2449, %v476
        %2455 = vadd.xlane.f32.xlu0 %v2454
        %v2456 = vpop.xlane.xlu0 %2455
        %s2457 = sadd.s32 %s478, 16
        %s2458 = scalar_lea.vmem [#allocation17], %s2457
        %v2459 = vld [vmem:[%s2458] sm:$0x1]
        %v2460 = vlaneseq
        %v2461 = vshrl.u32 %v2460, 7
        %v2462 = vsub.s32 0, %v2461
        %v2463 = vrot.slane %v2459, %v2462
        %v2464 = vmul.f32 %v2456, %v2463
        %v2465 = vadd.f32 %v2348, %v2464
        %s2466 = scalar_lea.vmem %s399, 1088 [#allocation16]
        %v2467 = vld [vmem:[%s2466] sm:$0xf]
        %v2468 = vld [vmem:[%s2466 + $0x4] sm:$0xf]
        %v2469 = vld [vmem:[%s2466 + $0x8] sm:$0xf]
        %v2470 = vld [vmem:[%s2466 + $0xc] sm:$0xf]
        %v2471 = vld [vmem:[%s2466 + $0x10] sm:$0xf]
        %v2472 = vld [vmem:[%s2466 + $0x14] sm:$0xf]
        %v2473 = vld [vmem:[%s2466 + $0x18] sm:$0xf]
        %v2474 = vld [vmem:[%s2466 + $0x1c] sm:$0xf]
        %v2475 = vld [vmem:[%s2466 + $0x20] sm:$0xf]
        %v2476 = vld [vmem:[%s2466 + $0x24] sm:$0xf]
        %v2477 = vld [vmem:[%s2466 + $0x28] sm:$0xf]
        %v2478 = vld [vmem:[%s2466 + $0x2c] sm:$0xf]
        %v2479 = vld [vmem:[%s2466 + $0x30] sm:$0xf]
        %v2480 = vld [vmem:[%s2466 + $0x34] sm:$0xf]
        %v2481 = vld [vmem:[%s2466 + $0x38] sm:$0xf]
        %v2482 = vld [vmem:[%s2466 + $0x3c] sm:$0xf]
        %v2499 = vunpack.c.l.b16 %v2467
        %v2500 = vunpack.c.l.b16 %v2468
        %v2501 = vunpack.c.l.b16 %v2469
        %v2502 = vunpack.c.l.b16 %v2470
        %v2503 = vunpack.c.l.b16 %v2471
        %v2504 = vunpack.c.l.b16 %v2472
        %v2505 = vunpack.c.l.b16 %v2473
        %v2506 = vunpack.c.l.b16 %v2474
        %v2507 = vunpack.c.l.b16 %v2475
        %v2508 = vunpack.c.l.b16 %v2476
        %v2509 = vunpack.c.l.b16 %v2477
        %v2510 = vunpack.c.l.b16 %v2478
        %v2511 = vunpack.c.l.b16 %v2479
        %v2512 = vunpack.c.l.b16 %v2480
        %v2513 = vunpack.c.l.b16 %v2481
        %v2514 = vunpack.c.l.b16 %v2482
        %v2515 = vpack.c.b16 %v2500, %v2499
        %v2516 = vpack.c.b16 %v2502, %v2501
        %v2517 = vpack.c.b16 %v2504, %v2503
        %v2518 = vpack.c.b16 %v2506, %v2505
        %v2519 = vpack.c.b16 %v2508, %v2507
        %v2520 = vpack.c.b16 %v2510, %v2509
        %v2521 = vpack.c.b16 %v2512, %v2511
        %v2522 = vpack.c.b16 %v2514, %v2513
        %2531 = vmatprep.subr.bf16.mxu0 0
        %2532 = vmatpush1.bf16.msra.mxu0 %v2515
        %2533 = vmatprep.subr.bf16.mxu0 0
        %2534 = vmatpush1.bf16.msra.mxu0 %v2516
        %2535 = vmatprep.subr.bf16.mxu0 0
        %2536 = vmatpush1.bf16.msra.mxu0 %v2517
        %2537 = vmatprep.subr.bf16.mxu0 0
        %2538 = vmatpush1.bf16.msra.mxu0 %v2518
        %2539 = vmatprep.subr.bf16.mxu0 0
        %2540 = vmatpush1.bf16.msra.mxu0 %v2519
        %2541 = vmatprep.subr.bf16.mxu0 0
        %2542 = vmatpush1.bf16.msra.mxu0 %v2520
        %2543 = vmatprep.subr.bf16.mxu0 0
        %2544 = vmatpush1.bf16.msra.mxu0 %v2521
        %2545 = vmatprep.subr.bf16.mxu0 0
        %2546 = vmatpush1.bf16.msra.mxu0 %v2522
        %2547 = vmatprep.subr.bf16.mxu0 0
        %2548 = vmatpush1.bf16.msra.mxu0 0
        %2549 = vmatprep.subr.bf16.mxu0 0
        %2550 = vmatpush1.bf16.msra.mxu0 0
        %2551 = vmatprep.subr.bf16.mxu0 0
        %2552 = vmatpush1.bf16.msra.mxu0 0
        %2553 = vmatprep.subr.bf16.mxu0 0
        %2554 = vmatpush1.bf16.msra.mxu0 0
        %2555 = vmatprep.subr.bf16.mxu0 0
        %2556 = vmatpush1.bf16.msra.mxu0 0
        %2557 = vmatprep.subr.bf16.mxu0 0
        %2558 = vmatpush1.bf16.msra.mxu0 0
        %2559 = vmatprep.subr.bf16.mxu0 0
        %2560 = vmatpush1.bf16.msra.mxu0 0
        %2561 = vmatprep.subr.bf16.mxu0 0
        %2562 = vmatpush1.bf16.msra.mxu0 0
        %2563 = vmatprep.mubr.bf16.mxu0 0
        %2564 = vmatmul.mubr.bf16.gmra.mrb[0].mxu0 %v475
        %v2565 = vpop.f32.mrb[0].mxu0
        %v2566 = vadd.f32 0.0, %v2565
        %v2567 = vpop.f32.mrb[0].mxu0
        %v2568 = vpop.f32.mrb[0].mxu0
        %v2569 = vpop.f32.mrb[0].mxu0
        %2570 = vdwg.mxu0
        %v2571 = vmul.f32 %v2566, %v476
        %2572 = vadd.xlane.f32.xlu0 %v2571
        %v2573 = vpop.xlane.xlu0 %2572
        %s2574 = sadd.s32 %s478, 17
        %s2575 = scalar_lea.vmem [#allocation17], %s2574
        %v2576 = vld [vmem:[%s2575] sm:$0x1]
        %v2577 = vlaneseq
        %v2578 = vshrl.u32 %v2577, 7
        %v2579 = vsub.s32 0, %v2578
        %v2580 = vrot.slane %v2576, %v2579
        %v2581 = vmul.f32 %v2573, %v2580
        %v2582 = vadd.f32 %v2465, %v2581
        %s2583 = scalar_lea.vmem %s399, 1152 [#allocation16]
        %v2584 = vld [vmem:[%s2583] sm:$0xf]
        %v2585 = vld [vmem:[%s2583 + $0x4] sm:$0xf]
        %v2586 = vld [vmem:[%s2583 + $0x8] sm:$0xf]
        %v2587 = vld [vmem:[%s2583 + $0xc] sm:$0xf]
        %v2588 = vld [vmem:[%s2583 + $0x10] sm:$0xf]
        %v2589 = vld [vmem:[%s2583 + $0x14] sm:$0xf]
        %v2590 = vld [vmem:[%s2583 + $0x18] sm:$0xf]
        %v2591 = vld [vmem:[%s2583 + $0x1c] sm:$0xf]
        %v2592 = vld [vmem:[%s2583 + $0x20] sm:$0xf]
        %v2593 = vld [vmem:[%s2583 + $0x24] sm:$0xf]
        %v2594 = vld [vmem:[%s2583 + $0x28] sm:$0xf]
        %v2595 = vld [vmem:[%s2583 + $0x2c] sm:$0xf]
        %v2596 = vld [vmem:[%s2583 + $0x30] sm:$0xf]
        %v2597 = vld [vmem:[%s2583 + $0x34] sm:$0xf]
        %v2598 = vld [vmem:[%s2583 + $0x38] sm:$0xf]
        %v2599 = vld [vmem:[%s2583 + $0x3c] sm:$0xf]
        %v2616 = vunpack.c.l.b16 %v2584
        %v2617 = vunpack.c.l.b16 %v2585
        %v2618 = vunpack.c.l.b16 %v2586
        %v2619 = vunpack.c.l.b16 %v2587
        %v2620 = vunpack.c.l.b16 %v2588
        %v2621 = vunpack.c.l.b16 %v2589
        %v2622 = vunpack.c.l.b16 %v2590
        %v2623 = vunpack.c.l.b16 %v2591
        %v2624 = vunpack.c.l.b16 %v2592
        %v2625 = vunpack.c.l.b16 %v2593
        %v2626 = vunpack.c.l.b16 %v2594
        %v2627 = vunpack.c.l.b16 %v2595
        %v2628 = vunpack.c.l.b16 %v2596
        %v2629 = vunpack.c.l.b16 %v2597
        %v2630 = vunpack.c.l.b16 %v2598
        %v2631 = vunpack.c.l.b16 %v2599
        %v2632 = vpack.c.b16 %v2617, %v2616
        %v2633 = vpack.c.b16 %v2619, %v2618
        %v2634 = vpack.c.b16 %v2621, %v2620
        %v2635 = vpack.c.b16 %v2623, %v2622
        %v2636 = vpack.c.b16 %v2625, %v2624
        %v2637 = vpack.c.b16 %v2627, %v2626
        %v2638 = vpack.c.b16 %v2629, %v2628
        %v2639 = vpack.c.b16 %v2631, %v2630
        %2648 = vmatprep.subr.bf16.mxu0 0
        %2649 = vmatpush1.bf16.msra.mxu0 %v2632
        %2650 = vmatprep.subr.bf16.mxu0 0
        %2651 = vmatpush1.bf16.msra.mxu0 %v2633
        %2652 = vmatprep.subr.bf16.mxu0 0
        %2653 = vmatpush1.bf16.msra.mxu0 %v2634
        %2654 = vmatprep.subr.bf16.mxu0 0
        %2655 = vmatpush1.bf16.msra.mxu0 %v2635
        %2656 = vmatprep.subr.bf16.mxu0 0
        %2657 = vmatpush1.bf16.msra.mxu0 %v2636
        %2658 = vmatprep.subr.bf16.mxu0 0
        %2659 = vmatpush1.bf16.msra.mxu0 %v2637
        %2660 = vmatprep.subr.bf16.mxu0 0
        %2661 = vmatpush1.bf16.msra.mxu0 %v2638
        %2662 = vmatprep.subr.bf16.mxu0 0
        %2663 = vmatpush1.bf16.msra.mxu0 %v2639
        %2664 = vmatprep.subr.bf16.mxu0 0
        %2665 = vmatpush1.bf16.msra.mxu0 0
        %2666 = vmatprep.subr.bf16.mxu0 0
        %2667 = vmatpush1.bf16.msra.mxu0 0
        %2668 = vmatprep.subr.bf16.mxu0 0
        %2669 = vmatpush1.bf16.msra.mxu0 0
        %2670 = vmatprep.subr.bf16.mxu0 0
        %2671 = vmatpush1.bf16.msra.mxu0 0
        %2672 = vmatprep.subr.bf16.mxu0 0
        %2673 = vmatpush1.bf16.msra.mxu0 0
        %2674 = vmatprep.subr.bf16.mxu0 0
        %2675 = vmatpush1.bf16.msra.mxu0 0
        %2676 = vmatprep.subr.bf16.mxu0 0
        %2677 = vmatpush1.bf16.msra.mxu0 0
        %2678 = vmatprep.subr.bf16.mxu0 0
        %2679 = vmatpush1.bf16.msra.mxu0 0
        %2680 = vmatprep.mubr.bf16.mxu0 0
        %2681 = vmatmul.mubr.bf16.gmra.mrb[0].mxu0 %v475
        %v2682 = vpop.f32.mrb[0].mxu0
        %v2683 = vadd.f32 0.0, %v2682
        %v2684 = vpop.f32.mrb[0].mxu0
        %v2685 = vpop.f32.mrb[0].mxu0
        %v2686 = vpop.f32.mrb[0].mxu0
        %2687 = vdwg.mxu0
        %v2688 = vmul.f32 %v2683, %v476
        %2689 = vadd.xlane.f32.xlu0 %v2688
        %v2690 = vpop.xlane.xlu0 %2689
        %s2691 = sadd.s32 %s478, 18
        %s2692 = scalar_lea.vmem [#allocation17], %s2691
        %v2693 = vld [vmem:[%s2692] sm:$0x1]
        %v2694 = vlaneseq
        %v2695 = vshrl.u32 %v2694, 7
        %v2696 = vsub.s32 0, %v2695
        %v2697 = vrot.slane %v2693, %v2696
        %v2698 = vmul.f32 %v2690, %v2697
        %v2699 = vadd.f32 %v2582, %v2698
        %s2700 = scalar_lea.vmem %s399, 1216 [#allocation16]
        %v2701 = vld [vmem:[%s2700] sm:$0xf]
        %v2702 = vld [vmem:[%s2700 + $0x4] sm:$0xf]
        %v2703 = vld [vmem:[%s2700 + $0x8] sm:$0xf]
        %v2704 = vld [vmem:[%s2700 + $0xc] sm:$0xf]
        %v2705 = vld [vmem:[%s2700 + $0x10] sm:$0xf]
        %v2706 = vld [vmem:[%s2700 + $0x14] sm:$0xf]
        %v2707 = vld [vmem:[%s2700 + $0x18] sm:$0xf]
        %v2708 = vld [vmem:[%s2700 + $0x1c] sm:$0xf]
        %v2709 = vld [vmem:[%s2700 + $0x20] sm:$0xf]
        %v2710 = vld [vmem:[%s2700 + $0x24] sm:$0xf]
        %v2711 = vld [vmem:[%s2700 + $0x28] sm:$0xf]
        %v2712 = vld [vmem:[%s2700 + $0x2c] sm:$0xf]
        %v2713 = vld [vmem:[%s2700 + $0x30] sm:$0xf]
        %v2714 = vld [vmem:[%s2700 + $0x34] sm:$0xf]
        %v2715 = vld [vmem:[%s2700 + $0x38] sm:$0xf]
        %v2716 = vld [vmem:[%s2700 + $0x3c] sm:$0xf]
        %v2733 = vunpack.c.l.b16 %v2701
        %v2734 = vunpack.c.l.b16 %v2702
        %v2735 = vunpack.c.l.b16 %v2703
        %v2736 = vunpack.c.l.b16 %v2704
        %v2737 = vunpack.c.l.b16 %v2705
        %v2738 = vunpack.c.l.b16 %v2706
        %v2739 = vunpack.c.l.b16 %v2707
        %v2740 = vunpack.c.l.b16 %v2708
        %v2741 = vunpack.c.l.b16 %v2709
        %v2742 = vunpack.c.l.b16 %v2710
        %v2743 = vunpack.c.l.b16 %v2711
        %v2744 = vunpack.c.l.b16 %v2712
        %v2745 = vunpack.c.l.b16 %v2713
        %v2746 = vunpack.c.l.b16 %v2714
        %v2747 = vunpack.c.l.b16 %v2715
        %v2748 = vunpack.c.l.b16 %v2716
        %v2749 = vpack.c.b16 %v2734, %v2733
        %v2750 = vpack.c.b16 %v2736, %v2735
        %v2751 = vpack.c.b16 %v2738, %v2737
        %v2752 = vpack.c.b16 %v2740, %v2739
        %v2753 = vpack.c.b16 %v2742, %v2741
        %v2754 = vpack.c.b16 %v2744, %v2743
        %v2755 = vpack.c.b16 %v2746, %v2745
        %v2756 = vpack.c.b16 %v2748, %v2747
        %2765 = vmatprep.subr.bf16.mxu0 0
        %2766 = vmatpush1.bf16.msra.mxu0 %v2749
        %2767 = vmatprep.subr.bf16.mxu0 0
        %2768 = vmatpush1.bf16.msra.mxu0 %v2750
        %2769 = vmatprep.subr.bf16.mxu0 0
        %2770 = vmatpush1.bf16.msra.mxu0 %v2751
        %2771 = vmatprep.subr.bf16.mxu0 0
        %2772 = vmatpush1.bf16.msra.mxu0 %v2752
        %2773 = vmatprep.subr.bf16.mxu0 0
        %2774 = vmatpush1.bf16.msra.mxu0 %v2753
        %2775 = vmatprep.subr.bf16.mxu0 0
        %2776 = vmatpush1.bf16.msra.mxu0 %v2754
        %2777 = vmatprep.subr.bf16.mxu0 0
        %2778 = vmatpush1.bf16.msra.mxu0 %v2755
        %2779 = vmatprep.subr.bf16.mxu0 0
        %2780 = vmatpush1.bf16.msra.mxu0 %v2756
        %2781 = vmatprep.subr.bf16.mxu0 0
        %2782 = vmatpush1.bf16.msra.mxu0 0
        %2783 = vmatprep.subr.bf16.mxu0 0
        %2784 = vmatpush1.bf16.msra.mxu0 0
        %2785 = vmatprep.subr.bf16.mxu0 0
        %2786 = vmatpush1.bf16.msra.mxu0 0
        %2787 = vmatprep.subr.bf16.mxu0 0
        %2788 = vmatpush1.bf16.msra.mxu0 0
        %2789 = vmatprep.subr.bf16.mxu0 0
        %2790 = vmatpush1.bf16.msra.mxu0 0
        %2791 = vmatprep.subr.bf16.mxu0 0
        %2792 = vmatpush1.bf16.msra.mxu0 0
        %2793 = vmatprep.subr.bf16.mxu0 0
        %2794 = vmatpush1.bf16.msra.mxu0 0
        %2795 = vmatprep.subr.bf16.mxu0 0
        %2796 = vmatpush1.bf16.msra.mxu0 0
        %2797 = vmatprep.mubr.bf16.mxu0 0
        %2798 = vmatmul.mubr.bf16.gmra.mrb[0].mxu0 %v475
        %v2799 = vpop.f32.mrb[0].mxu0
        %v2800 = vadd.f32 0.0, %v2799
        %v2801 = vpop.f32.mrb[0].mxu0
        %v2802 = vpop.f32.mrb[0].mxu0
        %v2803 = vpop.f32.mrb[0].mxu0
        %2804 = vdwg.mxu0
        %v2805 = vmul.f32 %v2800, %v476
        %2806 = vadd.xlane.f32.xlu0 %v2805
        %v2807 = vpop.xlane.xlu0 %2806
        %s2808 = sadd.s32 %s478, 19
        %s2809 = scalar_lea.vmem [#allocation17], %s2808
        %v2810 = vld [vmem:[%s2809] sm:$0x1]
        %v2811 = vlaneseq
        %v2812 = vshrl.u32 %v2811, 7
        %v2813 = vsub.s32 0, %v2812
        %v2814 = vrot.slane %v2810, %v2813
        %v2815 = vmul.f32 %v2807, %v2814
        %v2816 = vadd.f32 %v2699, %v2815
        %s2817 = scalar_lea.vmem %s399, 1280 [#allocation16]
        %v2818 = vld [vmem:[%s2817] sm:$0xf]
        %v2819 = vld [vmem:[%s2817 + $0x4] sm:$0xf]
        %v2820 = vld [vmem:[%s2817 + $0x8] sm:$0xf]
        %v2821 = vld [vmem:[%s2817 + $0xc] sm:$0xf]
        %v2822 = vld [vmem:[%s2817 + $0x10] sm:$0xf]
        %v2823 = vld [vmem:[%s2817 + $0x14] sm:$0xf]
        %v2824 = vld [vmem:[%s2817 + $0x18] sm:$0xf]
        %v2825 = vld [vmem:[%s2817 + $0x1c] sm:$0xf]
        %v2826 = vld [vmem:[%s2817 + $0x20] sm:$0xf]
        %v2827 = vld [vmem:[%s2817 + $0x24] sm:$0xf]
        %v2828 = vld [vmem:[%s2817 + $0x28] sm:$0xf]
        %v2829 = vld [vmem:[%s2817 + $0x2c] sm:$0xf]
        %v2830 = vld [vmem:[%s2817 + $0x30] sm:$0xf]
        %v2831 = vld [vmem:[%s2817 + $0x34] sm:$0xf]
        %v2832 = vld [vmem:[%s2817 + $0x38] sm:$0xf]
        %v2833 = vld [vmem:[%s2817 + $0x3c] sm:$0xf]
        %v2850 = vunpack.c.l.b16 %v2818
        %v2851 = vunpack.c.l.b16 %v2819
        %v2852 = vunpack.c.l.b16 %v2820
        %v2853 = vunpack.c.l.b16 %v2821
        %v2854 = vunpack.c.l.b16 %v2822
        %v2855 = vunpack.c.l.b16 %v2823
        %v2856 = vunpack.c.l.b16 %v2824
        %v2857 = vunpack.c.l.b16 %v2825
        %v2858 = vunpack.c.l.b16 %v2826
        %v2859 = vunpack.c.l.b16 %v2827
        %v2860 = vunpack.c.l.b16 %v2828
        %v2861 = vunpack.c.l.b16 %v2829
        %v2862 = vunpack.c.l.b16 %v2830
        %v2863 = vunpack.c.l.b16 %v2831
        %v2864 = vunpack.c.l.b16 %v2832
        %v2865 = vunpack.c.l.b16 %v2833
        %v2866 = vpack.c.b16 %v2851, %v2850
        %v2867 = vpack.c.b16 %v2853, %v2852
        %v2868 = vpack.c.b16 %v2855, %v2854
        %v2869 = vpack.c.b16 %v2857, %v2856
        %v2870 = vpack.c.b16 %v2859, %v2858
        %v2871 = vpack.c.b16 %v2861, %v2860
        %v2872 = vpack.c.b16 %v2863, %v2862
        %v2873 = vpack.c.b16 %v2865, %v2864
        %2882 = vmatprep.subr.bf16.mxu0 0
        %2883 = vmatpush1.bf16.msra.mxu0 %v2866
        %2884 = vmatprep.subr.bf16.mxu0 0
        %2885 = vmatpush1.bf16.msra.mxu0 %v2867
        %2886 = vmatprep.subr.bf16.mxu0 0
        %2887 = vmatpush1.bf16.msra.mxu0 %v2868
        %2888 = vmatprep.subr.bf16.mxu0 0
        %2889 = vmatpush1.bf16.msra.mxu0 %v2869
        %2890 = vmatprep.subr.bf16.mxu0 0
        %2891 = vmatpush1.bf16.msra.mxu0 %v2870
        %2892 = vmatprep.subr.bf16.mxu0 0
        %2893 = vmatpush1.bf16.msra.mxu0 %v2871
        %2894 = vmatprep.subr.bf16.mxu0 0
        %2895 = vmatpush1.bf16.msra.mxu0 %v2872
        %2896 = vmatprep.subr.bf16.mxu0 0
        %2897 = vmatpush1.bf16.msra.mxu0 %v2873
        %2898 = vmatprep.subr.bf16.mxu0 0
        %2899 = vmatpush1.bf16.msra.mxu0 0
        %2900 = vmatprep.subr.bf16.mxu0 0
        %2901 = vmatpush1.bf16.msra.mxu0 0
        %2902 = vmatprep.subr.bf16.mxu0 0
        %2903 = vmatpush1.bf16.msra.mxu0 0
        %2904 = vmatprep.subr.bf16.mxu0 0
        %2905 = vmatpush1.bf16.msra.mxu0 0
        %2906 = vmatprep.subr.bf16.mxu0 0
        %2907 = vmatpush1.bf16.msra.mxu0 0
        %2908 = vmatprep.subr.bf16.mxu0 0
        %2909 = vmatpush1.bf16.msra.mxu0 0
        %2910 = vmatprep.subr.bf16.mxu0 0
        %2911 = vmatpush1.bf16.msra.mxu0 0
        %2912 = vmatprep.subr.bf16.mxu0 0
        %2913 = vmatpush1.bf16.msra.mxu0 0
        %2914 = vmatprep.mubr.bf16.mxu0 0
        %2915 = vmatmul.mubr.bf16.gmra.mrb[0].mxu0 %v475
        %v2916 = vpop.f32.mrb[0].mxu0
        %v2917 = vadd.f32 0.0, %v2916
        %v2918 = vpop.f32.mrb[0].mxu0
        %v2919 = vpop.f32.mrb[0].mxu0
        %v2920 = vpop.f32.mrb[0].mxu0
        %2921 = vdwg.mxu0
        %v2922 = vmul.f32 %v2917, %v476
        %2923 = vadd.xlane.f32.xlu0 %v2922
        %v2924 = vpop.xlane.xlu0 %2923
        %s2925 = sadd.s32 %s478, 20
        %s2926 = scalar_lea.vmem [#allocation17], %s2925
        %v2927 = vld [vmem:[%s2926] sm:$0x1]
        %v2928 = vlaneseq
        %v2929 = vshrl.u32 %v2928, 7
        %v2930 = vsub.s32 0, %v2929
        %v2931 = vrot.slane %v2927, %v2930
        %v2932 = vmul.f32 %v2924, %v2931
        %v2933 = vadd.f32 %v2816, %v2932
        %s2934 = scalar_lea.vmem %s399, 1344 [#allocation16]
        %v2935 = vld [vmem:[%s2934] sm:$0xf]
        %v2936 = vld [vmem:[%s2934 + $0x4] sm:$0xf]
        %v2937 = vld [vmem:[%s2934 + $0x8] sm:$0xf]
        %v2938 = vld [vmem:[%s2934 + $0xc] sm:$0xf]
        %v2939 = vld [vmem:[%s2934 + $0x10] sm:$0xf]
        %v2940 = vld [vmem:[%s2934 + $0x14] sm:$0xf]
        %v2941 = vld [vmem:[%s2934 + $0x18] sm:$0xf]
        %v2942 = vld [vmem:[%s2934 + $0x1c] sm:$0xf]
        %v2943 = vld [vmem:[%s2934 + $0x20] sm:$0xf]
        %v2944 = vld [vmem:[%s2934 + $0x24] sm:$0xf]
        %v2945 = vld [vmem:[%s2934 + $0x28] sm:$0xf]
        %v2946 = vld [vmem:[%s2934 + $0x2c] sm:$0xf]
        %v2947 = vld [vmem:[%s2934 + $0x30] sm:$0xf]
        %v2948 = vld [vmem:[%s2934 + $0x34] sm:$0xf]
        %v2949 = vld [vmem:[%s2934 + $0x38] sm:$0xf]
        %v2950 = vld [vmem:[%s2934 + $0x3c] sm:$0xf]
        %v2967 = vunpack.c.l.b16 %v2935
        %v2968 = vunpack.c.l.b16 %v2936
        %v2969 = vunpack.c.l.b16 %v2937
        %v2970 = vunpack.c.l.b16 %v2938
        %v2971 = vunpack.c.l.b16 %v2939
        %v2972 = vunpack.c.l.b16 %v2940
        %v2973 = vunpack.c.l.b16 %v2941
        %v2974 = vunpack.c.l.b16 %v2942
        %v2975 = vunpack.c.l.b16 %v2943
        %v2976 = vunpack.c.l.b16 %v2944
        %v2977 = vunpack.c.l.b16 %v2945
        %v2978 = vunpack.c.l.b16 %v2946
        %v2979 = vunpack.c.l.b16 %v2947
        %v2980 = vunpack.c.l.b16 %v2948
        %v2981 = vunpack.c.l.b16 %v2949
        %v2982 = vunpack.c.l.b16 %v2950
        %v2983 = vpack.c.b16 %v2968, %v2967
        %v2984 = vpack.c.b16 %v2970, %v2969
        %v2985 = vpack.c.b16 %v2972, %v2971
        %v2986 = vpack.c.b16 %v2974, %v2973
        %v2987 = vpack.c.b16 %v2976, %v2975
        %v2988 = vpack.c.b16 %v2978, %v2977
        %v2989 = vpack.c.b16 %v2980, %v2979
        %v2990 = vpack.c.b16 %v2982, %v2981
        %2999 = vmatprep.subr.bf16.mxu0 0
        %3000 = vmatpush1.bf16.msra.mxu0 %v2983
        %3001 = vmatprep.subr.bf16.mxu0 0
        %3002 = vmatpush1.bf16.msra.mxu0 %v2984
        %3003 = vmatprep.subr.bf16.mxu0 0
        %3004 = vmatpush1.bf16.msra.mxu0 %v2985
        %3005 = vmatprep.subr.bf16.mxu0 0
        %3006 = vmatpush1.bf16.msra.mxu0 %v2986
        %3007 = vmatprep.subr.bf16.mxu0 0
        %3008 = vmatpush1.bf16.msra.mxu0 %v2987
        %3009 = vmatprep.subr.bf16.mxu0 0
        %3010 = vmatpush1.bf16.msra.mxu0 %v2988
        %3011 = vmatprep.subr.bf16.mxu0 0
        %3012 = vmatpush1.bf16.msra.mxu0 %v2989
        %3013 = vmatprep.subr.bf16.mxu0 0
        %3014 = vmatpush1.bf16.msra.mxu0 %v2990
        %3015 = vmatprep.subr.bf16.mxu0 0
        %3016 = vmatpush1.bf16.msra.mxu0 0
        %3017 = vmatprep.subr.bf16.mxu0 0
        %3018 = vmatpush1.bf16.msra.mxu0 0
        %3019 = vmatprep.subr.bf16.mxu0 0
        %3020 = vmatpush1.bf16.msra.mxu0 0
        %3021 = vmatprep.subr.bf16.mxu0 0
        %3022 = vmatpush1.bf16.msra.mxu0 0
        %3023 = vmatprep.subr.bf16.mxu0 0
        %3024 = vmatpush1.bf16.msra.mxu0 0
        %3025 = vmatprep.subr.bf16.mxu0 0
        %3026 = vmatpush1.bf16.msra.mxu0 0
        %3027 = vmatprep.subr.bf16.mxu0 0
        %3028 = vmatpush1.bf16.msra.mxu0 0
        %3029 = vmatprep.subr.bf16.mxu0 0
        %3030 = vmatpush1.bf16.msra.mxu0 0
        %3031 = vmatprep.mubr.bf16.mxu0 0
        %3032 = vmatmul.mubr.bf16.gmra.mrb[0].mxu0 %v475
        %v3033 = vpop.f32.mrb[0].mxu0
        %v3034 = vadd.f32 0.0, %v3033
        %v3035 = vpop.f32.mrb[0].mxu0
        %v3036 = vpop.f32.mrb[0].mxu0
        %v3037 = vpop.f32.mrb[0].mxu0
        %3038 = vdwg.mxu0
        %v3039 = vmul.f32 %v3034, %v476
        %3040 = vadd.xlane.f32.xlu0 %v3039
        %v3041 = vpop.xlane.xlu0 %3040
        %s3042 = sadd.s32 %s478, 21
        %s3043 = scalar_lea.vmem [#allocation17], %s3042
        %v3044 = vld [vmem:[%s3043] sm:$0x1]
        %v3045 = vlaneseq
        %v3046 = vshrl.u32 %v3045, 7
        %v3047 = vsub.s32 0, %v3046
        %v3048 = vrot.slane %v3044, %v3047
        %v3049 = vmul.f32 %v3041, %v3048
        %v3050 = vadd.f32 %v2933, %v3049
        %s3051 = scalar_lea.vmem %s399, 1408 [#allocation16]
        %v3052 = vld [vmem:[%s3051] sm:$0xf]
        %v3053 = vld [vmem:[%s3051 + $0x4] sm:$0xf]
        %v3054 = vld [vmem:[%s3051 + $0x8] sm:$0xf]
        %v3055 = vld [vmem:[%s3051 + $0xc] sm:$0xf]
        %v3056 = vld [vmem:[%s3051 + $0x10] sm:$0xf]
        %v3057 = vld [vmem:[%s3051 + $0x14] sm:$0xf]
        %v3058 = vld [vmem:[%s3051 + $0x18] sm:$0xf]
        %v3059 = vld [vmem:[%s3051 + $0x1c] sm:$0xf]
        %v3060 = vld [vmem:[%s3051 + $0x20] sm:$0xf]
        %v3061 = vld [vmem:[%s3051 + $0x24] sm:$0xf]
        %v3062 = vld [vmem:[%s3051 + $0x28] sm:$0xf]
        %v3063 = vld [vmem:[%s3051 + $0x2c] sm:$0xf]
        %v3064 = vld [vmem:[%s3051 + $0x30] sm:$0xf]
        %v3065 = vld [vmem:[%s3051 + $0x34] sm:$0xf]
        %v3066 = vld [vmem:[%s3051 + $0x38] sm:$0xf]
        %v3067 = vld [vmem:[%s3051 + $0x3c] sm:$0xf]
        %v3084 = vunpack.c.l.b16 %v3052
        %v3085 = vunpack.c.l.b16 %v3053
        %v3086 = vunpack.c.l.b16 %v3054
        %v3087 = vunpack.c.l.b16 %v3055
        %v3088 = vunpack.c.l.b16 %v3056
        %v3089 = vunpack.c.l.b16 %v3057
        %v3090 = vunpack.c.l.b16 %v3058
        %v3091 = vunpack.c.l.b16 %v3059
        %v3092 = vunpack.c.l.b16 %v3060
        %v3093 = vunpack.c.l.b16 %v3061
        %v3094 = vunpack.c.l.b16 %v3062
        %v3095 = vunpack.c.l.b16 %v3063
        %v3096 = vunpack.c.l.b16 %v3064
        %v3097 = vunpack.c.l.b16 %v3065
        %v3098 = vunpack.c.l.b16 %v3066
        %v3099 = vunpack.c.l.b16 %v3067
        %v3100 = vpack.c.b16 %v3085, %v3084
        %v3101 = vpack.c.b16 %v3087, %v3086
        %v3102 = vpack.c.b16 %v3089, %v3088
        %v3103 = vpack.c.b16 %v3091, %v3090
        %v3104 = vpack.c.b16 %v3093, %v3092
        %v3105 = vpack.c.b16 %v3095, %v3094
        %v3106 = vpack.c.b16 %v3097, %v3096
        %v3107 = vpack.c.b16 %v3099, %v3098
        %3116 = vmatprep.subr.bf16.mxu0 0
        %3117 = vmatpush1.bf16.msra.mxu0 %v3100
        %3118 = vmatprep.subr.bf16.mxu0 0
        %3119 = vmatpush1.bf16.msra.mxu0 %v3101
        %3120 = vmatprep.subr.bf16.mxu0 0
        %3121 = vmatpush1.bf16.msra.mxu0 %v3102
        %3122 = vmatprep.subr.bf16.mxu0 0
        %3123 = vmatpush1.bf16.msra.mxu0 %v3103
        %3124 = vmatprep.subr.bf16.mxu0 0
        %3125 = vmatpush1.bf16.msra.mxu0 %v3104
        %3126 = vmatprep.subr.bf16.mxu0 0
        %3127 = vmatpush1.bf16.msra.mxu0 %v3105
        %3128 = vmatprep.subr.bf16.mxu0 0
        %3129 = vmatpush1.bf16.msra.mxu0 %v3106
        %3130 = vmatprep.subr.bf16.mxu0 0
        %3131 = vmatpush1.bf16.msra.mxu0 %v3107
        %3132 = vmatprep.subr.bf16.mxu0 0
        %3133 = vmatpush1.bf16.msra.mxu0 0
        %3134 = vmatprep.subr.bf16.mxu0 0
        %3135 = vmatpush1.bf16.msra.mxu0 0
        %3136 = vmatprep.subr.bf16.mxu0 0
        %3137 = vmatpush1.bf16.msra.mxu0 0
        %3138 = vmatprep.subr.bf16.mxu0 0
        %3139 = vmatpush1.bf16.msra.mxu0 0
        %3140 = vmatprep.subr.bf16.mxu0 0
        %3141 = vmatpush1.bf16.msra.mxu0 0
        %3142 = vmatprep.subr.bf16.mxu0 0
        %3143 = vmatpush1.bf16.msra.mxu0 0
        %3144 = vmatprep.subr.bf16.mxu0 0
        %3145 = vmatpush1.bf16.msra.mxu0 0
        %3146 = vmatprep.subr.bf16.mxu0 0
        %3147 = vmatpush1.bf16.msra.mxu0 0
        %3148 = vmatprep.mubr.bf16.mxu0 0
        %3149 = vmatmul.mubr.bf16.gmra.mrb[0].mxu0 %v475
        %v3150 = vpop.f32.mrb[0].mxu0
        %v3151 = vadd.f32 0.0, %v3150
        %v3152 = vpop.f32.mrb[0].mxu0
        %v3153 = vpop.f32.mrb[0].mxu0
        %v3154 = vpop.f32.mrb[0].mxu0
        %3155 = vdwg.mxu0
        %v3156 = vmul.f32 %v3151, %v476
        %3157 = vadd.xlane.f32.xlu0 %v3156
        %v3158 = vpop.xlane.xlu0 %3157
        %s3159 = sadd.s32 %s478, 22
        %s3160 = scalar_lea.vmem [#allocation17], %s3159
        %v3161 = vld [vmem:[%s3160] sm:$0x1]
        %v3162 = vlaneseq
        %v3163 = vshrl.u32 %v3162, 7
        %v3164 = vsub.s32 0, %v3163
        %v3165 = vrot.slane %v3161, %v3164
        %v3166 = vmul.f32 %v3158, %v3165
        %v3167 = vadd.f32 %v3050, %v3166
        %s3168 = scalar_lea.vmem %s399, 1472 [#allocation16]
        %v3169 = vld [vmem:[%s3168] sm:$0xf]
        %v3170 = vld [vmem:[%s3168 + $0x4] sm:$0xf]
        %v3171 = vld [vmem:[%s3168 + $0x8] sm:$0xf]
        %v3172 = vld [vmem:[%s3168 + $0xc] sm:$0xf]
        %v3173 = vld [vmem:[%s3168 + $0x10] sm:$0xf]
        %v3174 = vld [vmem:[%s3168 + $0x14] sm:$0xf]
        %v3175 = vld [vmem:[%s3168 + $0x18] sm:$0xf]
        %v3176 = vld [vmem:[%s3168 + $0x1c] sm:$0xf]
        %v3177 = vld [vmem:[%s3168 + $0x20] sm:$0xf]
        %v3178 = vld [vmem:[%s3168 + $0x24] sm:$0xf]
        %v3179 = vld [vmem:[%s3168 + $0x28] sm:$0xf]
        %v3180 = vld [vmem:[%s3168 + $0x2c] sm:$0xf]
        %v3181 = vld [vmem:[%s3168 + $0x30] sm:$0xf]
        %v3182 = vld [vmem:[%s3168 + $0x34] sm:$0xf]
        %v3183 = vld [vmem:[%s3168 + $0x38] sm:$0xf]
        %v3184 = vld [vmem:[%s3168 + $0x3c] sm:$0xf]
        %v3201 = vunpack.c.l.b16 %v3169
        %v3202 = vunpack.c.l.b16 %v3170
        %v3203 = vunpack.c.l.b16 %v3171
        %v3204 = vunpack.c.l.b16 %v3172
        %v3205 = vunpack.c.l.b16 %v3173
        %v3206 = vunpack.c.l.b16 %v3174
        %v3207 = vunpack.c.l.b16 %v3175
        %v3208 = vunpack.c.l.b16 %v3176
        %v3209 = vunpack.c.l.b16 %v3177
        %v3210 = vunpack.c.l.b16 %v3178
        %v3211 = vunpack.c.l.b16 %v3179
        %v3212 = vunpack.c.l.b16 %v3180
        %v3213 = vunpack.c.l.b16 %v3181
        %v3214 = vunpack.c.l.b16 %v3182
        %v3215 = vunpack.c.l.b16 %v3183
        %v3216 = vunpack.c.l.b16 %v3184
        %v3217 = vpack.c.b16 %v3202, %v3201
        %v3218 = vpack.c.b16 %v3204, %v3203
        %v3219 = vpack.c.b16 %v3206, %v3205
        %v3220 = vpack.c.b16 %v3208, %v3207
        %v3221 = vpack.c.b16 %v3210, %v3209
        %v3222 = vpack.c.b16 %v3212, %v3211
        %v3223 = vpack.c.b16 %v3214, %v3213
        %v3224 = vpack.c.b16 %v3216, %v3215
        %3233 = vmatprep.subr.bf16.mxu0 0
        %3234 = vmatpush1.bf16.msra.mxu0 %v3217
        %3235 = vmatprep.subr.bf16.mxu0 0
        %3236 = vmatpush1.bf16.msra.mxu0 %v3218
        %3237 = vmatprep.subr.bf16.mxu0 0
        %3238 = vmatpush1.bf16.msra.mxu0 %v3219
        %3239 = vmatprep.subr.bf16.mxu0 0
        %3240 = vmatpush1.bf16.msra.mxu0 %v3220
        %3241 = vmatprep.subr.bf16.mxu0 0
        %3242 = vmatpush1.bf16.msra.mxu0 %v3221
        %3243 = vmatprep.subr.bf16.mxu0 0
        %3244 = vmatpush1.bf16.msra.mxu0 %v3222
        %3245 = vmatprep.subr.bf16.mxu0 0
        %3246 = vmatpush1.bf16.msra.mxu0 %v3223
        %3247 = vmatprep.subr.bf16.mxu0 0
        %3248 = vmatpush1.bf16.msra.mxu0 %v3224
        %3249 = vmatprep.subr.bf16.mxu0 0
        %3250 = vmatpush1.bf16.msra.mxu0 0
        %3251 = vmatprep.subr.bf16.mxu0 0
        %3252 = vmatpush1.bf16.msra.mxu0 0
        %3253 = vmatprep.subr.bf16.mxu0 0
        %3254 = vmatpush1.bf16.msra.mxu0 0
        %3255 = vmatprep.subr.bf16.mxu0 0
        %3256 = vmatpush1.bf16.msra.mxu0 0
        %3257 = vmatprep.subr.bf16.mxu0 0
        %3258 = vmatpush1.bf16.msra.mxu0 0
        %3259 = vmatprep.subr.bf16.mxu0 0
        %3260 = vmatpush1.bf16.msra.mxu0 0
        %3261 = vmatprep.subr.bf16.mxu0 0
        %3262 = vmatpush1.bf16.msra.mxu0 0
        %3263 = vmatprep.subr.bf16.mxu0 0
        %3264 = vmatpush1.bf16.msra.mxu0 0
        %3265 = vmatprep.mubr.bf16.mxu0 0
        %3266 = vmatmul.mubr.bf16.gmra.mrb[0].mxu0 %v475
        %v3267 = vpop.f32.mrb[0].mxu0
        %v3268 = vadd.f32 0.0, %v3267
        %v3269 = vpop.f32.mrb[0].mxu0
        %v3270 = vpop.f32.mrb[0].mxu0
        %v3271 = vpop.f32.mrb[0].mxu0
        %3272 = vdwg.mxu0
        %v3273 = vmul.f32 %v3268, %v476
        %3274 = vadd.xlane.f32.xlu0 %v3273
        %v3275 = vpop.xlane.xlu0 %3274
        %s3276 = sadd.s32 %s478, 23
        %s3277 = scalar_lea.vmem [#allocation17], %s3276
        %v3278 = vld [vmem:[%s3277] sm:$0x1]
        %v3279 = vlaneseq
        %v3280 = vshrl.u32 %v3279, 7
        %v3281 = vsub.s32 0, %v3280
        %v3282 = vrot.slane %v3278, %v3281
        %v3283 = vmul.f32 %v3275, %v3282
        %v3284 = vadd.f32 %v3167, %v3283
        %s3285 = scalar_lea.vmem %s399, 1536 [#allocation16]
        %v3286 = vld [vmem:[%s3285] sm:$0xf]
        %v3287 = vld [vmem:[%s3285 + $0x4] sm:$0xf]
        %v3288 = vld [vmem:[%s3285 + $0x8] sm:$0xf]
        %v3289 = vld [vmem:[%s3285 + $0xc] sm:$0xf]
        %v3290 = vld [vmem:[%s3285 + $0x10] sm:$0xf]
        %v3291 = vld [vmem:[%s3285 + $0x14] sm:$0xf]
        %v3292 = vld [vmem:[%s3285 + $0x18] sm:$0xf]
        %v3293 = vld [vmem:[%s3285 + $0x1c] sm:$0xf]
        %v3294 = vld [vmem:[%s3285 + $0x20] sm:$0xf]
        %v3295 = vld [vmem:[%s3285 + $0x24] sm:$0xf]
        %v3296 = vld [vmem:[%s3285 + $0x28] sm:$0xf]
        %v3297 = vld [vmem:[%s3285 + $0x2c] sm:$0xf]
        %v3298 = vld [vmem:[%s3285 + $0x30] sm:$0xf]
        %v3299 = vld [vmem:[%s3285 + $0x34] sm:$0xf]
        %v3300 = vld [vmem:[%s3285 + $0x38] sm:$0xf]
        %v3301 = vld [vmem:[%s3285 + $0x3c] sm:$0xf]
        %v3318 = vunpack.c.l.b16 %v3286
        %v3319 = vunpack.c.l.b16 %v3287
        %v3320 = vunpack.c.l.b16 %v3288
        %v3321 = vunpack.c.l.b16 %v3289
        %v3322 = vunpack.c.l.b16 %v3290
        %v3323 = vunpack.c.l.b16 %v3291
        %v3324 = vunpack.c.l.b16 %v3292
        %v3325 = vunpack.c.l.b16 %v3293
        %v3326 = vunpack.c.l.b16 %v3294
        %v3327 = vunpack.c.l.b16 %v3295
        %v3328 = vunpack.c.l.b16 %v3296
        %v3329 = vunpack.c.l.b16 %v3297
        %v3330 = vunpack.c.l.b16 %v3298
        %v3331 = vunpack.c.l.b16 %v3299
        %v3332 = vunpack.c.l.b16 %v3300
        %v3333 = vunpack.c.l.b16 %v3301
        %v3334 = vpack.c.b16 %v3319, %v3318
        %v3335 = vpack.c.b16 %v3321, %v3320
        %v3336 = vpack.c.b16 %v3323, %v3322
        %v3337 = vpack.c.b16 %v3325, %v3324
        %v3338 = vpack.c.b16 %v3327, %v3326
        %v3339 = vpack.c.b16 %v3329, %v3328
        %v3340 = vpack.c.b16 %v3331, %v3330
        %v3341 = vpack.c.b16 %v3333, %v3332
        %3350 = vmatprep.subr.bf16.mxu0 0
        %3351 = vmatpush1.bf16.msra.mxu0 %v3334
        %3352 = vmatprep.subr.bf16.mxu0 0
        %3353 = vmatpush1.bf16.msra.mxu0 %v3335
        %3354 = vmatprep.subr.bf16.mxu0 0
        %3355 = vmatpush1.bf16.msra.mxu0 %v3336
        %3356 = vmatprep.subr.bf16.mxu0 0
        %3357 = vmatpush1.bf16.msra.mxu0 %v3337
        %3358 = vmatprep.subr.bf16.mxu0 0
        %3359 = vmatpush1.bf16.msra.mxu0 %v3338
        %3360 = vmatprep.subr.bf16.mxu0 0
        %3361 = vmatpush1.bf16.msra.mxu0 %v3339
        %3362 = vmatprep.subr.bf16.mxu0 0
        %3363 = vmatpush1.bf16.msra.mxu0 %v3340
        %3364 = vmatprep.subr.bf16.mxu0 0
        %3365 = vmatpush1.bf16.msra.mxu0 %v3341
        %3366 = vmatprep.subr.bf16.mxu0 0
        %3367 = vmatpush1.bf16.msra.mxu0 0
        %3368 = vmatprep.subr.bf16.mxu0 0
        %3369 = vmatpush1.bf16.msra.mxu0 0
        %3370 = vmatprep.subr.bf16.mxu0 0
        %3371 = vmatpush1.bf16.msra.mxu0 0
        %3372 = vmatprep.subr.bf16.mxu0 0
        %3373 = vmatpush1.bf16.msra.mxu0 0
        %3374 = vmatprep.subr.bf16.mxu0 0
        %3375 = vmatpush1.bf16.msra.mxu0 0
        %3376 = vmatprep.subr.bf16.mxu0 0
        %3377 = vmatpush1.bf16.msra.mxu0 0
        %3378 = vmatprep.subr.bf16.mxu0 0
        %3379 = vmatpush1.bf16.msra.mxu0 0
        %3380 = vmatprep.subr.bf16.mxu0 0
        %3381 = vmatpush1.bf16.msra.mxu0 0
        %3382 = vmatprep.mubr.bf16.mxu0 0
        %3383 = vmatmul.mubr.bf16.gmra.mrb[0].mxu0 %v475
        %v3384 = vpop.f32.mrb[0].mxu0
        %v3385 = vadd.f32 0.0, %v3384
        %v3386 = vpop.f32.mrb[0].mxu0
        %v3387 = vpop.f32.mrb[0].mxu0
        %v3388 = vpop.f32.mrb[0].mxu0
        %3389 = vdwg.mxu0
        %v3390 = vmul.f32 %v3385, %v476
        %3391 = vadd.xlane.f32.xlu0 %v3390
        %v3392 = vpop.xlane.xlu0 %3391
        %s3393 = sadd.s32 %s478, 24
        %s3394 = scalar_lea.vmem [#allocation17], %s3393
        %v3395 = vld [vmem:[%s3394] sm:$0x1]
        %v3396 = vlaneseq
        %v3397 = vshrl.u32 %v3396, 7
        %v3398 = vsub.s32 0, %v3397
        %v3399 = vrot.slane %v3395, %v3398
        %v3400 = vmul.f32 %v3392, %v3399
        %v3401 = vadd.f32 %v3284, %v3400
        %3402 = vst [vmem:[#allocation4] sm:$0xff] %v3401
        %p3403 = scmp.eq.s32.totalorder %s29, 3
        // Predicated region
        $region89: #{tpu_custom_call.1} parent=51 // pred_check
          %p3404 = pneg %p3403
        $region90: #{tpu_custom_call.1} parent=51 // pred_check_branch
          %3406 = sbr.rel (%p3404) target = $region92
        $region91: #{tpu_custom_call.1} parent=51 // pred_region
          %v3407 = vxor.u32 %v3401, 2147483648
          %v3408 = vmul.f32 %v3407, 1.442695
          %v3409 = vpow.pop %v3408
          %v3410 = vadd.f32 %v3409, 1.0
          %v3411 = vrcp.pop %v3410
          %v3412 = vmul.f32 1.0, %v3411
          %3413 = vst [vmem:[#allocation18] sm:$0xff] %v3412
        $region92: #{tpu_custom_call.1} parent=51 // pred_fallthru
          _
        // Predicated region
        $region93: #{tpu_custom_call.1} parent=51 // pred_check
          %p3414 = pneg %p237
        $region94: #{tpu_custom_call.1} parent=51 // pred_check_branch
          %3416 = sbr.rel (%p3414) target = $region96
        $region95: #{tpu_custom_call.1} parent=51 // pred_region
          %s3418 = ssub.s32 128, 128
          %3419 = vsyncadd [#allocation7], %s3418
          %s3420 = smul.addr %s28, 128
          %s3421 = scalar_lea.hbm %s8, %s3420
          %s3423 = sshll.u32 [#allocation18], 4
          %s3424 = int_to_ptr.vmem [resolvable:$true] %s3423
          %3426 = dma.vmem_to_hbm [thread:$0]  %s3424, 128, %s3421, [#allocation7]
        $region96: #{tpu_custom_call.1} parent=51 // pred_fallthru
          _
        // Predicated region
        $region97: #{tpu_custom_call.1} parent=51 // pred_check
          %p3427 = pneg %p237
        $region98: #{tpu_custom_call.1} parent=51 // pred_check_branch
          %3429 = sbr.rel (%p3427) target = $region100
        $region99: #{tpu_custom_call.1} parent=51 // pred_region
          %3430 = dma.done [#allocation7], 128
        $region100: #{tpu_custom_call.1} parent=51 // pred_fallthru
          _
      $region52: #{tpu_custom_call.1} parent=5 // pred_fallthru
        _
      %p3431 = scmp.le.s32.totalorder 2, %s19
      // Predicated region
      $region101: #{tpu_custom_call.1} parent=5 // pred_check
        %p3432 = pneg %p3431
      $region102: #{tpu_custom_call.1} parent=5 // pred_check_branch
        %3434 = sbr.rel (%p3432) target = $region104
      $region103: #{tpu_custom_call.1} parent=5 // pred_region
        %s3435 = ssub.s32 %s19, 2
      $region104: #{tpu_custom_call.1} parent=5 // pred_fallthru
        _
    $region6: #{tpu_custom_call.1} parent=1 // loop_footer
      %s23 = sadd.s32 1, %s19
    $region7: #{tpu_custom_call.1} parent=1 // loop_footer_branch
      %18 = sbr.rel target = $region3
    $region8: #{tpu_custom_call.1} parent=1 // loop_exit
      _
    %3436 = vsyncpa [#allocation6], 1
    %s3437 = scalar_lea.sflag [#allocation6], 1
    %3438 = vsyncpa %s3437, 1
    %3439 = vsyncpa [#allocation9], 1
    %3440 = vsyncpa [#allocation12], 1
    %3441 = vsyncpa [#allocation15], 1
    %3442 = vsyncpa [#allocation7], 1
    %s3443 = scalar_lea.sflag [#allocation7], 1
    %3444 = vsyncpa %s3443, 1

</llo_original>
